<compile_context>
chip_gen: v7x
topology: tpu7x:2x2x1
jax: 0.10.0
libtpu: 0.0.40
codegen_flags: <defaults>
</compile_context>

<pallas_src>
import functools

import jax
import jax.numpy as jnp
from jax.experimental import pallas as pl
from jax.experimental.pallas import tpu as pltpu


def _basic_block_kernel(x_ref, w1_ref, b1_ref, w2_ref, b2_ref, *rest,
                        H, W, use_se):
    if use_se:
        f1_ref, f2_ref, o_ref, p_ref = rest
    else:
        o_ref, p_ref = rest

    TB = x_ref.shape[0]
    C = x_ref.shape[3]
    Cout = w1_ref.shape[2]
    m = TB * H * W
    f32 = jnp.float32

    # Zero the (small) padded scratch so both convs see zero borders; the
    # interior is overwritten below.  Done every step so correctness holds
    # when the parallel batch axis is sharded across TensorCores.
    p_ref[...] = jnp.zeros_like(p_ref)
    # Stage the input into the interior of the padded scratch (f32).
    p_ref[:, 1:1 + H, 1:1 + W, :] = x_ref[...].astype(f32)

    def conv3x3(w_ref, b_ref):
        # 3x3 conv as 9 shifted-window MXU matmuls; the folded BN bias seeds
        # the f32 accumulator so BN costs nothing extra.
        acc = jnp.broadcast_to(b_ref[...], (m, Cout))
        for t in range(9):
            dh, dw = t // 3, t % 3
            win = p_ref[:, dh:dh + H, dw:dw + W, :].reshape(m, C)
            acc = acc + jnp.dot(win, w_ref[t],
                                preferred_element_type=f32)
        return acc

    # conv1 (+ folded bn1) -> relu, written back into the same padded scratch
    # (Cin == Cout on the no-downsample path) so conv2 reuses it.
    h1 = jnp.maximum(conv3x3(w1_ref, b1_ref), 0.0)
    p_ref[:, 1:1 + H, 1:1 + W, :] = h1.reshape(TB, H, W, Cout)

    # conv2 (+ folded bn2)
    y = conv3x3(w2_ref, b2_ref).reshape(TB, H * W, Cout)

    if use_se:
        # Squeeze: sum + constant 1/(H*W) keeps the divide off the VPU path.
        pooled = jnp.sum(y, axis=1) * (1.0 / (H * W))              # (TB, C)
        g = jnp.maximum(
            jnp.dot(pooled, f1_ref[...], preferred_element_type=f32), 0.0)
        g = jax.nn.sigmoid(
            jnp.dot(g, f2_ref[...], preferred_element_type=f32))
        y = y * g[:, None, :]

    identity = x_ref[...].reshape(TB, H * W, C).astype(f32)
    o_ref[...] = jnp.maximum(y + identity, 0.0).astype(o_ref.dtype)


def _pick_tb(batch, per_elem_bytes, vmem_budget=8 << 20):
    """Largest batch tile fitting the VMEM budget; prefer >= 2 grid steps so a
    v7x chip can shard the parallel batch axis across its two TensorCores."""
    divisors = [d for d in range(1, batch + 1) if batch % d == 0]
    fitting = [d for d in divisors if d * per_elem_bytes <= vmem_budget] or [1]
    tb = max(fitting)
    if batch >= 2 and batch // tb < 2:
        two_step = [d for d in fitting if batch // d >= 2]
        if two_step:
            tb = max(two_step)
    return tb


def basic_block_forward(x_nchw, params, *, use_se=True, eps=1e-5, tb=None):
    """Fused BasicBlock forward (stride=1, Cin == Cout, inference-mode BN)."""
    B, Cin, H, W = x_nchw.shape
    w1 = params["conv1_w"]
    w2 = params["conv2_w"]
    Cout = w1.shape[0]
    # TODO(synk): stride != 1 / downsample (1x1 conv + BN on the identity) and
    # the stochastic_depth branch are not implemented in this fused kernel.
    assert Cin == Cout, "identity path needs matching channels (no downsample)"

    f32 = jnp.float32

    def fold_bn(prefix):
        scale = params[f"{prefix}_gamma"].astype(f32) * jax.lax.rsqrt(
            params[f"{prefix}_var"].astype(f32) + eps)
        bias = (params[f"{prefix}_beta"].astype(f32)
                - params[f"{prefix}_mean"].astype(f32) * scale)
        return scale, bias

    s1, b1 = fold_bn("bn1")
    s2, b2 = fold_bn("bn2")

    # (Cout, Cin, 3, 3) -> (9, Cin, Cout) with the BN scale folded into the
    # output channels: conv+BN becomes a pure matmul + bias.
    def prep_w(w, scale):
        wt = jnp.transpose(w.astype(f32), (2, 3, 1, 0))
        return wt.reshape(9, w.shape[1], w.shape[0]) * scale.reshape(1, 1, -1)

    w1t = prep_w(w1, s1)
    w2t = prep_w(w2, s2)
    b1 = b1.reshape(1, Cout)
    b2 = b2.reshape(1, Cout)

    # NCHW -> NHWC (unpadded): channels land on lanes so loads/stores are
    # lane-dense when C is a multiple of 128.  Padding happens inside the
    # kernel via the reused f32 scratch.
    x = jnp.transpose(x_nchw, (0, 2, 3, 1))
    Hp, Wp = H + 2, W + 2

    itemsize = jnp.dtype(x_nchw.dtype).itemsize
    per_elem = (2 * 2 * H * W * Cout * itemsize    # in + out, double-buffered
                + Hp * Wp * Cout * 4)              # shared f32 padded scratch
    if tb is None:
        tb = _pick_tb(B, per_elem)
    assert B % tb == 0
    grid = (B // tb,)

    operands = [x, w1t, b1, w2t, b2]
    in_specs = [
        pl.BlockSpec((tb, H, W, Cin), lambda b: (b, 0, 0, 0)),
        pl.BlockSpec((9, Cin, Cout), lambda b: (0, 0, 0)),
        pl.BlockSpec((1, Cout), lambda b: (0, 0)),
        pl.BlockSpec((9, Cout, Cout), lambda b: (0, 0, 0)),
        pl.BlockSpec((1, Cout), lambda b: (0, 0)),
    ]
    if use_se:
        chid = params["fc1_w"].shape[0]
        operands += [jnp.transpose(params["fc1_w"]).astype(f32),   # (Cout, chid)
                     jnp.transpose(params["fc2_w"]).astype(f32)]   # (chid, Cout)
        in_specs += [pl.BlockSpec((Cout, chid), lambda b: (0, 0)),
                     pl.BlockSpec((chid, Cout), lambda b: (0, 0))]

    out = pl.pallas_call(
        functools.partial(_basic_block_kernel, H=H, W=W, use_se=use_se),
        out_shape=jax.ShapeDtypeStruct((B, H * W, Cout), x_nchw.dtype),
        grid_spec=pltpu.PrefetchScalarGridSpec(
            num_scalar_prefetch=0,
            grid=grid,
            in_specs=in_specs,
            out_specs=pl.BlockSpec((tb, H * W, Cout), lambda b: (b, 0, 0)),
            scratch_shapes=[pltpu.VMEM((tb, Hp, Wp, Cout), jnp.float32)],
        ),
        compiler_params=pltpu.CompilerParams(
            dimension_semantics=("parallel",)),
    )(*operands)

    return jnp.transpose(out.reshape(B, H, W, Cout), (0, 3, 1, 2))


def basic_block_reference(x, params, *, use_se=True, eps=1e-5):
    """Pure-JAX reference matching the PyTorch BasicBlock forward
    (stride=1, no downsample, inference-mode BatchNorm)."""
    f32 = jnp.float32
    hi = jax.lax.Precision.HIGHEST

    def conv(y, w):
        return jax.lax.conv_general_dilated(
            y.astype(f32), w.astype(f32), window_strides=(1, 1),
            padding=((1, 1), (1, 1)),
            dimension_numbers=("NCHW", "OIHW", "NCHW"), precision=hi)

    def bn(y, p):
        scale = params[f"{p}_gamma"] * jax.lax.rsqrt(params[f"{p}_var"] + eps)
        bias = params[f"{p}_beta"] - params[f"{p}_mean"] * scale
        return y * scale[None, :, None, None] + bias[None, :, None, None]

    out = jnp.maximum(bn(conv(x, params["conv1_w"]), "bn1"), 0.0)
    out = bn(conv(out, params["conv2_w"]), "bn2")
    if use_se:
        pooled = jnp.mean(out, axis=(2, 3))
        g = jnp.maximum(
            jnp.dot(pooled, params["fc1_w"].astype(f32).T, precision=hi), 0.0)
        g = jax.nn.sigmoid(
            jnp.dot(g, params["fc2_w"].astype(f32).T, precision=hi))
        out = out * g[:, :, None, None]
    out = jnp.maximum(out + x.astype(f32), 0.0)
    return out.astype(x.dtype)


if __name__ == "__main__":
    B, C, H, W = 2, 128, 8, 8        # small, but lane-dense (C % 128 == 0)
    reduction = 16
    chid = C // reduction            # 8 -> sublane-aligned SE hidden dim

    keys = jax.random.split(jax.random.PRNGKey(0), 13)
    x = jax.random.normal(keys[0], (B, C, H, W), dtype=jnp.float32)
    params = {
        "conv1_w": 0.05 * jax.random.normal(keys[1], (C, C, 3, 3), jnp.float32),
        "conv2_w": 0.05 * jax.random.normal(keys[2], (C, C, 3, 3), jnp.float32),
        "bn1_gamma": 1.0 + 0.1 * jax.random.normal(keys[3], (C,), jnp.float32),
        "bn1_beta": 0.1 * jax.random.normal(keys[4], (C,), jnp.float32),
        "bn1_mean": 0.1 * jax.random.normal(keys[5], (C,), jnp.float32),
        "bn1_var": 0.5 + jax.random.uniform(keys[6], (C,), jnp.float32),
        "bn2_gamma": 1.0 + 0.1 * jax.random.normal(keys[7], (C,), jnp.float32),
        "bn2_beta": 0.1 * jax.random.normal(keys[8], (C,), jnp.float32),
        "bn2_mean": 0.1 * jax.random.normal(keys[9], (C,), jnp.float32),
        "bn2_var": 0.5 + jax.random.uniform(keys[10], (C,), jnp.float32),
        "fc1_w": 0.1 * jax.random.normal(keys[11], (chid, C), jnp.float32),
        "fc2_w": 0.1 * jax.random.normal(keys[12], (C, chid), jnp.float32),
    }

    out = basic_block_forward(x, params, use_se=True)
    out = jax.block_until_ready(out)

    ref = basic_block_reference(x, params, use_se=True)
    assert out.shape == x.shape
    assert jnp.allclose(out, ref, rtol=2e-2, atol=2e-2), \
        float(jnp.max(jnp.abs(out - ref)))
    print("KERNEL_OK")
</pallas_src>

<mosaic_0001>
module attributes {stable_mosaic.version = 11 : i64} {
  func.func @_basic_block_kernel(%arg0: i32, %arg1: memref<1x8x8x128xf32, #tpu.memory_space<vmem>>, %arg2: memref<9x128x128xf32, #tpu.memory_space<vmem>>, %arg3: memref<1x128xf32, #tpu.memory_space<vmem>>, %arg4: memref<9x128x128xf32, #tpu.memory_space<vmem>>, %arg5: memref<1x128xf32, #tpu.memory_space<vmem>>, %arg6: memref<128x8xf32, #tpu.memory_space<vmem>>, %arg7: memref<8x128xf32, #tpu.memory_space<vmem>>, %arg8: memref<1x64x128xf32, #tpu.memory_space<vmem>>, %arg9: memref<1x10x10x128xf32, #tpu.memory_space<vmem>>) attributes {dimension_semantics = [#tpu.dimension_semantics<parallel>], iteration_bounds = array<i64: 2>, scalar_prefetch = 0 : i64, scratch_operands = 1 : i64, tpu.core_type = #tpu.core_type<tc>, window_params = [{transform_indices = @transform_0, window_bounds = array<i64: 1, 8, 8, 128>}, {pipeline_mode = #tpu.pipeline_mode<synchronous>, transform_indices = @transform_1, window_bounds = array<i64: 9, 128, 128>}, {pipeline_mode = #tpu.pipeline_mode<synchronous>, transform_indices = @transform_2, window_bounds = array<i64: 1, 128>}, {pipeline_mode = #tpu.pipeline_mode<synchronous>, transform_indices = @transform_3, window_bounds = array<i64: 9, 128, 128>}, {pipeline_mode = #tpu.pipeline_mode<synchronous>, transform_indices = @transform_4, window_bounds = array<i64: 1, 128>}, {pipeline_mode = #tpu.pipeline_mode<synchronous>, transform_indices = @transform_5, window_bounds = array<i64: 128, 8>}, {pipeline_mode = #tpu.pipeline_mode<synchronous>, transform_indices = @transform_6, window_bounds = array<i64: 8, 128>}, {transform_indices = @transform_7, window_bounds = array<i64: 1, 64, 128>}]} {
    %cst = arith.constant 0.000000e+00 : f32
    %0 = vector.broadcast %cst : f32 to vector<1x10x10x128xf32>
    %c0 = arith.constant 0 : index
    %c0_0 = arith.constant 0 : index
    %c0_1 = arith.constant 0 : index
    %c0_2 = arith.constant 0 : index
    %1 = vector.load %arg9[%c0, %c0_0, %c0_1, %c0_2] : memref<1x10x10x128xf32, #tpu.memory_space<vmem>>, vector<1x10x10x128xf32>
    tpu.vector_store %arg9[%c0, %c0_0, %c0_1, %c0_2], %0 {strides = array<i32>} : memref<1x10x10x128xf32, #tpu.memory_space<vmem>>, vector<1x10x10x128xf32>,
    %c0_3 = arith.constant 0 : index
    %c0_4 = arith.constant 0 : index
    %c0_5 = arith.constant 0 : index
    %c0_6 = arith.constant 0 : index
    %2 = vector.load %arg1[%c0_3, %c0_4, %c0_5, %c0_6] : memref<1x8x8x128xf32, #tpu.memory_space<vmem>>, vector<1x8x8x128xf32>
    %c0_7 = arith.constant 0 : index
    %c1 = arith.constant 1 : index
    %c1_8 = arith.constant 1 : index
    %c0_9 = arith.constant 0 : index
    %3 = vector.load %arg9[%c0_7, %c1, %c1_8, %c0_9] : memref<1x10x10x128xf32, #tpu.memory_space<vmem>>, vector<1x8x8x128xf32>
    tpu.vector_store %arg9[%c0_7, %c1, %c1_8, %c0_9], %2 {strides = array<i32>} : memref<1x10x10x128xf32, #tpu.memory_space<vmem>>, vector<1x8x8x128xf32>,
    %c0_10 = arith.constant 0 : index
    %c0_11 = arith.constant 0 : index
    %4 = vector.load %arg3[%c0_10, %c0_11] : memref<1x128xf32, #tpu.memory_space<vmem>>, vector<1x128xf32>
    %5 = vector.shape_cast %4 : vector<1x128xf32> to vector<1x128xf32>
    %6 = vector.broadcast %5 : vector<1x128xf32> to vector<64x128xf32>
    %c0_12 = arith.constant 0 : index
    %c0_13 = arith.constant 0 : index
    %c0_14 = arith.constant 0 : index
    %c0_15 = arith.constant 0 : index
    %7 = vector.load %arg9[%c0_12, %c0_13, %c0_14, %c0_15] : memref<1x10x10x128xf32, #tpu.memory_space<vmem>>, vector<1x8x8x128xf32>
    %8 = vector.shape_cast %7 : vector<1x8x8x128xf32> to vector<64x128xf32>
    %c0_16 = arith.constant 0 : index
    %c0_17 = arith.constant 0 : index
    %c0_18 = arith.constant 0 : index
    %9 = vector.load %arg2[%c0_16, %c0_17, %c0_18] : memref<9x128x128xf32, #tpu.memory_space<vmem>>, vector<1x128x128xf32>
    %10 = vector.shape_cast %9 : vector<1x128x128xf32> to vector<128x128xf32>
    %cst_19 = arith.constant dense<0.000000e+00> : vector<64x128xf32>
    %11 = tpu.matmul %8, %10, %cst_19 {dimension_numbers = #tpu.dot_dimension_numbers<[1], [0], [0], [1], [0, 0, 1, 1], [], []>} : vector<64x128xf32>, vector<128x128xf32>, vector<64x128xf32> -> vector<64x128xf32>
    %12 = arith.addf %6, %11 : vector<64x128xf32>
    %c0_20 = arith.constant 0 : index
    %c0_21 = arith.constant 0 : index
    %c1_22 = arith.constant 1 : index
    %c0_23 = arith.constant 0 : index
    %13 = vector.load %arg9[%c0_20, %c0_21, %c1_22, %c0_23] : memref<1x10x10x128xf32, #tpu.memory_space<vmem>>, vector<1x8x8x128xf32>
    %14 = vector.shape_cast %13 : vector<1x8x8x128xf32> to vector<64x128xf32>
    %c1_24 = arith.constant 1 : index
    %c0_25 = arith.constant 0 : index
    %c0_26 = arith.constant 0 : index
    %15 = vector.load %arg2[%c1_24, %c0_25, %c0_26] : memref<9x128x128xf32, #tpu.memory_space<vmem>>, vector<1x128x128xf32>
    %16 = vector.shape_cast %15 : vector<1x128x128xf32> to vector<128x128xf32>
    %cst_27 = arith.constant dense<0.000000e+00> : vector<64x128xf32>
    %17 = tpu.matmul %14, %16, %cst_27 {dimension_numbers = #tpu.dot_dimension_numbers<[1], [0], [0], [1], [0, 0, 1, 1], [], []>} : vector<64x128xf32>, vector<128x128xf32>, vector<64x128xf32> -> vector<64x128xf32>
    %18 = arith.addf %12, %17 : vector<64x128xf32>
    %c0_28 = arith.constant 0 : index
    %c0_29 = arith.constant 0 : index
    %c2 = arith.constant 2 : index
    %c0_30 = arith.constant 0 : index
    %19 = vector.load %arg9[%c0_28, %c0_29, %c2, %c0_30] : memref<1x10x10x128xf32, #tpu.memory_space<vmem>>, vector<1x8x8x128xf32>
    %20 = vector.shape_cast %19 : vector<1x8x8x128xf32> to vector<64x128xf32>
    %c2_31 = arith.constant 2 : index
    %c0_32 = arith.constant 0 : index
    %c0_33 = arith.constant 0 : index
    %21 = vector.load %arg2[%c2_31, %c0_32, %c0_33] : memref<9x128x128xf32, #tpu.memory_space<vmem>>, vector<1x128x128xf32>
    %22 = vector.shape_cast %21 : vector<1x128x128xf32> to vector<128x128xf32>
    %cst_34 = arith.constant dense<0.000000e+00> : vector<64x128xf32>
    %23 = tpu.matmul %20, %22, %cst_34 {dimension_numbers = #tpu.dot_dimension_numbers<[1], [0], [0], [1], [0, 0, 1, 1], [], []>} : vector<64x128xf32>, vector<128x128xf32>, vector<64x128xf32> -> vector<64x128xf32>
    %24 = arith.addf %18, %23 : vector<64x128xf32>
    %c0_35 = arith.constant 0 : index
    %c1_36 = arith.constant 1 : index
    %c0_37 = arith.constant 0 : index
    %c0_38 = arith.constant 0 : index
    %25 = vector.load %arg9[%c0_35, %c1_36, %c0_37, %c0_38] : memref<1x10x10x128xf32, #tpu.memory_space<vmem>>, vector<1x8x8x128xf32>
    %26 = vector.shape_cast %25 : vector<1x8x8x128xf32> to vector<64x128xf32>
    %c3 = arith.constant 3 : index
    %c0_39 = arith.constant 0 : index
    %c0_40 = arith.constant 0 : index
    %27 = vector.load %arg2[%c3, %c0_39, %c0_40] : memref<9x128x128xf32, #tpu.memory_space<vmem>>, vector<1x128x128xf32>
    %28 = vector.shape_cast %27 : vector<1x128x128xf32> to vector<128x128xf32>
    %cst_41 = arith.constant dense<0.000000e+00> : vector<64x128xf32>
    %29 = tpu.matmul %26, %28, %cst_41 {dimension_numbers = #tpu.dot_dimension_numbers<[1], [0], [0], [1], [0, 0, 1, 1], [], []>} : vector<64x128xf32>, vector<128x128xf32>, vector<64x128xf32> -> vector<64x128xf32>
    %30 = arith.addf %24, %29 : vector<64x128xf32>
    %c0_42 = arith.constant 0 : index
    %c1_43 = arith.constant 1 : index
    %c1_44 = arith.constant 1 : index
    %c0_45 = arith.constant 0 : index
    %31 = vector.load %arg9[%c0_42, %c1_43, %c1_44, %c0_45] : memref<1x10x10x128xf32, #tpu.memory_space<vmem>>, vector<1x8x8x128xf32>
    %32 = vector.shape_cast %31 : vector<1x8x8x128xf32> to vector<64x128xf32>
    %c4 = arith.constant 4 : index
    %c0_46 = arith.constant 0 : index
    %c0_47 = arith.constant 0 : index
    %33 = vector.load %arg2[%c4, %c0_46, %c0_47] : memref<9x128x128xf32, #tpu.memory_space<vmem>>, vector<1x128x128xf32>
    %34 = vector.shape_cast %33 : vector<1x128x128xf32> to vector<128x128xf32>
    %cst_48 = arith.constant dense<0.000000e+00> : vector<64x128xf32>
    %35 = tpu.matmul %32, %34, %cst_48 {dimension_numbers = #tpu.dot_dimension_numbers<[1], [0], [0], [1], [0, 0, 1, 1], [], []>} : vector<64x128xf32>, vector<128x128xf32>, vector<64x128xf32> -> vector<64x128xf32>
    %36 = arith.addf %30, %35 : vector<64x128xf32>
    %c0_49 = arith.constant 0 : index
    %c1_50 = arith.constant 1 : index
    %c2_51 = arith.constant 2 : index
    %c0_52 = arith.constant 0 : index
    %37 = vector.load %arg9[%c0_49, %c1_50, %c2_51, %c0_52] : memref<1x10x10x128xf32, #tpu.memory_space<vmem>>, vector<1x8x8x128xf32>
    %38 = vector.shape_cast %37 : vector<1x8x8x128xf32> to vector<64x128xf32>
    %c5 = arith.constant 5 : index
    %c0_53 = arith.constant 0 : index
    %c0_54 = arith.constant 0 : index
    %39 = vector.load %arg2[%c5, %c0_53, %c0_54] : memref<9x128x128xf32, #tpu.memory_space<vmem>>, vector<1x128x128xf32>
    %40 = vector.shape_cast %39 : vector<1x128x128xf32> to vector<128x128xf32>
    %cst_55 = arith.constant dense<0.000000e+00> : vector<64x128xf32>
    %41 = tpu.matmul %38, %40, %cst_55 {dimension_numbers = #tpu.dot_dimension_numbers<[1], [0], [0], [1], [0, 0, 1, 1], [], []>} : vector<64x128xf32>, vector<128x128xf32>, vector<64x128xf32> -> vector<64x128xf32>
    %42 = arith.addf %36, %41 : vector<64x128xf32>
    %c0_56 = arith.constant 0 : index
    %c2_57 = arith.constant 2 : index
    %c0_58 = arith.constant 0 : index
    %c0_59 = arith.constant 0 : index
    %43 = vector.load %arg9[%c0_56, %c2_57, %c0_58, %c0_59] : memref<1x10x10x128xf32, #tpu.memory_space<vmem>>, vector<1x8x8x128xf32>
    %44 = vector.shape_cast %43 : vector<1x8x8x128xf32> to vector<64x128xf32>
    %c6 = arith.constant 6 : index
    %c0_60 = arith.constant 0 : index
    %c0_61 = arith.constant 0 : index
    %45 = vector.load %arg2[%c6, %c0_60, %c0_61] : memref<9x128x128xf32, #tpu.memory_space<vmem>>, vector<1x128x128xf32>
    %46 = vector.shape_cast %45 : vector<1x128x128xf32> to vector<128x128xf32>
    %cst_62 = arith.constant dense<0.000000e+00> : vector<64x128xf32>
    %47 = tpu.matmul %44, %46, %cst_62 {dimension_numbers = #tpu.dot_dimension_numbers<[1], [0], [0], [1], [0, 0, 1, 1], [], []>} : vector<64x128xf32>, vector<128x128xf32>, vector<64x128xf32> -> vector<64x128xf32>
    %48 = arith.addf %42, %47 : vector<64x128xf32>
    %c0_63 = arith.constant 0 : index
    %c2_64 = arith.constant 2 : index
    %c1_65 = arith.constant 1 : index
    %c0_66 = arith.constant 0 : index
    %49 = vector.load %arg9[%c0_63, %c2_64, %c1_65, %c0_66] : memref<1x10x10x128xf32, #tpu.memory_space<vmem>>, vector<1x8x8x128xf32>
    %50 = vector.shape_cast %49 : vector<1x8x8x128xf32> to vector<64x128xf32>
    %c7 = arith.constant 7 : index
    %c0_67 = arith.constant 0 : index
    %c0_68 = arith.constant 0 : index
    %51 = vector.load %arg2[%c7, %c0_67, %c0_68] : memref<9x128x128xf32, #tpu.memory_space<vmem>>, vector<1x128x128xf32>
    %52 = vector.shape_cast %51 : vector<1x128x128xf32> to vector<128x128xf32>
    %cst_69 = arith.constant dense<0.000000e+00> : vector<64x128xf32>
    %53 = tpu.matmul %50, %52, %cst_69 {dimension_numbers = #tpu.dot_dimension_numbers<[1], [0], [0], [1], [0, 0, 1, 1], [], []>} : vector<64x128xf32>, vector<128x128xf32>, vector<64x128xf32> -> vector<64x128xf32>
    %54 = arith.addf %48, %53 : vector<64x128xf32>
    %c0_70 = arith.constant 0 : index
    %c2_71 = arith.constant 2 : index
    %c2_72 = arith.constant 2 : index
    %c0_73 = arith.constant 0 : index
    %55 = vector.load %arg9[%c0_70, %c2_71, %c2_72, %c0_73] : memref<1x10x10x128xf32, #tpu.memory_space<vmem>>, vector<1x8x8x128xf32>
    %56 = vector.shape_cast %55 : vector<1x8x8x128xf32> to vector<64x128xf32>
    %c8 = arith.constant 8 : index
    %c0_74 = arith.constant 0 : index
    %c0_75 = arith.constant 0 : index
    %57 = vector.load %arg2[%c8, %c0_74, %c0_75] : memref<9x128x128xf32, #tpu.memory_space<vmem>>, vector<1x128x128xf32>
    %58 = vector.shape_cast %57 : vector<1x128x128xf32> to vector<128x128xf32>
    %cst_76 = arith.constant dense<0.000000e+00> : vector<64x128xf32>
    %59 = tpu.matmul %56, %58, %cst_76 {dimension_numbers = #tpu.dot_dimension_numbers<[1], [0], [0], [1], [0, 0, 1, 1], [], []>} : vector<64x128xf32>, vector<128x128xf32>, vector<64x128xf32> -> vector<64x128xf32>
    %60 = arith.addf %54, %59 : vector<64x128xf32>
    %cst_77 = arith.constant 0.000000e+00 : f32
    %61 = vector.broadcast %cst_77 : f32 to vector<64x128xf32>
    %62 = arith.maximumf %60, %61 : vector<64x128xf32>
    %63 = vector.shape_cast %62 : vector<64x128xf32> to vector<1x8x8x128xf32>
    %c0_78 = arith.constant 0 : index
    %c1_79 = arith.constant 1 : index
    %c1_80 = arith.constant 1 : index
    %c0_81 = arith.constant 0 : index
    %64 = vector.load %arg9[%c0_78, %c1_79, %c1_80, %c0_81] : memref<1x10x10x128xf32, #tpu.memory_space<vmem>>, vector<1x8x8x128xf32>
    tpu.vector_store %arg9[%c0_78, %c1_79, %c1_80, %c0_81], %63 {strides = array<i32>} : memref<1x10x10x128xf32, #tpu.memory_space<vmem>>, vector<1x8x8x128xf32>,
    %c0_82 = arith.constant 0 : index
    %c0_83 = arith.constant 0 : index
    %65 = vector.load %arg5[%c0_82, %c0_83] : memref<1x128xf32, #tpu.memory_space<vmem>>, vector<1x128xf32>
    %66 = vector.shape_cast %65 : vector<1x128xf32> to vector<1x128xf32>
    %67 = vector.broadcast %66 : vector<1x128xf32> to vector<64x128xf32>
    %c0_84 = arith.constant 0 : index
    %c0_85 = arith.constant 0 : index
    %c0_86 = arith.constant 0 : index
    %c0_87 = arith.constant 0 : index
    %68 = vector.load %arg9[%c0_84, %c0_85, %c0_86, %c0_87] : memref<1x10x10x128xf32, #tpu.memory_space<vmem>>, vector<1x8x8x128xf32>
    %69 = vector.shape_cast %68 : vector<1x8x8x128xf32> to vector<64x128xf32>
    %c0_88 = arith.constant 0 : index
    %c0_89 = arith.constant 0 : index
    %c0_90 = arith.constant 0 : index
    %70 = vector.load %arg4[%c0_88, %c0_89, %c0_90] : memref<9x128x128xf32, #tpu.memory_space<vmem>>, vector<1x128x128xf32>
    %71 = vector.shape_cast %70 : vector<1x128x128xf32> to vector<128x128xf32>
    %cst_91 = arith.constant dense<0.000000e+00> : vector<64x128xf32>
    %72 = tpu.matmul %69, %71, %cst_91 {dimension_numbers = #tpu.dot_dimension_numbers<[1], [0], [0], [1], [0, 0, 1, 1], [], []>} : vector<64x128xf32>, vector<128x128xf32>, vector<64x128xf32> -> vector<64x128xf32>
    %73 = arith.addf %67, %72 : vector<64x128xf32>
    %c0_92 = arith.constant 0 : index
    %c0_93 = arith.constant 0 : index
    %c1_94 = arith.constant 1 : index
    %c0_95 = arith.constant 0 : index
    %74 = vector.load %arg9[%c0_92, %c0_93, %c1_94, %c0_95] : memref<1x10x10x128xf32, #tpu.memory_space<vmem>>, vector<1x8x8x128xf32>
    %75 = vector.shape_cast %74 : vector<1x8x8x128xf32> to vector<64x128xf32>
    %c1_96 = arith.constant 1 : index
    %c0_97 = arith.constant 0 : index
    %c0_98 = arith.constant 0 : index
    %76 = vector.load %arg4[%c1_96, %c0_97, %c0_98] : memref<9x128x128xf32, #tpu.memory_space<vmem>>, vector<1x128x128xf32>
    %77 = vector.shape_cast %76 : vector<1x128x128xf32> to vector<128x128xf32>
    %cst_99 = arith.constant dense<0.000000e+00> : vector<64x128xf32>
    %78 = tpu.matmul %75, %77, %cst_99 {dimension_numbers = #tpu.dot_dimension_numbers<[1], [0], [0], [1], [0, 0, 1, 1], [], []>} : vector<64x128xf32>, vector<128x128xf32>, vector<64x128xf32> -> vector<64x128xf32>
    %79 = arith.addf %73, %78 : vector<64x128xf32>
    %c0_100 = arith.constant 0 : index
    %c0_101 = arith.constant 0 : index
    %c2_102 = arith.constant 2 : index
    %c0_103 = arith.constant 0 : index
    %80 = vector.load %arg9[%c0_100, %c0_101, %c2_102, %c0_103] : memref<1x10x10x128xf32, #tpu.memory_space<vmem>>, vector<1x8x8x128xf32>
    %81 = vector.shape_cast %80 : vector<1x8x8x128xf32> to vector<64x128xf32>
    %c2_104 = arith.constant 2 : index
    %c0_105 = arith.constant 0 : index
    %c0_106 = arith.constant 0 : index
    %82 = vector.load %arg4[%c2_104, %c0_105, %c0_106] : memref<9x128x128xf32, #tpu.memory_space<vmem>>, vector<1x128x128xf32>
    %83 = vector.shape_cast %82 : vector<1x128x128xf32> to vector<128x128xf32>
    %cst_107 = arith.constant dense<0.000000e+00> : vector<64x128xf32>
    %84 = tpu.matmul %81, %83, %cst_107 {dimension_numbers = #tpu.dot_dimension_numbers<[1], [0], [0], [1], [0, 0, 1, 1], [], []>} : vector<64x128xf32>, vector<128x128xf32>, vector<64x128xf32> -> vector<64x128xf32>
    %85 = arith.addf %79, %84 : vector<64x128xf32>
    %c0_108 = arith.constant 0 : index
    %c1_109 = arith.constant 1 : index
    %c0_110 = arith.constant 0 : index
    %c0_111 = arith.constant 0 : index
    %86 = vector.load %arg9[%c0_108, %c1_109, %c0_110, %c0_111] : memref<1x10x10x128xf32, #tpu.memory_space<vmem>>, vector<1x8x8x128xf32>
    %87 = vector.shape_cast %86 : vector<1x8x8x128xf32> to vector<64x128xf32>
    %c3_112 = arith.constant 3 : index
    %c0_113 = arith.constant 0 : index
    %c0_114 = arith.constant 0 : index
    %88 = vector.load %arg4[%c3_112, %c0_113, %c0_114] : memref<9x128x128xf32, #tpu.memory_space<vmem>>, vector<1x128x128xf32>
    %89 = vector.shape_cast %88 : vector<1x128x128xf32> to vector<128x128xf32>
    %cst_115 = arith.constant dense<0.000000e+00> : vector<64x128xf32>
    %90 = tpu.matmul %87, %89, %cst_115 {dimension_numbers = #tpu.dot_dimension_numbers<[1], [0], [0], [1], [0, 0, 1, 1], [], []>} : vector<64x128xf32>, vector<128x128xf32>, vector<64x128xf32> -> vector<64x128xf32>
    %91 = arith.addf %85, %90 : vector<64x128xf32>
    %c0_116 = arith.constant 0 : index
    %c1_117 = arith.constant 1 : index
    %c1_118 = arith.constant 1 : index
    %c0_119 = arith.constant 0 : index
    %92 = vector.load %arg9[%c0_116, %c1_117, %c1_118, %c0_119] : memref<1x10x10x128xf32, #tpu.memory_space<vmem>>, vector<1x8x8x128xf32>
    %93 = vector.shape_cast %92 : vector<1x8x8x128xf32> to vector<64x128xf32>
    %c4_120 = arith.constant 4 : index
    %c0_121 = arith.constant 0 : index
    %c0_122 = arith.constant 0 : index
    %94 = vector.load %arg4[%c4_120, %c0_121, %c0_122] : memref<9x128x128xf32, #tpu.memory_space<vmem>>, vector<1x128x128xf32>
    %95 = vector.shape_cast %94 : vector<1x128x128xf32> to vector<128x128xf32>
    %cst_123 = arith.constant dense<0.000000e+00> : vector<64x128xf32>
    %96 = tpu.matmul %93, %95, %cst_123 {dimension_numbers = #tpu.dot_dimension_numbers<[1], [0], [0], [1], [0, 0, 1, 1], [], []>} : vector<64x128xf32>, vector<128x128xf32>, vector<64x128xf32> -> vector<64x128xf32>
    %97 = arith.addf %91, %96 : vector<64x128xf32>
    %c0_124 = arith.constant 0 : index
    %c1_125 = arith.constant 1 : index
    %c2_126 = arith.constant 2 : index
    %c0_127 = arith.constant 0 : index
    %98 = vector.load %arg9[%c0_124, %c1_125, %c2_126, %c0_127] : memref<1x10x10x128xf32, #tpu.memory_space<vmem>>, vector<1x8x8x128xf32>
    %99 = vector.shape_cast %98 : vector<1x8x8x128xf32> to vector<64x128xf32>
    %c5_128 = arith.constant 5 : index
    %c0_129 = arith.constant 0 : index
    %c0_130 = arith.constant 0 : index
    %100 = vector.load %arg4[%c5_128, %c0_129, %c0_130] : memref<9x128x128xf32, #tpu.memory_space<vmem>>, vector<1x128x128xf32>
    %101 = vector.shape_cast %100 : vector<1x128x128xf32> to vector<128x128xf32>
    %cst_131 = arith.constant dense<0.000000e+00> : vector<64x128xf32>
    %102 = tpu.matmul %99, %101, %cst_131 {dimension_numbers = #tpu.dot_dimension_numbers<[1], [0], [0], [1], [0, 0, 1, 1], [], []>} : vector<64x128xf32>, vector<128x128xf32>, vector<64x128xf32> -> vector<64x128xf32>
    %103 = arith.addf %97, %102 : vector<64x128xf32>
    %c0_132 = arith.constant 0 : index
    %c2_133 = arith.constant 2 : index
    %c0_134 = arith.constant 0 : index
    %c0_135 = arith.constant 0 : index
    %104 = vector.load %arg9[%c0_132, %c2_133, %c0_134, %c0_135] : memref<1x10x10x128xf32, #tpu.memory_space<vmem>>, vector<1x8x8x128xf32>
    %105 = vector.shape_cast %104 : vector<1x8x8x128xf32> to vector<64x128xf32>
    %c6_136 = arith.constant 6 : index
    %c0_137 = arith.constant 0 : index
    %c0_138 = arith.constant 0 : index
    %106 = vector.load %arg4[%c6_136, %c0_137, %c0_138] : memref<9x128x128xf32, #tpu.memory_space<vmem>>, vector<1x128x128xf32>
    %107 = vector.shape_cast %106 : vector<1x128x128xf32> to vector<128x128xf32>
    %cst_139 = arith.constant dense<0.000000e+00> : vector<64x128xf32>
    %108 = tpu.matmul %105, %107, %cst_139 {dimension_numbers = #tpu.dot_dimension_numbers<[1], [0], [0], [1], [0, 0, 1, 1], [], []>} : vector<64x128xf32>, vector<128x128xf32>, vector<64x128xf32> -> vector<64x128xf32>
    %109 = arith.addf %103, %108 : vector<64x128xf32>
    %c0_140 = arith.constant 0 : index
    %c2_141 = arith.constant 2 : index
    %c1_142 = arith.constant 1 : index
    %c0_143 = arith.constant 0 : index
    %110 = vector.load %arg9[%c0_140, %c2_141, %c1_142, %c0_143] : memref<1x10x10x128xf32, #tpu.memory_space<vmem>>, vector<1x8x8x128xf32>
    %111 = vector.shape_cast %110 : vector<1x8x8x128xf32> to vector<64x128xf32>
    %c7_144 = arith.constant 7 : index
    %c0_145 = arith.constant 0 : index
    %c0_146 = arith.constant 0 : index
    %112 = vector.load %arg4[%c7_144, %c0_145, %c0_146] : memref<9x128x128xf32, #tpu.memory_space<vmem>>, vector<1x128x128xf32>
    %113 = vector.shape_cast %112 : vector<1x128x128xf32> to vector<128x128xf32>
    %cst_147 = arith.constant dense<0.000000e+00> : vector<64x128xf32>
    %114 = tpu.matmul %111, %113, %cst_147 {dimension_numbers = #tpu.dot_dimension_numbers<[1], [0], [0], [1], [0, 0, 1, 1], [], []>} : vector<64x128xf32>, vector<128x128xf32>, vector<64x128xf32> -> vector<64x128xf32>
    %115 = arith.addf %109, %114 : vector<64x128xf32>
    %c0_148 = arith.constant 0 : index
    %c2_149 = arith.constant 2 : index
    %c2_150 = arith.constant 2 : index
    %c0_151 = arith.constant 0 : index
    %116 = vector.load %arg9[%c0_148, %c2_149, %c2_150, %c0_151] : memref<1x10x10x128xf32, #tpu.memory_space<vmem>>, vector<1x8x8x128xf32>
    %117 = vector.shape_cast %116 : vector<1x8x8x128xf32> to vector<64x128xf32>
    %c8_152 = arith.constant 8 : index
    %c0_153 = arith.constant 0 : index
    %c0_154 = arith.constant 0 : index
    %118 = vector.load %arg4[%c8_152, %c0_153, %c0_154] : memref<9x128x128xf32, #tpu.memory_space<vmem>>, vector<1x128x128xf32>
    %119 = vector.shape_cast %118 : vector<1x128x128xf32> to vector<128x128xf32>
    %cst_155 = arith.constant dense<0.000000e+00> : vector<64x128xf32>
    %120 = tpu.matmul %117, %119, %cst_155 {dimension_numbers = #tpu.dot_dimension_numbers<[1], [0], [0], [1], [0, 0, 1, 1], [], []>} : vector<64x128xf32>, vector<128x128xf32>, vector<64x128xf32> -> vector<64x128xf32>
    %121 = arith.addf %115, %120 : vector<64x128xf32>
    %122 = vector.shape_cast %121 : vector<64x128xf32> to vector<1x64x128xf32>
    %cst_156 = arith.constant dense<0.000000e+00> : vector<1x128xf32>
    %123 = vector.multi_reduction <add>, %122, %cst_156 [1] : vector<1x64x128xf32> to vector<1x128xf32>
    %cst_157 = arith.constant 1.562500e-02 : f32
    %124 = vector.broadcast %cst_157 : f32 to vector<1x128xf32>
    %125 = arith.mulf %123, %124 : vector<1x128xf32>
    %c0_158 = arith.constant 0 : index
    %c0_159 = arith.constant 0 : index
    %126 = vector.load %arg6[%c0_158, %c0_159] : memref<128x8xf32, #tpu.memory_space<vmem>>, vector<128x8xf32>
    %cst_160 = arith.constant dense<0.000000e+00> : vector<1x8xf32>
    %127 = tpu.matmul %125, %126, %cst_160 {dimension_numbers = #tpu.dot_dimension_numbers<[1], [0], [0], [1], [0, 0, 1, 1], [], []>} : vector<1x128xf32>, vector<128x8xf32>, vector<1x8xf32> -> vector<1x8xf32>
    %cst_161 = arith.constant 0.000000e+00 : f32
    %128 = vector.broadcast %cst_161 : f32 to vector<1x8xf32>
    %129 = arith.maximumf %127, %128 : vector<1x8xf32>
    %c0_162 = arith.constant 0 : index
    %c0_163 = arith.constant 0 : index
    %130 = vector.load %arg7[%c0_162, %c0_163] : memref<8x128xf32, #tpu.memory_space<vmem>>, vector<8x128xf32>
    %cst_164 = arith.constant dense<0.000000e+00> : vector<1x128xf32>
    %131 = tpu.matmul %129, %130, %cst_164 {dimension_numbers = #tpu.dot_dimension_numbers<[1], [0], [0], [1], [0, 0, 1, 1], [], []>} : vector<1x8xf32>, vector<8x128xf32>, vector<1x128xf32> -> vector<1x128xf32>
    %132 = arith.negf %131 : vector<1x128xf32>
    %133 = math.exp %132 : vector<1x128xf32>
    %cst_165 = arith.constant 1.000000e+00 : f32
    %134 = vector.broadcast %cst_165 : f32 to vector<1x128xf32>
    %135 = arith.addf %134, %133 : vector<1x128xf32>
    %136 = arith.divf %134, %135 : vector<1x128xf32>
    %137 = vector.shape_cast %136 : vector<1x128xf32> to vector<1x1x128xf32>
    %138 = vector.broadcast %137 : vector<1x1x128xf32> to vector<1x64x128xf32>
    %139 = arith.mulf %122, %138 : vector<1x64x128xf32>
    %c0_166 = arith.constant 0 : index
    %c0_167 = arith.constant 0 : index
    %c0_168 = arith.constant 0 : index
    %c0_169 = arith.constant 0 : index
    %140 = vector.load %arg1[%c0_166, %c0_167, %c0_168, %c0_169] : memref<1x8x8x128xf32, #tpu.memory_space<vmem>>, vector<1x8x8x128xf32>
    %141 = vector.shape_cast %140 : vector<1x8x8x128xf32> to vector<1x64x128xf32>
    %142 = arith.addf %139, %141 : vector<1x64x128xf32>
    %cst_170 = arith.constant 0.000000e+00 : f32
    %143 = vector.broadcast %cst_170 : f32 to vector<1x64x128xf32>
    %144 = arith.maximumf %142, %143 : vector<1x64x128xf32>
    %c0_171 = arith.constant 0 : index
    %c0_172 = arith.constant 0 : index
    %c0_173 = arith.constant 0 : index
    %145 = vector.load %arg8[%c0_171, %c0_172, %c0_173] : memref<1x64x128xf32, #tpu.memory_space<vmem>>, vector<1x64x128xf32>
    tpu.vector_store %arg8[%c0_171, %c0_172, %c0_173], %144 {strides = array<i32>} : memref<1x64x128xf32, #tpu.memory_space<vmem>>, vector<1x64x128xf32>,
    return
  }
  func.func @transform_0(%arg0: i32) -> (i32, i32, i32, i32) {
    %c0_i32 = arith.constant 0 : i32
    %c0_i32_0 = arith.constant 0 : i32
    %c0_i32_1 = arith.constant 0 : i32
    %c0_i32_2 = arith.constant 0 : i32
    return %arg0, %c0_i32, %c0_i32_0, %c0_i32_1 : i32, i32, i32, i32
  }
  func.func @transform_1(%arg0: i32) -> (i32, i32, i32) {
    %c0_i32 = arith.constant 0 : i32
    %c0_i32_0 = arith.constant 0 : i32
    %c0_i32_1 = arith.constant 0 : i32
    %c0_i32_2 = arith.constant 0 : i32
    return %c0_i32, %c0_i32_0, %c0_i32_1 : i32, i32, i32
  }
  func.func @transform_2(%arg0: i32) -> (i32, i32) {
    %c0_i32 = arith.constant 0 : i32
    %c0_i32_0 = arith.constant 0 : i32
    %c0_i32_1 = arith.constant 0 : i32
    return %c0_i32, %c0_i32_0 : i32, i32
  }
  func.func @transform_3(%arg0: i32) -> (i32, i32, i32) {
    %c0_i32 = arith.constant 0 : i32
    %c0_i32_0 = arith.constant 0 : i32
    %c0_i32_1 = arith.constant 0 : i32
    %c0_i32_2 = arith.constant 0 : i32
    return %c0_i32, %c0_i32_0, %c0_i32_1 : i32, i32, i32
  }
  func.func @transform_4(%arg0: i32) -> (i32, i32) {
    %c0_i32 = arith.constant 0 : i32
    %c0_i32_0 = arith.constant 0 : i32
    %c0_i32_1 = arith.constant 0 : i32
    return %c0_i32, %c0_i32_0 : i32, i32
  }
  func.func @transform_5(%arg0: i32) -> (i32, i32) {
    %c0_i32 = arith.constant 0 : i32
    %c0_i32_0 = arith.constant 0 : i32
    %c0_i32_1 = arith.constant 0 : i32
    return %c0_i32, %c0_i32_0 : i32, i32
  }
  func.func @transform_6(%arg0: i32) -> (i32, i32) {
    %c0_i32 = arith.constant 0 : i32
    %c0_i32_0 = arith.constant 0 : i32
    %c0_i32_1 = arith.constant 0 : i32
    return %c0_i32, %c0_i32_0 : i32, i32
  }
  func.func @transform_7(%arg0: i32) -> (i32, i32, i32) {
    %c0_i32 = arith.constant 0 : i32
    %c0_i32_0 = arith.constant 0 : i32
    %c0_i32_1 = arith.constant 0 : i32
    return %arg0, %c0_i32, %c0_i32_0 : i32, i32, i32
  }
}

</mosaic_0001>

<llo_original>
// kernel: tpu_custom_call.1
$region0: #{tpu_custom_call.1}
  #allocation0 [shape = 'u32[]', space=smem, size = 0x4, offset = 0x4, fixed_abs, tag = 'smem constant byte address 0x4 - core index']
  #allocation1 [shape = 'u32[144,128]{1,0:T(1,128)}', space=vmem, size = 0x12000, scoped, tag = 'internal scratch']
  #allocation2 [shape = 'f32[1,10,10,128]{3,2,1,0:T(8,128)}', space=vmem, size = 0x14000, scoped, tag = 'scratch operand']
  %s0 = inlined_call_operand.vmem [shape: f32[2,8,8,128], index: 0, kind: input, shape index: {}]
  %s1 = inlined_call_operand.hbm [shape: f32[9,128,128], index: 1, kind: input, shape index: {}]
  %s2 = inlined_call_operand.vmem [shape: f32[1,128], index: 2, kind: input, shape index: {}]
  %s3 = inlined_call_operand.hbm [shape: f32[9,128,128], index: 3, kind: input, shape index: {}]
  %s4 = inlined_call_operand.vmem [shape: f32[1,128], index: 4, kind: input, shape index: {}]
  %s5 = inlined_call_operand.vmem [shape: f32[128,8], index: 5, kind: input, shape index: {}]
  %s6 = inlined_call_operand.vmem [shape: f32[8,128], index: 6, kind: input, shape index: {}]
  %s7 = inlined_call_operand.hbm [shape: f32[2,64,128], index: 7, kind: output, shape index: {}]
  %s8 = sld [smem:[#allocation0]]
  $region69: #{tpu_custom_call.1} parent=0
    _
  %s10 = ssub.s32 1, %s8
  %s11 = scalar_select 0, %s10, %s8
  $region1: #{tpu_custom_call.1} parent=0
    #allocation3 [shape = 'u8[589824]{0}', space=vmem, size = 0x90000, scoped, tag = 'input window, operand 1, single buffered']
    #allocation4 [shape = 's32[2]{0}', space=sflag, size = 0x8, scoped, tag = 'scoped memory for tpu_custom_call.1']
    #allocation5 [shape = 's32[2]{0}', space=sflag, size = 0x8, scoped, tag = 'scoped memory for tpu_custom_call.1']
    #allocation6 [shape = 'u8[589824]{0}', space=vmem, size = 0x90000, scoped, tag = 'input window, operand 3, single buffered']
    #allocation7 [shape = 's32[1]{0}', space=sflag, size = 0x4, scoped, tag = 'scoped memory for tpu_custom_call.1']
    #allocation8 [shape = 'u8[65536]{0}', space=vmem, size = 0x10000, scoped, tag = 'output window, operand 0']
    %12 = vsyncpa [#allocation4], 0
    %13 = vsyncpa [#allocation7], 0
    %14 = vsyncpa [#allocation5], 0
    %s15 = scalar_lea.sflag [#allocation5], 1
    %16 = vsyncpa %s15, 0
    loop: start=0, step=1, limit=4
    $region2: #{tpu_custom_call.1} parent=1 // loop_pre_header
      _
    $region3: #{tpu_custom_call.1} parent=1 // loop_header
      %s18 = sphi 0, %s22
      %p19 = scmp.ge.s32.totalorder %s18, 4
      %s28 = sphi 0, %s30
      %s31 = sphi 0, %s28
      %s32 = sphi 0, %s31
      %s48 = sphi 0, %s32
      %s52 = sphi 0, %s52
      %s54 = sphi 0, %s52
      %s55 = sphi 0, %s54
      %s69 = sphi 0, %s55
      %s73 = sphi 0, %s73
      %s75 = sphi 0, %s73
      %s76 = sphi 0, %s75
      %s90 = sphi 0, %s76
      %s94 = sphi 0, %s94
      %s96 = sphi 0, %s94
      %s97 = sphi 0, %s96
      %s111 = sphi 0, %s97
      %s115 = sphi 0, %s115
      %s117 = sphi 0, %s115
      %s118 = sphi 0, %s117
      %s132 = sphi 0, %s118
      %s136 = sphi 0, %s136
      %s138 = sphi 0, %s136
      %s139 = sphi 0, %s138
      %s153 = sphi 0, %s139
      %s157 = sphi 0, %s157
      %s159 = sphi 0, %s157
      %s160 = sphi 0, %s159
      %s174 = sphi 0, %s160
      %s180 = sphi 0, %s182
      %s183 = sphi 0, %s180
      %s184 = sphi 0, %s183
      %s200 = sphi 0, %s184
    $region4: #{tpu_custom_call.1} parent=1 // loop_header_branch
      %21 = sbr.rel (%p19) target = $region8
    $region5: #{tpu_custom_call.1} parent=1 // loop_body
      %s23 = ssub.s32 %s18, 1
      %s24 = ssub.s32 %s18, 2
      %s25 = sadd.s32 %s18, 1
      %s26 = ssub.s32 %s18, %s25
      %p27 = scmp.eq.s32.totalorder %s26, 0
      %s29 = sadd.s32 %s28, 1
      %s30 = scalar_select %p27, %s28, %s29
      %p33 = pneg %p27
      %p34 = scmp.eq.s32.totalorder %s18, 1
      %p35 = por %p33, %p34
      %p36 = scmp.ne.s32.totalorder %s28, %s31
      %p37 = scmp.eq.s32.totalorder %s18, 0
      %p38 = por %p36, %p37
      %p39 = scmp.ne.s32.totalorder %s28, %s31
      %p40 = scmp.eq.s32.totalorder %s23, 1
      %p41 = por %p39, %p40
      %p42 = scmp.ne.s32.totalorder %s31, %s32
      %p43 = scmp.eq.s32.totalorder %s23, 0
      %p44 = por %p42, %p43
      %p45 = scmp.ne.s32.totalorder %s31, %s32
      %p46 = scmp.eq.s32.totalorder %s24, 1
      %p47 = por %p45, %p46
      %p49 = scmp.ne.s32.totalorder %s32, %s48
      %p50 = scmp.eq.s32.totalorder %s24, 0
      %p51 = por %p49, %p50
      %s53 = sadd.s32 %s52, 1
      %p56 = scmp.eq.s32.totalorder %s18, 1
      %p57 = scmp.ne.s32.totalorder %s52, %s54
      %p58 = scmp.eq.s32.totalorder %s18, 0
      %p59 = por %p57, %p58
      %p60 = scmp.ne.s32.totalorder %s52, %s54
      %p61 = scmp.eq.s32.totalorder %s23, 1
      %p62 = por %p60, %p61
      %p63 = scmp.ne.s32.totalorder %s54, %s55
      %p64 = scmp.eq.s32.totalorder %s23, 0
      %p65 = por %p63, %p64
      %p66 = scmp.ne.s32.totalorder %s54, %s55
      %p67 = scmp.eq.s32.totalorder %s24, 1
      %p68 = por %p66, %p67
      %p70 = scmp.ne.s32.totalorder %s55, %s69
      %p71 = scmp.eq.s32.totalorder %s24, 0
      %p72 = por %p70, %p71
      %s74 = sadd.s32 %s73, 1
      %p77 = scmp.eq.s32.totalorder %s18, 1
      %p78 = scmp.ne.s32.totalorder %s73, %s75
      %p79 = scmp.eq.s32.totalorder %s18, 0
      %p80 = por %p78, %p79
      %p81 = scmp.ne.s32.totalorder %s73, %s75
      %p82 = scmp.eq.s32.totalorder %s23, 1
      %p83 = por %p81, %p82
      %p84 = scmp.ne.s32.totalorder %s75, %s76
      %p85 = scmp.eq.s32.totalorder %s23, 0
      %p86 = por %p84, %p85
      %p87 = scmp.ne.s32.totalorder %s75, %s76
      %p88 = scmp.eq.s32.totalorder %s24, 1
      %p89 = por %p87, %p88
      %p91 = scmp.ne.s32.totalorder %s76, %s90
      %p92 = scmp.eq.s32.totalorder %s24, 0
      %p93 = por %p91, %p92
      %s95 = sadd.s32 %s94, 1
      %p98 = scmp.eq.s32.totalorder %s18, 1
      %p99 = scmp.ne.s32.totalorder %s94, %s96
      %p100 = scmp.eq.s32.totalorder %s18, 0
      %p101 = por %p99, %p100
      %p102 = scmp.ne.s32.totalorder %s94, %s96
      %p103 = scmp.eq.s32.totalorder %s23, 1
      %p104 = por %p102, %p103
      %p105 = scmp.ne.s32.totalorder %s96, %s97
      %p106 = scmp.eq.s32.totalorder %s23, 0
      %p107 = por %p105, %p106
      %p108 = scmp.ne.s32.totalorder %s96, %s97
      %p109 = scmp.eq.s32.totalorder %s24, 1
      %p110 = por %p108, %p109
      %p112 = scmp.ne.s32.totalorder %s97, %s111
      %p113 = scmp.eq.s32.totalorder %s24, 0
      %p114 = por %p112, %p113
      %s116 = sadd.s32 %s115, 1
      %p119 = scmp.eq.s32.totalorder %s18, 1
      %p120 = scmp.ne.s32.totalorder %s115, %s117
      %p121 = scmp.eq.s32.totalorder %s18, 0
      %p122 = por %p120, %p121
      %p123 = scmp.ne.s32.totalorder %s115, %s117
      %p124 = scmp.eq.s32.totalorder %s23, 1
      %p125 = por %p123, %p124
      %p126 = scmp.ne.s32.totalorder %s117, %s118
      %p127 = scmp.eq.s32.totalorder %s23, 0
      %p128 = por %p126, %p127
      %p129 = scmp.ne.s32.totalorder %s117, %s118
      %p130 = scmp.eq.s32.totalorder %s24, 1
      %p131 = por %p129, %p130
      %p133 = scmp.ne.s32.totalorder %s118, %s132
      %p134 = scmp.eq.s32.totalorder %s24, 0
      %p135 = por %p133, %p134
      %s137 = sadd.s32 %s136, 1
      %p140 = scmp.eq.s32.totalorder %s18, 1
      %p141 = scmp.ne.s32.totalorder %s136, %s138
      %p142 = scmp.eq.s32.totalorder %s18, 0
      %p143 = por %p141, %p142
      %p144 = scmp.ne.s32.totalorder %s136, %s138
      %p145 = scmp.eq.s32.totalorder %s23, 1
      %p146 = por %p144, %p145
      %p147 = scmp.ne.s32.totalorder %s138, %s139
      %p148 = scmp.eq.s32.totalorder %s23, 0
      %p149 = por %p147, %p148
      %p150 = scmp.ne.s32.totalorder %s138, %s139
      %p151 = scmp.eq.s32.totalorder %s24, 1
      %p152 = por %p150, %p151
      %p154 = scmp.ne.s32.totalorder %s139, %s153
      %p155 = scmp.eq.s32.totalorder %s24, 0
      %p156 = por %p154, %p155
      %s158 = sadd.s32 %s157, 1
      %p161 = scmp.eq.s32.totalorder %s18, 1
      %p162 = scmp.ne.s32.totalorder %s157, %s159
      %p163 = scmp.eq.s32.totalorder %s18, 0
      %p164 = por %p162, %p163
      %p165 = scmp.ne.s32.totalorder %s157, %s159
      %p166 = scmp.eq.s32.totalorder %s23, 1
      %p167 = por %p165, %p166
      %p168 = scmp.ne.s32.totalorder %s159, %s160
      %p169 = scmp.eq.s32.totalorder %s23, 0
      %p170 = por %p168, %p169
      %p171 = scmp.ne.s32.totalorder %s159, %s160
      %p172 = scmp.eq.s32.totalorder %s24, 1
      %p173 = por %p171, %p172
      %p175 = scmp.ne.s32.totalorder %s160, %s174
      %p176 = scmp.eq.s32.totalorder %s24, 0
      %p177 = por %p175, %p176
      %s178 = ssub.s32 %s18, %s25
      %p179 = scmp.eq.s32.totalorder %s178, 0
      %s181 = sadd.s32 %s180, 1
      %s182 = scalar_select %p179, %s180, %s181
      %p185 = pneg %p179
      %p186 = scmp.eq.s32.totalorder %s18, 1
      %p187 = por %p185, %p186
      %p188 = scmp.ne.s32.totalorder %s180, %s183
      %p189 = scmp.eq.s32.totalorder %s18, 0
      %p190 = por %p188, %p189
      %p191 = scmp.ne.s32.totalorder %s180, %s183
      %p192 = scmp.eq.s32.totalorder %s23, 1
      %p193 = por %p191, %p192
      %p194 = scmp.ne.s32.totalorder %s183, %s184
      %p195 = scmp.eq.s32.totalorder %s23, 0
      %p196 = por %p194, %p195
      %p197 = scmp.ne.s32.totalorder %s183, %s184
      %p198 = scmp.eq.s32.totalorder %s24, 1
      %p199 = por %p197, %p198
      %p201 = scmp.ne.s32.totalorder %s184, %s200
      %p202 = scmp.eq.s32.totalorder %s24, 0
      %p203 = por %p201, %p202
      %p204 = scmp.le.s32.totalorder 1, %s18
      %p205 = scmp.lt.s32.totalorder %s18, 3
      %p206 = pnand %p204, %p205
      %p207 = pneg %p206
      // Predicated region
      $region9: #{tpu_custom_call.1} parent=5 // pred_check
        _
      $region10: #{tpu_custom_call.1} parent=5 // pred_check_branch
        %209 = sbr.rel (%p206) target = $region12
      $region11: #{tpu_custom_call.1} parent=5 // pred_region
        %s210 = ssub.s32 %s18, 1
        // Predicated region
        $region13: #{tpu_custom_call.1} parent=11 // pred_check
          %p211 = pneg %p65
        $region14: #{tpu_custom_call.1} parent=11 // pred_check_branch
          %213 = sbr.rel (%p211) target = $region16
        $region15: #{tpu_custom_call.1} parent=11 // pred_region
          %s215 = ssub.s32 18432, 18432
          %216 = vsyncadd [#allocation4], %s215
          %s217 = sshll.u32 [#allocation3], 4
          %s218 = int_to_ptr.vmem [resolvable:$true] %s217
          %223 = dma.hbm_to_vmem [thread:$0]  %s1, 18432, %s218, [#allocation4], 128, 128, 8
        $region16: #{tpu_custom_call.1} parent=11 // pred_fallthru
          _
        // Predicated region
        $region17: #{tpu_custom_call.1} parent=11 // pred_check
          %p224 = pneg %p86
        $region18: #{tpu_custom_call.1} parent=11 // pred_check_branch
          %226 = sbr.rel (%p224) target = $region20
        $region19: #{tpu_custom_call.1} parent=11 // pred_region
          _
        $region20: #{tpu_custom_call.1} parent=11 // pred_fallthru
          _
        // Predicated region
        $region21: #{tpu_custom_call.1} parent=11 // pred_check
          %p227 = pneg %p107
        $region22: #{tpu_custom_call.1} parent=11 // pred_check_branch
          %229 = sbr.rel (%p227) target = $region24
        $region23: #{tpu_custom_call.1} parent=11 // pred_region
          %s231 = ssub.s32 18432, 18432
          %232 = vsyncadd [#allocation7], %s231
          %s233 = sshll.u32 [#allocation6], 4
          %s234 = int_to_ptr.vmem [resolvable:$true] %s233
          %239 = dma.hbm_to_vmem [thread:$0]  %s3, 18432, %s234, [#allocation7], 128, 128, 8
        $region24: #{tpu_custom_call.1} parent=11 // pred_fallthru
          _
        // Predicated region
        $region25: #{tpu_custom_call.1} parent=11 // pred_check
          %p240 = pneg %p128
        $region26: #{tpu_custom_call.1} parent=11 // pred_check_branch
          %242 = sbr.rel (%p240) target = $region28
        $region27: #{tpu_custom_call.1} parent=11 // pred_region
          _
        $region28: #{tpu_custom_call.1} parent=11 // pred_fallthru
          _
        // Predicated region
        $region29: #{tpu_custom_call.1} parent=11 // pred_check
          %p243 = pneg %p149
        $region30: #{tpu_custom_call.1} parent=11 // pred_check_branch
          %245 = sbr.rel (%p243) target = $region32
        $region31: #{tpu_custom_call.1} parent=11 // pred_region
          _
        $region32: #{tpu_custom_call.1} parent=11 // pred_fallthru
          _
        // Predicated region
        $region33: #{tpu_custom_call.1} parent=11 // pred_check
          %p246 = pneg %p170
        $region34: #{tpu_custom_call.1} parent=11 // pred_check_branch
          %248 = sbr.rel (%p246) target = $region36
        $region35: #{tpu_custom_call.1} parent=11 // pred_region
          _
        $region36: #{tpu_custom_call.1} parent=11 // pred_fallthru
          _
      $region12: #{tpu_custom_call.1} parent=5 // pred_fallthru
        _
      %p249 = scmp.lt.s32.totalorder %s18, 2
      // Predicated region
      $region37: #{tpu_custom_call.1} parent=5 // pred_check
        %p250 = pneg %p249
      $region38: #{tpu_custom_call.1} parent=5 // pred_check_branch
        %252 = sbr.rel (%p250) target = $region40
      $region39: #{tpu_custom_call.1} parent=5 // pred_region
        // Predicated region
        $region41: #{tpu_custom_call.1} parent=39 // pred_check
          %p253 = pneg %p38
        $region42: #{tpu_custom_call.1} parent=39 // pred_check_branch
          %255 = sbr.rel (%p253) target = $region44
        $region43: #{tpu_custom_call.1} parent=39 // pred_region
          %p256 = scmp.lt.s32.totalorder %s18, 1
          %s257 = scalar_select %p256, %s18, 1
          %s258 = smul.addr %s257, 8
          %s259 = smul.addr %s258, 8
          %s260 = scalar_lea.vmem %s0, %s259
        $region44: #{tpu_custom_call.1} parent=39 // pred_fallthru
          _
      $region40: #{tpu_custom_call.1} parent=5 // pred_fallthru
        _
      %p261 = scmp.le.s32.totalorder 1, %s18
      %p262 = scmp.lt.s32.totalorder %s18, 3
      %p263 = pnand %p261, %p262
      %p264 = pneg %p263
      // Predicated region
      $region45: #{tpu_custom_call.1} parent=5 // pred_check
        _
      $region46: #{tpu_custom_call.1} parent=5 // pred_check_branch
        %266 = sbr.rel (%p263) target = $region48
      $region47: #{tpu_custom_call.1} parent=5 // pred_region
        %s267 = ssub.s32 %s18, 1
        // Predicated region
        $region49: #{tpu_custom_call.1} parent=47 // pred_check
          %p268 = pneg %p65
        $region50: #{tpu_custom_call.1} parent=47 // pred_check_branch
          %270 = sbr.rel (%p268) target = $region52
        $region51: #{tpu_custom_call.1} parent=47 // pred_region
          %271 = dma.done [#allocation4], 18432
        $region52: #{tpu_custom_call.1} parent=47 // pred_fallthru
          _
        // Predicated region
        $region53: #{tpu_custom_call.1} parent=47 // pred_check
          %p272 = pneg %p107
        $region54: #{tpu_custom_call.1} parent=47 // pred_check_branch
          %274 = sbr.rel (%p272) target = $region56
        $region55: #{tpu_custom_call.1} parent=47 // pred_region
          %275 = dma.done [#allocation7], 18432
        $region56: #{tpu_custom_call.1} parent=47 // pred_fallthru
          _
        %p276 = scmp.lt.s32.totalorder %s23, 1
        %s277 = scalar_select %p276, %s23, 1
        %s278 = smul.addr %s277, 8
        %s279 = smul.addr %s278, 8
        %s280 = scalar_lea.vmem %s0, %s279
        %p281 = pneg %p44
        %p282 = pneg %p41
        %p283 = pneg %p65
        %p284 = pneg %p62
        %p285 = pneg %p86
        %p286 = pneg %p83
        %p287 = pneg %p107
        %p288 = pneg %p104
        %p289 = pneg %p128
        %p290 = pneg %p125
        %p291 = pneg %p149
        %p292 = pneg %p146
        %p293 = pneg %p170
        %p294 = pneg %p167
        %p295 = pneg %p196
        %p296 = pneg %p193
        %s297 = sand.u32 %s183, 1
        %s298 = scalar_lea.sflag [#allocation5], %s297
        %s299 = sand.u32 %s183, 1
        %s300 = smul.addr %s299, 64
        %s301 = scalar_lea.vmem [#allocation8], %s300
        %p302 = scmp.lt.s32.totalorder %s23, 1
        %s303 = scalar_select %p302, %s23, 1
        %s304 = smul.addr %s303, 8
        %s305 = smul.addr %s304, 8
        %s306 = scalar_lea.vmem %s0, %s305
        %307 = vst [vmem:[#allocation2] sm:$0xff] 0.0
        %308 = vst [vmem:[#allocation2 + $0x8] sm:$0x3] 0.0
        %309 = vst [vmem:[#allocation2 + $0x10] sm:$0xff] 0.0
        %310 = vst [vmem:[#allocation2 + $0x18] sm:$0x3] 0.0
        %311 = vst [vmem:[#allocation2 + $0x20] sm:$0xff] 0.0
        %312 = vst [vmem:[#allocation2 + $0x28] sm:$0x3] 0.0
        %313 = vst [vmem:[#allocation2 + $0x30] sm:$0xff] 0.0
        %314 = vst [vmem:[#allocation2 + $0x38] sm:$0x3] 0.0
        %315 = vst [vmem:[#allocation2 + $0x40] sm:$0xff] 0.0
        %316 = vst [vmem:[#allocation2 + $0x48] sm:$0x3] 0.0
        %317 = vst [vmem:[#allocation2 + $0x50] sm:$0xff] 0.0
        %318 = vst [vmem:[#allocation2 + $0x58] sm:$0x3] 0.0
        %319 = vst [vmem:[#allocation2 + $0x60] sm:$0xff] 0.0
        %320 = vst [vmem:[#allocation2 + $0x68] sm:$0x3] 0.0
        %321 = vst [vmem:[#allocation2 + $0x70] sm:$0xff] 0.0
        %322 = vst [vmem:[#allocation2 + $0x78] sm:$0x3] 0.0
        %323 = vst [vmem:[#allocation2 + $0x80] sm:$0xff] 0.0
        %324 = vst [vmem:[#allocation2 + $0x88] sm:$0x3] 0.0
        %325 = vst [vmem:[#allocation2 + $0x90] sm:$0xff] 0.0
        %326 = vst [vmem:[#allocation2 + $0x98] sm:$0x3] 0.0
        %v327 = vld [vmem:[%s306] sm:$0xff]
        %v328 = vld [vmem:[%s306 + $0x8] sm:$0xff]
        %v329 = vld [vmem:[%s306 + $0x10] sm:$0xff]
        %v330 = vld [vmem:[%s306 + $0x18] sm:$0xff]
        %v331 = vld [vmem:[%s306 + $0x20] sm:$0xff]
        %v332 = vld [vmem:[%s306 + $0x28] sm:$0xff]
        %v333 = vld [vmem:[%s306 + $0x30] sm:$0xff]
        %v334 = vld [vmem:[%s306 + $0x38] sm:$0xff]
        %s335 = scalar_lea.vmem [#allocation2], 16
        %336 = vst [vmem:[%s335 + $0x1] sm:$0xff] %v327
        %337 = vst [vmem:[%s335 + $0x11] sm:$0xff] %v328
        %338 = vst [vmem:[%s335 + $0x21] sm:$0xff] %v329
        %339 = vst [vmem:[%s335 + $0x31] sm:$0xff] %v330
        %340 = vst [vmem:[%s335 + $0x41] sm:$0xff] %v331
        %341 = vst [vmem:[%s335 + $0x51] sm:$0xff] %v332
        %342 = vst [vmem:[%s335 + $0x61] sm:$0xff] %v333
        %343 = vst [vmem:[%s335 + $0x71] sm:$0xff] %v334
        %v344 = vld [vmem:[%s2] sm:$0x1]
        %v346 = vlaneseq
        %v347 = vshrl.u32 %v346, 7
        %v348 = vsub.s32 0, %v347
        %v349 = vrot.slane %v344, %v348
        %v351 = vld [vmem:[#allocation2] sm:$0xff]
        %v352 = vld [vmem:[#allocation2 + $0x10] sm:$0xff]
        %v353 = vld [vmem:[#allocation2 + $0x20] sm:$0xff]
        %v354 = vld [vmem:[#allocation2 + $0x30] sm:$0xff]
        %v355 = vld [vmem:[#allocation2 + $0x40] sm:$0xff]
        %v356 = vld [vmem:[#allocation2 + $0x50] sm:$0xff]
        %v357 = vld [vmem:[#allocation2 + $0x60] sm:$0xff]
        %v358 = vld [vmem:[#allocation2 + $0x70] sm:$0xff]
        %v359 = vld [vmem:[#allocation3] sm:$0xff]
        %v360 = vld [vmem:[#allocation3 + $0x8] sm:$0xff]
        %v361 = vld [vmem:[#allocation3 + $0x10] sm:$0xff]
        %v362 = vld [vmem:[#allocation3 + $0x18] sm:$0xff]
        %v363 = vld [vmem:[#allocation3 + $0x20] sm:$0xff]
        %v364 = vld [vmem:[#allocation3 + $0x28] sm:$0xff]
        %v365 = vld [vmem:[#allocation3 + $0x30] sm:$0xff]
        %v366 = vld [vmem:[#allocation3 + $0x38] sm:$0xff]
        %v367 = vld [vmem:[#allocation3 + $0x40] sm:$0xff]
        %v368 = vld [vmem:[#allocation3 + $0x48] sm:$0xff]
        %v369 = vld [vmem:[#allocation3 + $0x50] sm:$0xff]
        %v370 = vld [vmem:[#allocation3 + $0x58] sm:$0xff]
        %v371 = vld [vmem:[#allocation3 + $0x60] sm:$0xff]
        %v372 = vld [vmem:[#allocation3 + $0x68] sm:$0xff]
        %v373 = vld [vmem:[#allocation3 + $0x70] sm:$0xff]
        %v374 = vld [vmem:[#allocation3 + $0x78] sm:$0xff]
        %375 = vmatprep.subr.mxu0 0.0
        %376 = vmatpush1.msra.mxu0 %v359
        %377 = vmatprep.subr.mxu0 0.0
        %378 = vmatpush1.msra.mxu0 %v360
        %379 = vmatprep.subr.mxu0 0.0
        %380 = vmatpush1.msra.mxu0 %v361
        %381 = vmatprep.subr.mxu0 0.0
        %382 = vmatpush1.msra.mxu0 %v362
        %383 = vmatprep.subr.mxu0 0.0
        %384 = vmatpush1.msra.mxu0 %v363
        %385 = vmatprep.subr.mxu0 0.0
        %386 = vmatpush1.msra.mxu0 %v364
        %387 = vmatprep.subr.mxu0 0.0
        %388 = vmatpush1.msra.mxu0 %v365
        %389 = vmatprep.subr.mxu0 0.0
        %390 = vmatpush1.msra.mxu0 %v366
        %391 = vmatprep.subr.mxu0 0.0
        %392 = vmatpush1.msra.mxu0 %v367
        %393 = vmatprep.subr.mxu0 0.0
        %394 = vmatpush1.msra.mxu0 %v368
        %395 = vmatprep.subr.mxu0 0.0
        %396 = vmatpush1.msra.mxu0 %v369
        %397 = vmatprep.subr.mxu0 0.0
        %398 = vmatpush1.msra.mxu0 %v370
        %399 = vmatprep.subr.mxu0 0.0
        %400 = vmatpush1.msra.mxu0 %v371
        %401 = vmatprep.subr.mxu0 0.0
        %402 = vmatpush1.msra.mxu0 %v372
        %403 = vmatprep.subr.mxu0 0.0
        %404 = vmatpush1.msra.mxu0 %v373
        %405 = vmatprep.subr.mxu0 0.0
        %406 = vmatpush1.msra.mxu0 %v374
        %407 = vmatprep.subr.mxu0 0.0
        %408 = vmatpush1.msra.mxu0 0.0
        %409 = vmatprep.subr.mxu0 0.0
        %410 = vmatpush1.msra.mxu0 0.0
        %411 = vmatprep.subr.mxu0 0.0
        %412 = vmatpush1.msra.mxu0 0.0
        %413 = vmatprep.subr.mxu0 0.0
        %414 = vmatpush1.msra.mxu0 0.0
        %415 = vmatprep.subr.mxu0 0.0
        %416 = vmatpush1.msra.mxu0 0.0
        %417 = vmatprep.subr.mxu0 0.0
        %418 = vmatpush1.msra.mxu0 0.0
        %419 = vmatprep.subr.mxu0 0.0
        %420 = vmatpush1.msra.mxu0 0.0
        %421 = vmatprep.subr.mxu0 0.0
        %422 = vmatpush1.msra.mxu0 0.0
        %423 = vmatprep.subr.mxu0 0.0
        %424 = vmatpush1.msra.mxu0 0.0
        %425 = vmatprep.subr.mxu0 0.0
        %426 = vmatpush1.msra.mxu0 0.0
        %427 = vmatprep.subr.mxu0 0.0
        %428 = vmatpush1.msra.mxu0 0.0
        %429 = vmatprep.subr.mxu0 0.0
        %430 = vmatpush1.msra.mxu0 0.0
        %431 = vmatprep.subr.mxu0 0.0
        %432 = vmatpush1.msra.mxu0 0.0
        %433 = vmatprep.subr.mxu0 0.0
        %434 = vmatpush1.msra.mxu0 0.0
        %435 = vmatprep.subr.mxu0 0.0
        %436 = vmatpush1.msra.mxu0 0.0
        %437 = vmatprep.subr.mxu0 0.0
        %438 = vmatpush1.msra.mxu0 0.0
        %439 = vmatprep.mubr.f32.mxu0 0.0
        %440 = vmatmul.mubr.f32.gmra.mrb[0].mxu0 %v351
        %v441 = vpop.f32.mrb[0].mxu0
        %v442 = vadd.f32 0.0, %v441
        %v443 = vpop.f32.mrb[0].mxu0
        %444 = vmatprep.mubr.f32.mxu0 0.0
        %445 = vmatmul.mubr.f32.gmra.mrb[0].mxu0 %v352
        %v446 = vpop.f32.mrb[0].mxu0
        %v447 = vadd.f32 0.0, %v446
        %v448 = vpop.f32.mrb[0].mxu0
        %449 = vmatprep.mubr.f32.mxu0 0.0
        %450 = vmatmul.mubr.f32.gmra.mrb[0].mxu0 %v353
        %v451 = vpop.f32.mrb[0].mxu0
        %v452 = vadd.f32 0.0, %v451
        %v453 = vpop.f32.mrb[0].mxu0
        %454 = vmatprep.mubr.f32.mxu0 0.0
        %455 = vmatmul.mubr.f32.gmra.mrb[0].mxu0 %v354
        %v456 = vpop.f32.mrb[0].mxu0
        %v457 = vadd.f32 0.0, %v456
        %v458 = vpop.f32.mrb[0].mxu0
        %459 = vmatprep.mubr.f32.mxu0 0.0
        %460 = vmatmul.mubr.f32.gmra.mrb[0].mxu0 %v355
        %v461 = vpop.f32.mrb[0].mxu0
        %v462 = vadd.f32 0.0, %v461
        %v463 = vpop.f32.mrb[0].mxu0
        %464 = vmatprep.mubr.f32.mxu0 0.0
        %465 = vmatmul.mubr.f32.gmra.mrb[0].mxu0 %v356
        %v466 = vpop.f32.mrb[0].mxu0
        %v467 = vadd.f32 0.0, %v466
        %v468 = vpop.f32.mrb[0].mxu0
        %469 = vmatprep.mubr.f32.mxu0 0.0
        %470 = vmatmul.mubr.f32.gmra.mrb[0].mxu0 %v357
        %v471 = vpop.f32.mrb[0].mxu0
        %v472 = vadd.f32 0.0, %v471
        %v473 = vpop.f32.mrb[0].mxu0
        %474 = vmatprep.mubr.f32.mxu0 0.0
        %475 = vmatmul.mubr.f32.gmra.mrb[0].mxu0 %v358
        %v476 = vpop.f32.mrb[0].mxu0
        %v477 = vadd.f32 0.0, %v476
        %v478 = vpop.f32.mrb[0].mxu0
        %479 = vdwg.mxu0
        %v480 = vadd.f32 %v349, %v442
        %v481 = vadd.f32 %v349, %v447
        %v482 = vadd.f32 %v349, %v452
        %v483 = vadd.f32 %v349, %v457
        %v484 = vadd.f32 %v349, %v462
        %v485 = vadd.f32 %v349, %v467
        %v486 = vadd.f32 %v349, %v472
        %v487 = vadd.f32 %v349, %v477
        %v488 = vld [vmem:[#allocation2 + $0x1] sm:$0xff]
        %v489 = vld [vmem:[#allocation2 + $0x11] sm:$0xff]
        %v490 = vld [vmem:[#allocation2 + $0x21] sm:$0xff]
        %v491 = vld [vmem:[#allocation2 + $0x31] sm:$0xff]
        %v492 = vld [vmem:[#allocation2 + $0x41] sm:$0xff]
        %v493 = vld [vmem:[#allocation2 + $0x51] sm:$0xff]
        %v494 = vld [vmem:[#allocation2 + $0x61] sm:$0xff]
        %v495 = vld [vmem:[#allocation2 + $0x71] sm:$0xff]
        %s496 = scalar_lea.vmem [#allocation3], 128
        %v497 = vld [vmem:[%s496] sm:$0xff]
        %v498 = vld [vmem:[%s496 + $0x8] sm:$0xff]
        %v499 = vld [vmem:[%s496 + $0x10] sm:$0xff]
        %v500 = vld [vmem:[%s496 + $0x18] sm:$0xff]
        %v501 = vld [vmem:[%s496 + $0x20] sm:$0xff]
        %v502 = vld [vmem:[%s496 + $0x28] sm:$0xff]
        %v503 = vld [vmem:[%s496 + $0x30] sm:$0xff]
        %v504 = vld [vmem:[%s496 + $0x38] sm:$0xff]
        %v505 = vld [vmem:[%s496 + $0x40] sm:$0xff]
        %v506 = vld [vmem:[%s496 + $0x48] sm:$0xff]
        %v507 = vld [vmem:[%s496 + $0x50] sm:$0xff]
        %v508 = vld [vmem:[%s496 + $0x58] sm:$0xff]
        %v509 = vld [vmem:[%s496 + $0x60] sm:$0xff]
        %v510 = vld [vmem:[%s496 + $0x68] sm:$0xff]
        %v511 = vld [vmem:[%s496 + $0x70] sm:$0xff]
        %v512 = vld [vmem:[%s496 + $0x78] sm:$0xff]
        %513 = vmatprep.subr.mxu0 0.0
        %514 = vmatpush1.msra.mxu0 %v497
        %515 = vmatprep.subr.mxu0 0.0
        %516 = vmatpush1.msra.mxu0 %v498
        %517 = vmatprep.subr.mxu0 0.0
        %518 = vmatpush1.msra.mxu0 %v499
        %519 = vmatprep.subr.mxu0 0.0
        %520 = vmatpush1.msra.mxu0 %v500
        %521 = vmatprep.subr.mxu0 0.0
        %522 = vmatpush1.msra.mxu0 %v501
        %523 = vmatprep.subr.mxu0 0.0
        %524 = vmatpush1.msra.mxu0 %v502
        %525 = vmatprep.subr.mxu0 0.0
        %526 = vmatpush1.msra.mxu0 %v503
        %527 = vmatprep.subr.mxu0 0.0
        %528 = vmatpush1.msra.mxu0 %v504
        %529 = vmatprep.subr.mxu0 0.0
        %530 = vmatpush1.msra.mxu0 %v505
        %531 = vmatprep.subr.mxu0 0.0
        %532 = vmatpush1.msra.mxu0 %v506
        %533 = vmatprep.subr.mxu0 0.0
        %534 = vmatpush1.msra.mxu0 %v507
        %535 = vmatprep.subr.mxu0 0.0
        %536 = vmatpush1.msra.mxu0 %v508
        %537 = vmatprep.subr.mxu0 0.0
        %538 = vmatpush1.msra.mxu0 %v509
        %539 = vmatprep.subr.mxu0 0.0
        %540 = vmatpush1.msra.mxu0 %v510
        %541 = vmatprep.subr.mxu0 0.0
        %542 = vmatpush1.msra.mxu0 %v511
        %543 = vmatprep.subr.mxu0 0.0
        %544 = vmatpush1.msra.mxu0 %v512
        %545 = vmatprep.subr.mxu0 0.0
        %546 = vmatpush1.msra.mxu0 0.0
        %547 = vmatprep.subr.mxu0 0.0
        %548 = vmatpush1.msra.mxu0 0.0
        %549 = vmatprep.subr.mxu0 0.0
        %550 = vmatpush1.msra.mxu0 0.0
        %551 = vmatprep.subr.mxu0 0.0
        %552 = vmatpush1.msra.mxu0 0.0
        %553 = vmatprep.subr.mxu0 0.0
        %554 = vmatpush1.msra.mxu0 0.0
        %555 = vmatprep.subr.mxu0 0.0
        %556 = vmatpush1.msra.mxu0 0.0
        %557 = vmatprep.subr.mxu0 0.0
        %558 = vmatpush1.msra.mxu0 0.0
        %559 = vmatprep.subr.mxu0 0.0
        %560 = vmatpush1.msra.mxu0 0.0
        %561 = vmatprep.subr.mxu0 0.0
        %562 = vmatpush1.msra.mxu0 0.0
        %563 = vmatprep.subr.mxu0 0.0
        %564 = vmatpush1.msra.mxu0 0.0
        %565 = vmatprep.subr.mxu0 0.0
        %566 = vmatpush1.msra.mxu0 0.0
        %567 = vmatprep.subr.mxu0 0.0
        %568 = vmatpush1.msra.mxu0 0.0
        %569 = vmatprep.subr.mxu0 0.0
        %570 = vmatpush1.msra.mxu0 0.0
        %571 = vmatprep.subr.mxu0 0.0
        %572 = vmatpush1.msra.mxu0 0.0
        %573 = vmatprep.subr.mxu0 0.0
        %574 = vmatpush1.msra.mxu0 0.0
        %575 = vmatprep.subr.mxu0 0.0
        %576 = vmatpush1.msra.mxu0 0.0
        %577 = vmatprep.mubr.f32.mxu0 0.0
        %578 = vmatmul.mubr.f32.gmra.mrb[0].mxu0 %v488
        %v579 = vpop.f32.mrb[0].mxu0
        %v580 = vadd.f32 0.0, %v579
        %v581 = vpop.f32.mrb[0].mxu0
        %582 = vmatprep.mubr.f32.mxu0 0.0
        %583 = vmatmul.mubr.f32.gmra.mrb[0].mxu0 %v489
        %v584 = vpop.f32.mrb[0].mxu0
        %v585 = vadd.f32 0.0, %v584
        %v586 = vpop.f32.mrb[0].mxu0
        %587 = vmatprep.mubr.f32.mxu0 0.0
        %588 = vmatmul.mubr.f32.gmra.mrb[0].mxu0 %v490
        %v589 = vpop.f32.mrb[0].mxu0
        %v590 = vadd.f32 0.0, %v589
        %v591 = vpop.f32.mrb[0].mxu0
        %592 = vmatprep.mubr.f32.mxu0 0.0
        %593 = vmatmul.mubr.f32.gmra.mrb[0].mxu0 %v491
        %v594 = vpop.f32.mrb[0].mxu0
        %v595 = vadd.f32 0.0, %v594
        %v596 = vpop.f32.mrb[0].mxu0
        %597 = vmatprep.mubr.f32.mxu0 0.0
        %598 = vmatmul.mubr.f32.gmra.mrb[0].mxu0 %v492
        %v599 = vpop.f32.mrb[0].mxu0
        %v600 = vadd.f32 0.0, %v599
        %v601 = vpop.f32.mrb[0].mxu0
        %602 = vmatprep.mubr.f32.mxu0 0.0
        %603 = vmatmul.mubr.f32.gmra.mrb[0].mxu0 %v493
        %v604 = vpop.f32.mrb[0].mxu0
        %v605 = vadd.f32 0.0, %v604
        %v606 = vpop.f32.mrb[0].mxu0
        %607 = vmatprep.mubr.f32.mxu0 0.0
        %608 = vmatmul.mubr.f32.gmra.mrb[0].mxu0 %v494
        %v609 = vpop.f32.mrb[0].mxu0
        %v610 = vadd.f32 0.0, %v609
        %v611 = vpop.f32.mrb[0].mxu0
        %612 = vmatprep.mubr.f32.mxu0 0.0
        %613 = vmatmul.mubr.f32.gmra.mrb[0].mxu0 %v495
        %v614 = vpop.f32.mrb[0].mxu0
        %v615 = vadd.f32 0.0, %v614
        %v616 = vpop.f32.mrb[0].mxu0
        %617 = vdwg.mxu0
        %v618 = vadd.f32 %v480, %v580
        %v619 = vadd.f32 %v481, %v585
        %v620 = vadd.f32 %v482, %v590
        %v621 = vadd.f32 %v483, %v595
        %v622 = vadd.f32 %v484, %v600
        %v623 = vadd.f32 %v485, %v605
        %v624 = vadd.f32 %v486, %v610
        %v625 = vadd.f32 %v487, %v615
        %v626 = vld [vmem:[#allocation2 + $0x2] sm:$0xff]
        %v627 = vld [vmem:[#allocation2 + $0x12] sm:$0xff]
        %v628 = vld [vmem:[#allocation2 + $0x22] sm:$0xff]
        %v629 = vld [vmem:[#allocation2 + $0x32] sm:$0xff]
        %v630 = vld [vmem:[#allocation2 + $0x42] sm:$0xff]
        %v631 = vld [vmem:[#allocation2 + $0x52] sm:$0xff]
        %v632 = vld [vmem:[#allocation2 + $0x62] sm:$0xff]
        %v633 = vld [vmem:[#allocation2 + $0x72] sm:$0xff]
        %s634 = scalar_lea.vmem [#allocation3], 256
        %v635 = vld [vmem:[%s634] sm:$0xff]
        %v636 = vld [vmem:[%s634 + $0x8] sm:$0xff]
        %v637 = vld [vmem:[%s634 + $0x10] sm:$0xff]
        %v638 = vld [vmem:[%s634 + $0x18] sm:$0xff]
        %v639 = vld [vmem:[%s634 + $0x20] sm:$0xff]
        %v640 = vld [vmem:[%s634 + $0x28] sm:$0xff]
        %v641 = vld [vmem:[%s634 + $0x30] sm:$0xff]
        %v642 = vld [vmem:[%s634 + $0x38] sm:$0xff]
        %v643 = vld [vmem:[%s634 + $0x40] sm:$0xff]
        %v644 = vld [vmem:[%s634 + $0x48] sm:$0xff]
        %v645 = vld [vmem:[%s634 + $0x50] sm:$0xff]
        %v646 = vld [vmem:[%s634 + $0x58] sm:$0xff]
        %v647 = vld [vmem:[%s634 + $0x60] sm:$0xff]
        %v648 = vld [vmem:[%s634 + $0x68] sm:$0xff]
        %v649 = vld [vmem:[%s634 + $0x70] sm:$0xff]
        %v650 = vld [vmem:[%s634 + $0x78] sm:$0xff]
        %651 = vmatprep.subr.mxu0 0.0
        %652 = vmatpush1.msra.mxu0 %v635
        %653 = vmatprep.subr.mxu0 0.0
        %654 = vmatpush1.msra.mxu0 %v636
        %655 = vmatprep.subr.mxu0 0.0
        %656 = vmatpush1.msra.mxu0 %v637
        %657 = vmatprep.subr.mxu0 0.0
        %658 = vmatpush1.msra.mxu0 %v638
        %659 = vmatprep.subr.mxu0 0.0
        %660 = vmatpush1.msra.mxu0 %v639
        %661 = vmatprep.subr.mxu0 0.0
        %662 = vmatpush1.msra.mxu0 %v640
        %663 = vmatprep.subr.mxu0 0.0
        %664 = vmatpush1.msra.mxu0 %v641
        %665 = vmatprep.subr.mxu0 0.0
        %666 = vmatpush1.msra.mxu0 %v642
        %667 = vmatprep.subr.mxu0 0.0
        %668 = vmatpush1.msra.mxu0 %v643
        %669 = vmatprep.subr.mxu0 0.0
        %670 = vmatpush1.msra.mxu0 %v644
        %671 = vmatprep.subr.mxu0 0.0
        %672 = vmatpush1.msra.mxu0 %v645
        %673 = vmatprep.subr.mxu0 0.0
        %674 = vmatpush1.msra.mxu0 %v646
        %675 = vmatprep.subr.mxu0 0.0
        %676 = vmatpush1.msra.mxu0 %v647
        %677 = vmatprep.subr.mxu0 0.0
        %678 = vmatpush1.msra.mxu0 %v648
        %679 = vmatprep.subr.mxu0 0.0
        %680 = vmatpush1.msra.mxu0 %v649
        %681 = vmatprep.subr.mxu0 0.0
        %682 = vmatpush1.msra.mxu0 %v650
        %683 = vmatprep.subr.mxu0 0.0
        %684 = vmatpush1.msra.mxu0 0.0
        %685 = vmatprep.subr.mxu0 0.0
        %686 = vmatpush1.msra.mxu0 0.0
        %687 = vmatprep.subr.mxu0 0.0
        %688 = vmatpush1.msra.mxu0 0.0
        %689 = vmatprep.subr.mxu0 0.0
        %690 = vmatpush1.msra.mxu0 0.0
        %691 = vmatprep.subr.mxu0 0.0
        %692 = vmatpush1.msra.mxu0 0.0
        %693 = vmatprep.subr.mxu0 0.0
        %694 = vmatpush1.msra.mxu0 0.0
        %695 = vmatprep.subr.mxu0 0.0
        %696 = vmatpush1.msra.mxu0 0.0
        %697 = vmatprep.subr.mxu0 0.0
        %698 = vmatpush1.msra.mxu0 0.0
        %699 = vmatprep.subr.mxu0 0.0
        %700 = vmatpush1.msra.mxu0 0.0
        %701 = vmatprep.subr.mxu0 0.0
        %702 = vmatpush1.msra.mxu0 0.0
        %703 = vmatprep.subr.mxu0 0.0
        %704 = vmatpush1.msra.mxu0 0.0
        %705 = vmatprep.subr.mxu0 0.0
        %706 = vmatpush1.msra.mxu0 0.0
        %707 = vmatprep.subr.mxu0 0.0
        %708 = vmatpush1.msra.mxu0 0.0
        %709 = vmatprep.subr.mxu0 0.0
        %710 = vmatpush1.msra.mxu0 0.0
        %711 = vmatprep.subr.mxu0 0.0
        %712 = vmatpush1.msra.mxu0 0.0
        %713 = vmatprep.subr.mxu0 0.0
        %714 = vmatpush1.msra.mxu0 0.0
        %715 = vmatprep.mubr.f32.mxu0 0.0
        %716 = vmatmul.mubr.f32.gmra.mrb[0].mxu0 %v626
        %v717 = vpop.f32.mrb[0].mxu0
        %v718 = vadd.f32 0.0, %v717
        %v719 = vpop.f32.mrb[0].mxu0
        %720 = vmatprep.mubr.f32.mxu0 0.0
        %721 = vmatmul.mubr.f32.gmra.mrb[0].mxu0 %v627
        %v722 = vpop.f32.mrb[0].mxu0
        %v723 = vadd.f32 0.0, %v722
        %v724 = vpop.f32.mrb[0].mxu0
        %725 = vmatprep.mubr.f32.mxu0 0.0
        %726 = vmatmul.mubr.f32.gmra.mrb[0].mxu0 %v628
        %v727 = vpop.f32.mrb[0].mxu0
        %v728 = vadd.f32 0.0, %v727
        %v729 = vpop.f32.mrb[0].mxu0
        %730 = vmatprep.mubr.f32.mxu0 0.0
        %731 = vmatmul.mubr.f32.gmra.mrb[0].mxu0 %v629
        %v732 = vpop.f32.mrb[0].mxu0
        %v733 = vadd.f32 0.0, %v732
        %v734 = vpop.f32.mrb[0].mxu0
        %735 = vmatprep.mubr.f32.mxu0 0.0
        %736 = vmatmul.mubr.f32.gmra.mrb[0].mxu0 %v630
        %v737 = vpop.f32.mrb[0].mxu0
        %v738 = vadd.f32 0.0, %v737
        %v739 = vpop.f32.mrb[0].mxu0
        %740 = vmatprep.mubr.f32.mxu0 0.0
        %741 = vmatmul.mubr.f32.gmra.mrb[0].mxu0 %v631
        %v742 = vpop.f32.mrb[0].mxu0
        %v743 = vadd.f32 0.0, %v742
        %v744 = vpop.f32.mrb[0].mxu0
        %745 = vmatprep.mubr.f32.mxu0 0.0
        %746 = vmatmul.mubr.f32.gmra.mrb[0].mxu0 %v632
        %v747 = vpop.f32.mrb[0].mxu0
        %v748 = vadd.f32 0.0, %v747
        %v749 = vpop.f32.mrb[0].mxu0
        %750 = vmatprep.mubr.f32.mxu0 0.0
        %751 = vmatmul.mubr.f32.gmra.mrb[0].mxu0 %v633
        %v752 = vpop.f32.mrb[0].mxu0
        %v753 = vadd.f32 0.0, %v752
        %v754 = vpop.f32.mrb[0].mxu0
        %755 = vdwg.mxu0
        %v756 = vadd.f32 %v618, %v718
        %v757 = vadd.f32 %v619, %v723
        %v758 = vadd.f32 %v620, %v728
        %v759 = vadd.f32 %v621, %v733
        %v760 = vadd.f32 %v622, %v738
        %v761 = vadd.f32 %v623, %v743
        %v762 = vadd.f32 %v624, %v748
        %v763 = vadd.f32 %v625, %v753
        %v764 = vld [vmem:[%s335] sm:$0xff]
        %v765 = vld [vmem:[%s335 + $0x10] sm:$0xff]
        %v766 = vld [vmem:[%s335 + $0x20] sm:$0xff]
        %v767 = vld [vmem:[%s335 + $0x30] sm:$0xff]
        %v768 = vld [vmem:[%s335 + $0x40] sm:$0xff]
        %v769 = vld [vmem:[%s335 + $0x50] sm:$0xff]
        %v770 = vld [vmem:[%s335 + $0x60] sm:$0xff]
        %v771 = vld [vmem:[%s335 + $0x70] sm:$0xff]
        %s772 = scalar_lea.vmem [#allocation3], 384
        %v773 = vld [vmem:[%s772] sm:$0xff]
        %v774 = vld [vmem:[%s772 + $0x8] sm:$0xff]
        %v775 = vld [vmem:[%s772 + $0x10] sm:$0xff]
        %v776 = vld [vmem:[%s772 + $0x18] sm:$0xff]
        %v777 = vld [vmem:[%s772 + $0x20] sm:$0xff]
        %v778 = vld [vmem:[%s772 + $0x28] sm:$0xff]
        %v779 = vld [vmem:[%s772 + $0x30] sm:$0xff]
        %v780 = vld [vmem:[%s772 + $0x38] sm:$0xff]
        %v781 = vld [vmem:[%s772 + $0x40] sm:$0xff]
        %v782 = vld [vmem:[%s772 + $0x48] sm:$0xff]
        %v783 = vld [vmem:[%s772 + $0x50] sm:$0xff]
        %v784 = vld [vmem:[%s772 + $0x58] sm:$0xff]
        %v785 = vld [vmem:[%s772 + $0x60] sm:$0xff]
        %v786 = vld [vmem:[%s772 + $0x68] sm:$0xff]
        %v787 = vld [vmem:[%s772 + $0x70] sm:$0xff]
        %v788 = vld [vmem:[%s772 + $0x78] sm:$0xff]
        %789 = vmatprep.subr.mxu0 0.0
        %790 = vmatpush1.msra.mxu0 %v773
        %791 = vmatprep.subr.mxu0 0.0
        %792 = vmatpush1.msra.mxu0 %v774
        %793 = vmatprep.subr.mxu0 0.0
        %794 = vmatpush1.msra.mxu0 %v775
        %795 = vmatprep.subr.mxu0 0.0
        %796 = vmatpush1.msra.mxu0 %v776
        %797 = vmatprep.subr.mxu0 0.0
        %798 = vmatpush1.msra.mxu0 %v777
        %799 = vmatprep.subr.mxu0 0.0
        %800 = vmatpush1.msra.mxu0 %v778
        %801 = vmatprep.subr.mxu0 0.0
        %802 = vmatpush1.msra.mxu0 %v779
        %803 = vmatprep.subr.mxu0 0.0
        %804 = vmatpush1.msra.mxu0 %v780
        %805 = vmatprep.subr.mxu0 0.0
        %806 = vmatpush1.msra.mxu0 %v781
        %807 = vmatprep.subr.mxu0 0.0
        %808 = vmatpush1.msra.mxu0 %v782
        %809 = vmatprep.subr.mxu0 0.0
        %810 = vmatpush1.msra.mxu0 %v783
        %811 = vmatprep.subr.mxu0 0.0
        %812 = vmatpush1.msra.mxu0 %v784
        %813 = vmatprep.subr.mxu0 0.0
        %814 = vmatpush1.msra.mxu0 %v785
        %815 = vmatprep.subr.mxu0 0.0
        %816 = vmatpush1.msra.mxu0 %v786
        %817 = vmatprep.subr.mxu0 0.0
        %818 = vmatpush1.msra.mxu0 %v787
        %819 = vmatprep.subr.mxu0 0.0
        %820 = vmatpush1.msra.mxu0 %v788
        %821 = vmatprep.subr.mxu0 0.0
        %822 = vmatpush1.msra.mxu0 0.0
        %823 = vmatprep.subr.mxu0 0.0
        %824 = vmatpush1.msra.mxu0 0.0
        %825 = vmatprep.subr.mxu0 0.0
        %826 = vmatpush1.msra.mxu0 0.0
        %827 = vmatprep.subr.mxu0 0.0
        %828 = vmatpush1.msra.mxu0 0.0
        %829 = vmatprep.subr.mxu0 0.0
        %830 = vmatpush1.msra.mxu0 0.0
        %831 = vmatprep.subr.mxu0 0.0
        %832 = vmatpush1.msra.mxu0 0.0
        %833 = vmatprep.subr.mxu0 0.0
        %834 = vmatpush1.msra.mxu0 0.0
        %835 = vmatprep.subr.mxu0 0.0
        %836 = vmatpush1.msra.mxu0 0.0
        %837 = vmatprep.subr.mxu0 0.0
        %838 = vmatpush1.msra.mxu0 0.0
        %839 = vmatprep.subr.mxu0 0.0
        %840 = vmatpush1.msra.mxu0 0.0
        %841 = vmatprep.subr.mxu0 0.0
        %842 = vmatpush1.msra.mxu0 0.0
        %843 = vmatprep.subr.mxu0 0.0
        %844 = vmatpush1.msra.mxu0 0.0
        %845 = vmatprep.subr.mxu0 0.0
        %846 = vmatpush1.msra.mxu0 0.0
        %847 = vmatprep.subr.mxu0 0.0
        %848 = vmatpush1.msra.mxu0 0.0
        %849 = vmatprep.subr.mxu0 0.0
        %850 = vmatpush1.msra.mxu0 0.0
        %851 = vmatprep.subr.mxu0 0.0
        %852 = vmatpush1.msra.mxu0 0.0
        %853 = vmatprep.mubr.f32.mxu0 0.0
        %854 = vmatmul.mubr.f32.gmra.mrb[0].mxu0 %v764
        %v855 = vpop.f32.mrb[0].mxu0
        %v856 = vadd.f32 0.0, %v855
        %v857 = vpop.f32.mrb[0].mxu0
        %858 = vmatprep.mubr.f32.mxu0 0.0
        %859 = vmatmul.mubr.f32.gmra.mrb[0].mxu0 %v765
        %v860 = vpop.f32.mrb[0].mxu0
        %v861 = vadd.f32 0.0, %v860
        %v862 = vpop.f32.mrb[0].mxu0
        %863 = vmatprep.mubr.f32.mxu0 0.0
        %864 = vmatmul.mubr.f32.gmra.mrb[0].mxu0 %v766
        %v865 = vpop.f32.mrb[0].mxu0
        %v866 = vadd.f32 0.0, %v865
        %v867 = vpop.f32.mrb[0].mxu0
        %868 = vmatprep.mubr.f32.mxu0 0.0
        %869 = vmatmul.mubr.f32.gmra.mrb[0].mxu0 %v767
        %v870 = vpop.f32.mrb[0].mxu0
        %v871 = vadd.f32 0.0, %v870
        %v872 = vpop.f32.mrb[0].mxu0
        %873 = vmatprep.mubr.f32.mxu0 0.0
        %874 = vmatmul.mubr.f32.gmra.mrb[0].mxu0 %v768
        %v875 = vpop.f32.mrb[0].mxu0
        %v876 = vadd.f32 0.0, %v875
        %v877 = vpop.f32.mrb[0].mxu0
        %878 = vmatprep.mubr.f32.mxu0 0.0
        %879 = vmatmul.mubr.f32.gmra.mrb[0].mxu0 %v769
        %v880 = vpop.f32.mrb[0].mxu0
        %v881 = vadd.f32 0.0, %v880
        %v882 = vpop.f32.mrb[0].mxu0
        %883 = vmatprep.mubr.f32.mxu0 0.0
        %884 = vmatmul.mubr.f32.gmra.mrb[0].mxu0 %v770
        %v885 = vpop.f32.mrb[0].mxu0
        %v886 = vadd.f32 0.0, %v885
        %v887 = vpop.f32.mrb[0].mxu0
        %888 = vmatprep.mubr.f32.mxu0 0.0
        %889 = vmatmul.mubr.f32.gmra.mrb[0].mxu0 %v771
        %v890 = vpop.f32.mrb[0].mxu0
        %v891 = vadd.f32 0.0, %v890
        %v892 = vpop.f32.mrb[0].mxu0
        %893 = vdwg.mxu0
        %v894 = vadd.f32 %v756, %v856
        %v895 = vadd.f32 %v757, %v861
        %v896 = vadd.f32 %v758, %v866
        %v897 = vadd.f32 %v759, %v871
        %v898 = vadd.f32 %v760, %v876
        %v899 = vadd.f32 %v761, %v881
        %v900 = vadd.f32 %v762, %v886
        %v901 = vadd.f32 %v763, %v891
        %v902 = vld [vmem:[%s335 + $0x1] sm:$0xff]
        %v903 = vld [vmem:[%s335 + $0x11] sm:$0xff]
        %v904 = vld [vmem:[%s335 + $0x21] sm:$0xff]
        %v905 = vld [vmem:[%s335 + $0x31] sm:$0xff]
        %v906 = vld [vmem:[%s335 + $0x41] sm:$0xff]
        %v907 = vld [vmem:[%s335 + $0x51] sm:$0xff]
        %v908 = vld [vmem:[%s335 + $0x61] sm:$0xff]
        %v909 = vld [vmem:[%s335 + $0x71] sm:$0xff]
        %s910 = scalar_lea.vmem [#allocation3], 512
        %v911 = vld [vmem:[%s910] sm:$0xff]
        %v912 = vld [vmem:[%s910 + $0x8] sm:$0xff]
        %v913 = vld [vmem:[%s910 + $0x10] sm:$0xff]
        %v914 = vld [vmem:[%s910 + $0x18] sm:$0xff]
        %v915 = vld [vmem:[%s910 + $0x20] sm:$0xff]
        %v916 = vld [vmem:[%s910 + $0x28] sm:$0xff]
        %v917 = vld [vmem:[%s910 + $0x30] sm:$0xff]
        %v918 = vld [vmem:[%s910 + $0x38] sm:$0xff]
        %v919 = vld [vmem:[%s910 + $0x40] sm:$0xff]
        %v920 = vld [vmem:[%s910 + $0x48] sm:$0xff]
        %v921 = vld [vmem:[%s910 + $0x50] sm:$0xff]
        %v922 = vld [vmem:[%s910 + $0x58] sm:$0xff]
        %v923 = vld [vmem:[%s910 + $0x60] sm:$0xff]
        %v924 = vld [vmem:[%s910 + $0x68] sm:$0xff]
        %v925 = vld [vmem:[%s910 + $0x70] sm:$0xff]
        %v926 = vld [vmem:[%s910 + $0x78] sm:$0xff]
        %927 = vmatprep.subr.mxu0 0.0
        %928 = vmatpush1.msra.mxu0 %v911
        %929 = vmatprep.subr.mxu0 0.0
        %930 = vmatpush1.msra.mxu0 %v912
        %931 = vmatprep.subr.mxu0 0.0
        %932 = vmatpush1.msra.mxu0 %v913
        %933 = vmatprep.subr.mxu0 0.0
        %934 = vmatpush1.msra.mxu0 %v914
        %935 = vmatprep.subr.mxu0 0.0
        %936 = vmatpush1.msra.mxu0 %v915
        %937 = vmatprep.subr.mxu0 0.0
        %938 = vmatpush1.msra.mxu0 %v916
        %939 = vmatprep.subr.mxu0 0.0
        %940 = vmatpush1.msra.mxu0 %v917
        %941 = vmatprep.subr.mxu0 0.0
        %942 = vmatpush1.msra.mxu0 %v918
        %943 = vmatprep.subr.mxu0 0.0
        %944 = vmatpush1.msra.mxu0 %v919
        %945 = vmatprep.subr.mxu0 0.0
        %946 = vmatpush1.msra.mxu0 %v920
        %947 = vmatprep.subr.mxu0 0.0
        %948 = vmatpush1.msra.mxu0 %v921
        %949 = vmatprep.subr.mxu0 0.0
        %950 = vmatpush1.msra.mxu0 %v922
        %951 = vmatprep.subr.mxu0 0.0
        %952 = vmatpush1.msra.mxu0 %v923
        %953 = vmatprep.subr.mxu0 0.0
        %954 = vmatpush1.msra.mxu0 %v924
        %955 = vmatprep.subr.mxu0 0.0
        %956 = vmatpush1.msra.mxu0 %v925
        %957 = vmatprep.subr.mxu0 0.0
        %958 = vmatpush1.msra.mxu0 %v926
        %959 = vmatprep.subr.mxu0 0.0
        %960 = vmatpush1.msra.mxu0 0.0
        %961 = vmatprep.subr.mxu0 0.0
        %962 = vmatpush1.msra.mxu0 0.0
        %963 = vmatprep.subr.mxu0 0.0
        %964 = vmatpush1.msra.mxu0 0.0
        %965 = vmatprep.subr.mxu0 0.0
        %966 = vmatpush1.msra.mxu0 0.0
        %967 = vmatprep.subr.mxu0 0.0
        %968 = vmatpush1.msra.mxu0 0.0
        %969 = vmatprep.subr.mxu0 0.0
        %970 = vmatpush1.msra.mxu0 0.0
        %971 = vmatprep.subr.mxu0 0.0
        %972 = vmatpush1.msra.mxu0 0.0
        %973 = vmatprep.subr.mxu0 0.0
        %974 = vmatpush1.msra.mxu0 0.0
        %975 = vmatprep.subr.mxu0 0.0
        %976 = vmatpush1.msra.mxu0 0.0
        %977 = vmatprep.subr.mxu0 0.0
        %978 = vmatpush1.msra.mxu0 0.0
        %979 = vmatprep.subr.mxu0 0.0
        %980 = vmatpush1.msra.mxu0 0.0
        %981 = vmatprep.subr.mxu0 0.0
        %982 = vmatpush1.msra.mxu0 0.0
        %983 = vmatprep.subr.mxu0 0.0
        %984 = vmatpush1.msra.mxu0 0.0
        %985 = vmatprep.subr.mxu0 0.0
        %986 = vmatpush1.msra.mxu0 0.0
        %987 = vmatprep.subr.mxu0 0.0
        %988 = vmatpush1.msra.mxu0 0.0
        %989 = vmatprep.subr.mxu0 0.0
        %990 = vmatpush1.msra.mxu0 0.0
        %991 = vmatprep.mubr.f32.mxu0 0.0
        %992 = vmatmul.mubr.f32.gmra.mrb[0].mxu0 %v902
        %v993 = vpop.f32.mrb[0].mxu0
        %v994 = vadd.f32 0.0, %v993
        %v995 = vpop.f32.mrb[0].mxu0
        %996 = vmatprep.mubr.f32.mxu0 0.0
        %997 = vmatmul.mubr.f32.gmra.mrb[0].mxu0 %v903
        %v998 = vpop.f32.mrb[0].mxu0
        %v999 = vadd.f32 0.0, %v998
        %v1000 = vpop.f32.mrb[0].mxu0
        %1001 = vmatprep.mubr.f32.mxu0 0.0
        %1002 = vmatmul.mubr.f32.gmra.mrb[0].mxu0 %v904
        %v1003 = vpop.f32.mrb[0].mxu0
        %v1004 = vadd.f32 0.0, %v1003
        %v1005 = vpop.f32.mrb[0].mxu0
        %1006 = vmatprep.mubr.f32.mxu0 0.0
        %1007 = vmatmul.mubr.f32.gmra.mrb[0].mxu0 %v905
        %v1008 = vpop.f32.mrb[0].mxu0
        %v1009 = vadd.f32 0.0, %v1008
        %v1010 = vpop.f32.mrb[0].mxu0
        %1011 = vmatprep.mubr.f32.mxu0 0.0
        %1012 = vmatmul.mubr.f32.gmra.mrb[0].mxu0 %v906
        %v1013 = vpop.f32.mrb[0].mxu0
        %v1014 = vadd.f32 0.0, %v1013
        %v1015 = vpop.f32.mrb[0].mxu0
        %1016 = vmatprep.mubr.f32.mxu0 0.0
        %1017 = vmatmul.mubr.f32.gmra.mrb[0].mxu0 %v907
        %v1018 = vpop.f32.mrb[0].mxu0
        %v1019 = vadd.f32 0.0, %v1018
        %v1020 = vpop.f32.mrb[0].mxu0
        %1021 = vmatprep.mubr.f32.mxu0 0.0
        %1022 = vmatmul.mubr.f32.gmra.mrb[0].mxu0 %v908
        %v1023 = vpop.f32.mrb[0].mxu0
        %v1024 = vadd.f32 0.0, %v1023
        %v1025 = vpop.f32.mrb[0].mxu0
        %1026 = vmatprep.mubr.f32.mxu0 0.0
        %1027 = vmatmul.mubr.f32.gmra.mrb[0].mxu0 %v909
        %v1028 = vpop.f32.mrb[0].mxu0
        %v1029 = vadd.f32 0.0, %v1028
        %v1030 = vpop.f32.mrb[0].mxu0
        %1031 = vdwg.mxu0
        %v1032 = vadd.f32 %v894, %v994
        %v1033 = vadd.f32 %v895, %v999
        %v1034 = vadd.f32 %v896, %v1004
        %v1035 = vadd.f32 %v897, %v1009
        %v1036 = vadd.f32 %v898, %v1014
        %v1037 = vadd.f32 %v899, %v1019
        %v1038 = vadd.f32 %v900, %v1024
        %v1039 = vadd.f32 %v901, %v1029
        %v1040 = vld [vmem:[%s335 + $0x2] sm:$0xff]
        %v1041 = vld [vmem:[%s335 + $0x12] sm:$0xff]
        %v1042 = vld [vmem:[%s335 + $0x22] sm:$0xff]
        %v1043 = vld [vmem:[%s335 + $0x32] sm:$0xff]
        %v1044 = vld [vmem:[%s335 + $0x42] sm:$0xff]
        %v1045 = vld [vmem:[%s335 + $0x52] sm:$0xff]
        %v1046 = vld [vmem:[%s335 + $0x62] sm:$0xff]
        %v1047 = vld [vmem:[%s335 + $0x72] sm:$0xff]
        %s1048 = scalar_lea.vmem [#allocation3], 640
        %v1049 = vld [vmem:[%s1048] sm:$0xff]
        %v1050 = vld [vmem:[%s1048 + $0x8] sm:$0xff]
        %v1051 = vld [vmem:[%s1048 + $0x10] sm:$0xff]
        %v1052 = vld [vmem:[%s1048 + $0x18] sm:$0xff]
        %v1053 = vld [vmem:[%s1048 + $0x20] sm:$0xff]
        %v1054 = vld [vmem:[%s1048 + $0x28] sm:$0xff]
        %v1055 = vld [vmem:[%s1048 + $0x30] sm:$0xff]
        %v1056 = vld [vmem:[%s1048 + $0x38] sm:$0xff]
        %v1057 = vld [vmem:[%s1048 + $0x40] sm:$0xff]
        %v1058 = vld [vmem:[%s1048 + $0x48] sm:$0xff]
        %v1059 = vld [vmem:[%s1048 + $0x50] sm:$0xff]
        %v1060 = vld [vmem:[%s1048 + $0x58] sm:$0xff]
        %v1061 = vld [vmem:[%s1048 + $0x60] sm:$0xff]
        %v1062 = vld [vmem:[%s1048 + $0x68] sm:$0xff]
        %v1063 = vld [vmem:[%s1048 + $0x70] sm:$0xff]
        %v1064 = vld [vmem:[%s1048 + $0x78] sm:$0xff]
        %1065 = vmatprep.subr.mxu0 0.0
        %1066 = vmatpush1.msra.mxu0 %v1049
        %1067 = vmatprep.subr.mxu0 0.0
        %1068 = vmatpush1.msra.mxu0 %v1050
        %1069 = vmatprep.subr.mxu0 0.0
        %1070 = vmatpush1.msra.mxu0 %v1051
        %1071 = vmatprep.subr.mxu0 0.0
        %1072 = vmatpush1.msra.mxu0 %v1052
        %1073 = vmatprep.subr.mxu0 0.0
        %1074 = vmatpush1.msra.mxu0 %v1053
        %1075 = vmatprep.subr.mxu0 0.0
        %1076 = vmatpush1.msra.mxu0 %v1054
        %1077 = vmatprep.subr.mxu0 0.0
        %1078 = vmatpush1.msra.mxu0 %v1055
        %1079 = vmatprep.subr.mxu0 0.0
        %1080 = vmatpush1.msra.mxu0 %v1056
        %1081 = vmatprep.subr.mxu0 0.0
        %1082 = vmatpush1.msra.mxu0 %v1057
        %1083 = vmatprep.subr.mxu0 0.0
        %1084 = vmatpush1.msra.mxu0 %v1058
        %1085 = vmatprep.subr.mxu0 0.0
        %1086 = vmatpush1.msra.mxu0 %v1059
        %1087 = vmatprep.subr.mxu0 0.0
        %1088 = vmatpush1.msra.mxu0 %v1060
        %1089 = vmatprep.subr.mxu0 0.0
        %1090 = vmatpush1.msra.mxu0 %v1061
        %1091 = vmatprep.subr.mxu0 0.0
        %1092 = vmatpush1.msra.mxu0 %v1062
        %1093 = vmatprep.subr.mxu0 0.0
        %1094 = vmatpush1.msra.mxu0 %v1063
        %1095 = vmatprep.subr.mxu0 0.0
        %1096 = vmatpush1.msra.mxu0 %v1064
        %1097 = vmatprep.subr.mxu0 0.0
        %1098 = vmatpush1.msra.mxu0 0.0
        %1099 = vmatprep.subr.mxu0 0.0
        %1100 = vmatpush1.msra.mxu0 0.0
        %1101 = vmatprep.subr.mxu0 0.0
        %1102 = vmatpush1.msra.mxu0 0.0
        %1103 = vmatprep.subr.mxu0 0.0
        %1104 = vmatpush1.msra.mxu0 0.0
        %1105 = vmatprep.subr.mxu0 0.0
        %1106 = vmatpush1.msra.mxu0 0.0
        %1107 = vmatprep.subr.mxu0 0.0
        %1108 = vmatpush1.msra.mxu0 0.0
        %1109 = vmatprep.subr.mxu0 0.0
        %1110 = vmatpush1.msra.mxu0 0.0
        %1111 = vmatprep.subr.mxu0 0.0
        %1112 = vmatpush1.msra.mxu0 0.0
        %1113 = vmatprep.subr.mxu0 0.0
        %1114 = vmatpush1.msra.mxu0 0.0
        %1115 = vmatprep.subr.mxu0 0.0
        %1116 = vmatpush1.msra.mxu0 0.0
        %1117 = vmatprep.subr.mxu0 0.0
        %1118 = vmatpush1.msra.mxu0 0.0
        %1119 = vmatprep.subr.mxu0 0.0
        %1120 = vmatpush1.msra.mxu0 0.0
        %1121 = vmatprep.subr.mxu0 0.0
        %1122 = vmatpush1.msra.mxu0 0.0
        %1123 = vmatprep.subr.mxu0 0.0
        %1124 = vmatpush1.msra.mxu0 0.0
        %1125 = vmatprep.subr.mxu0 0.0
        %1126 = vmatpush1.msra.mxu0 0.0
        %1127 = vmatprep.subr.mxu0 0.0
        %1128 = vmatpush1.msra.mxu0 0.0
        %1129 = vmatprep.mubr.f32.mxu0 0.0
        %1130 = vmatmul.mubr.f32.gmra.mrb[0].mxu0 %v1040
        %v1131 = vpop.f32.mrb[0].mxu0
        %v1132 = vadd.f32 0.0, %v1131
        %v1133 = vpop.f32.mrb[0].mxu0
        %1134 = vmatprep.mubr.f32.mxu0 0.0
        %1135 = vmatmul.mubr.f32.gmra.mrb[0].mxu0 %v1041
        %v1136 = vpop.f32.mrb[0].mxu0
        %v1137 = vadd.f32 0.0, %v1136
        %v1138 = vpop.f32.mrb[0].mxu0
        %1139 = vmatprep.mubr.f32.mxu0 0.0
        %1140 = vmatmul.mubr.f32.gmra.mrb[0].mxu0 %v1042
        %v1141 = vpop.f32.mrb[0].mxu0
        %v1142 = vadd.f32 0.0, %v1141
        %v1143 = vpop.f32.mrb[0].mxu0
        %1144 = vmatprep.mubr.f32.mxu0 0.0
        %1145 = vmatmul.mubr.f32.gmra.mrb[0].mxu0 %v1043
        %v1146 = vpop.f32.mrb[0].mxu0
        %v1147 = vadd.f32 0.0, %v1146
        %v1148 = vpop.f32.mrb[0].mxu0
        %1149 = vmatprep.mubr.f32.mxu0 0.0
        %1150 = vmatmul.mubr.f32.gmra.mrb[0].mxu0 %v1044
        %v1151 = vpop.f32.mrb[0].mxu0
        %v1152 = vadd.f32 0.0, %v1151
        %v1153 = vpop.f32.mrb[0].mxu0
        %1154 = vmatprep.mubr.f32.mxu0 0.0
        %1155 = vmatmul.mubr.f32.gmra.mrb[0].mxu0 %v1045
        %v1156 = vpop.f32.mrb[0].mxu0
        %v1157 = vadd.f32 0.0, %v1156
        %v1158 = vpop.f32.mrb[0].mxu0
        %1159 = vmatprep.mubr.f32.mxu0 0.0
        %1160 = vmatmul.mubr.f32.gmra.mrb[0].mxu0 %v1046
        %v1161 = vpop.f32.mrb[0].mxu0
        %v1162 = vadd.f32 0.0, %v1161
        %v1163 = vpop.f32.mrb[0].mxu0
        %1164 = vmatprep.mubr.f32.mxu0 0.0
        %1165 = vmatmul.mubr.f32.gmra.mrb[0].mxu0 %v1047
        %v1166 = vpop.f32.mrb[0].mxu0
        %v1167 = vadd.f32 0.0, %v1166
        %v1168 = vpop.f32.mrb[0].mxu0
        %1169 = vdwg.mxu0
        %v1170 = vadd.f32 %v1032, %v1132
        %v1171 = vadd.f32 %v1033, %v1137
        %v1172 = vadd.f32 %v1034, %v1142
        %v1173 = vadd.f32 %v1035, %v1147
        %v1174 = vadd.f32 %v1036, %v1152
        %v1175 = vadd.f32 %v1037, %v1157
        %v1176 = vadd.f32 %v1038, %v1162
        %v1177 = vadd.f32 %v1039, %v1167
        %s1178 = scalar_lea.vmem [#allocation2], 32
        %v1179 = vld [vmem:[%s1178] sm:$0xff]
        %v1180 = vld [vmem:[%s1178 + $0x10] sm:$0xff]
        %v1181 = vld [vmem:[%s1178 + $0x20] sm:$0xff]
        %v1182 = vld [vmem:[%s1178 + $0x30] sm:$0xff]
        %v1183 = vld [vmem:[%s1178 + $0x40] sm:$0xff]
        %v1184 = vld [vmem:[%s1178 + $0x50] sm:$0xff]
        %v1185 = vld [vmem:[%s1178 + $0x60] sm:$0xff]
        %v1186 = vld [vmem:[%s1178 + $0x70] sm:$0xff]
        %s1187 = scalar_lea.vmem [#allocation3], 768
        %v1188 = vld [vmem:[%s1187] sm:$0xff]
        %v1189 = vld [vmem:[%s1187 + $0x8] sm:$0xff]
        %v1190 = vld [vmem:[%s1187 + $0x10] sm:$0xff]
        %v1191 = vld [vmem:[%s1187 + $0x18] sm:$0xff]
        %v1192 = vld [vmem:[%s1187 + $0x20] sm:$0xff]
        %v1193 = vld [vmem:[%s1187 + $0x28] sm:$0xff]
        %v1194 = vld [vmem:[%s1187 + $0x30] sm:$0xff]
        %v1195 = vld [vmem:[%s1187 + $0x38] sm:$0xff]
        %v1196 = vld [vmem:[%s1187 + $0x40] sm:$0xff]
        %v1197 = vld [vmem:[%s1187 + $0x48] sm:$0xff]
        %v1198 = vld [vmem:[%s1187 + $0x50] sm:$0xff]
        %v1199 = vld [vmem:[%s1187 + $0x58] sm:$0xff]
        %v1200 = vld [vmem:[%s1187 + $0x60] sm:$0xff]
        %v1201 = vld [vmem:[%s1187 + $0x68] sm:$0xff]
        %v1202 = vld [vmem:[%s1187 + $0x70] sm:$0xff]
        %v1203 = vld [vmem:[%s1187 + $0x78] sm:$0xff]
        %1204 = vmatprep.subr.mxu0 0.0
        %1205 = vmatpush1.msra.mxu0 %v1188
        %1206 = vmatprep.subr.mxu0 0.0
        %1207 = vmatpush1.msra.mxu0 %v1189
        %1208 = vmatprep.subr.mxu0 0.0
        %1209 = vmatpush1.msra.mxu0 %v1190
        %1210 = vmatprep.subr.mxu0 0.0
        %1211 = vmatpush1.msra.mxu0 %v1191
        %1212 = vmatprep.subr.mxu0 0.0
        %1213 = vmatpush1.msra.mxu0 %v1192
        %1214 = vmatprep.subr.mxu0 0.0
        %1215 = vmatpush1.msra.mxu0 %v1193
        %1216 = vmatprep.subr.mxu0 0.0
        %1217 = vmatpush1.msra.mxu0 %v1194
        %1218 = vmatprep.subr.mxu0 0.0
        %1219 = vmatpush1.msra.mxu0 %v1195
        %1220 = vmatprep.subr.mxu0 0.0
        %1221 = vmatpush1.msra.mxu0 %v1196
        %1222 = vmatprep.subr.mxu0 0.0
        %1223 = vmatpush1.msra.mxu0 %v1197
        %1224 = vmatprep.subr.mxu0 0.0
        %1225 = vmatpush1.msra.mxu0 %v1198
        %1226 = vmatprep.subr.mxu0 0.0
        %1227 = vmatpush1.msra.mxu0 %v1199
        %1228 = vmatprep.subr.mxu0 0.0
        %1229 = vmatpush1.msra.mxu0 %v1200
        %1230 = vmatprep.subr.mxu0 0.0
        %1231 = vmatpush1.msra.mxu0 %v1201
        %1232 = vmatprep.subr.mxu0 0.0
        %1233 = vmatpush1.msra.mxu0 %v1202
        %1234 = vmatprep.subr.mxu0 0.0
        %1235 = vmatpush1.msra.mxu0 %v1203
        %1236 = vmatprep.subr.mxu0 0.0
        %1237 = vmatpush1.msra.mxu0 0.0
        %1238 = vmatprep.subr.mxu0 0.0
        %1239 = vmatpush1.msra.mxu0 0.0
        %1240 = vmatprep.subr.mxu0 0.0
        %1241 = vmatpush1.msra.mxu0 0.0
        %1242 = vmatprep.subr.mxu0 0.0
        %1243 = vmatpush1.msra.mxu0 0.0
        %1244 = vmatprep.subr.mxu0 0.0
        %1245 = vmatpush1.msra.mxu0 0.0
        %1246 = vmatprep.subr.mxu0 0.0
        %1247 = vmatpush1.msra.mxu0 0.0
        %1248 = vmatprep.subr.mxu0 0.0
        %1249 = vmatpush1.msra.mxu0 0.0
        %1250 = vmatprep.subr.mxu0 0.0
        %1251 = vmatpush1.msra.mxu0 0.0
        %1252 = vmatprep.subr.mxu0 0.0
        %1253 = vmatpush1.msra.mxu0 0.0
        %1254 = vmatprep.subr.mxu0 0.0
        %1255 = vmatpush1.msra.mxu0 0.0
        %1256 = vmatprep.subr.mxu0 0.0
        %1257 = vmatpush1.msra.mxu0 0.0
        %1258 = vmatprep.subr.mxu0 0.0
        %1259 = vmatpush1.msra.mxu0 0.0
        %1260 = vmatprep.subr.mxu0 0.0
        %1261 = vmatpush1.msra.mxu0 0.0
        %1262 = vmatprep.subr.mxu0 0.0
        %1263 = vmatpush1.msra.mxu0 0.0
        %1264 = vmatprep.subr.mxu0 0.0
        %1265 = vmatpush1.msra.mxu0 0.0
        %1266 = vmatprep.subr.mxu0 0.0
        %1267 = vmatpush1.msra.mxu0 0.0
        %1268 = vmatprep.mubr.f32.mxu0 0.0
        %1269 = vmatmul.mubr.f32.gmra.mrb[0].mxu0 %v1179
        %v1270 = vpop.f32.mrb[0].mxu0
        %v1271 = vadd.f32 0.0, %v1270
        %v1272 = vpop.f32.mrb[0].mxu0
        %1273 = vmatprep.mubr.f32.mxu0 0.0
        %1274 = vmatmul.mubr.f32.gmra.mrb[0].mxu0 %v1180
        %v1275 = vpop.f32.mrb[0].mxu0
        %v1276 = vadd.f32 0.0, %v1275
        %v1277 = vpop.f32.mrb[0].mxu0
        %1278 = vmatprep.mubr.f32.mxu0 0.0
        %1279 = vmatmul.mubr.f32.gmra.mrb[0].mxu0 %v1181
        %v1280 = vpop.f32.mrb[0].mxu0
        %v1281 = vadd.f32 0.0, %v1280
        %v1282 = vpop.f32.mrb[0].mxu0
        %1283 = vmatprep.mubr.f32.mxu0 0.0
        %1284 = vmatmul.mubr.f32.gmra.mrb[0].mxu0 %v1182
        %v1285 = vpop.f32.mrb[0].mxu0
        %v1286 = vadd.f32 0.0, %v1285
        %v1287 = vpop.f32.mrb[0].mxu0
        %1288 = vmatprep.mubr.f32.mxu0 0.0
        %1289 = vmatmul.mubr.f32.gmra.mrb[0].mxu0 %v1183
        %v1290 = vpop.f32.mrb[0].mxu0
        %v1291 = vadd.f32 0.0, %v1290
        %v1292 = vpop.f32.mrb[0].mxu0
        %1293 = vmatprep.mubr.f32.mxu0 0.0
        %1294 = vmatmul.mubr.f32.gmra.mrb[0].mxu0 %v1184
        %v1295 = vpop.f32.mrb[0].mxu0
        %v1296 = vadd.f32 0.0, %v1295
        %v1297 = vpop.f32.mrb[0].mxu0
        %1298 = vmatprep.mubr.f32.mxu0 0.0
        %1299 = vmatmul.mubr.f32.gmra.mrb[0].mxu0 %v1185
        %v1300 = vpop.f32.mrb[0].mxu0
        %v1301 = vadd.f32 0.0, %v1300
        %v1302 = vpop.f32.mrb[0].mxu0
        %1303 = vmatprep.mubr.f32.mxu0 0.0
        %1304 = vmatmul.mubr.f32.gmra.mrb[0].mxu0 %v1186
        %v1305 = vpop.f32.mrb[0].mxu0
        %v1306 = vadd.f32 0.0, %v1305
        %v1307 = vpop.f32.mrb[0].mxu0
        %1308 = vdwg.mxu0
        %v1309 = vadd.f32 %v1170, %v1271
        %v1310 = vadd.f32 %v1171, %v1276
        %v1311 = vadd.f32 %v1172, %v1281
        %v1312 = vadd.f32 %v1173, %v1286
        %v1313 = vadd.f32 %v1174, %v1291
        %v1314 = vadd.f32 %v1175, %v1296
        %v1315 = vadd.f32 %v1176, %v1301
        %v1316 = vadd.f32 %v1177, %v1306
        %v1317 = vld [vmem:[%s1178 + $0x1] sm:$0xff]
        %v1318 = vld [vmem:[%s1178 + $0x11] sm:$0xff]
        %v1319 = vld [vmem:[%s1178 + $0x21] sm:$0xff]
        %v1320 = vld [vmem:[%s1178 + $0x31] sm:$0xff]
        %v1321 = vld [vmem:[%s1178 + $0x41] sm:$0xff]
        %v1322 = vld [vmem:[%s1178 + $0x51] sm:$0xff]
        %v1323 = vld [vmem:[%s1178 + $0x61] sm:$0xff]
        %v1324 = vld [vmem:[%s1178 + $0x71] sm:$0xff]
        %s1325 = scalar_lea.vmem [#allocation3], 896
        %v1326 = vld [vmem:[%s1325] sm:$0xff]
        %v1327 = vld [vmem:[%s1325 + $0x8] sm:$0xff]
        %v1328 = vld [vmem:[%s1325 + $0x10] sm:$0xff]
        %v1329 = vld [vmem:[%s1325 + $0x18] sm:$0xff]
        %v1330 = vld [vmem:[%s1325 + $0x20] sm:$0xff]
        %v1331 = vld [vmem:[%s1325 + $0x28] sm:$0xff]
        %v1332 = vld [vmem:[%s1325 + $0x30] sm:$0xff]
        %v1333 = vld [vmem:[%s1325 + $0x38] sm:$0xff]
        %v1334 = vld [vmem:[%s1325 + $0x40] sm:$0xff]
        %v1335 = vld [vmem:[%s1325 + $0x48] sm:$0xff]
        %v1336 = vld [vmem:[%s1325 + $0x50] sm:$0xff]
        %v1337 = vld [vmem:[%s1325 + $0x58] sm:$0xff]
        %v1338 = vld [vmem:[%s1325 + $0x60] sm:$0xff]
        %v1339 = vld [vmem:[%s1325 + $0x68] sm:$0xff]
        %v1340 = vld [vmem:[%s1325 + $0x70] sm:$0xff]
        %v1341 = vld [vmem:[%s1325 + $0x78] sm:$0xff]
        %1342 = vmatprep.subr.mxu0 0.0
        %1343 = vmatpush1.msra.mxu0 %v1326
        %1344 = vmatprep.subr.mxu0 0.0
        %1345 = vmatpush1.msra.mxu0 %v1327
        %1346 = vmatprep.subr.mxu0 0.0
        %1347 = vmatpush1.msra.mxu0 %v1328
        %1348 = vmatprep.subr.mxu0 0.0
        %1349 = vmatpush1.msra.mxu0 %v1329
        %1350 = vmatprep.subr.mxu0 0.0
        %1351 = vmatpush1.msra.mxu0 %v1330
        %1352 = vmatprep.subr.mxu0 0.0
        %1353 = vmatpush1.msra.mxu0 %v1331
        %1354 = vmatprep.subr.mxu0 0.0
        %1355 = vmatpush1.msra.mxu0 %v1332
        %1356 = vmatprep.subr.mxu0 0.0
        %1357 = vmatpush1.msra.mxu0 %v1333
        %1358 = vmatprep.subr.mxu0 0.0
        %1359 = vmatpush1.msra.mxu0 %v1334
        %1360 = vmatprep.subr.mxu0 0.0
        %1361 = vmatpush1.msra.mxu0 %v1335
        %1362 = vmatprep.subr.mxu0 0.0
        %1363 = vmatpush1.msra.mxu0 %v1336
        %1364 = vmatprep.subr.mxu0 0.0
        %1365 = vmatpush1.msra.mxu0 %v1337
        %1366 = vmatprep.subr.mxu0 0.0
        %1367 = vmatpush1.msra.mxu0 %v1338
        %1368 = vmatprep.subr.mxu0 0.0
        %1369 = vmatpush1.msra.mxu0 %v1339
        %1370 = vmatprep.subr.mxu0 0.0
        %1371 = vmatpush1.msra.mxu0 %v1340
        %1372 = vmatprep.subr.mxu0 0.0
        %1373 = vmatpush1.msra.mxu0 %v1341
        %1374 = vmatprep.subr.mxu0 0.0
        %1375 = vmatpush1.msra.mxu0 0.0
        %1376 = vmatprep.subr.mxu0 0.0
        %1377 = vmatpush1.msra.mxu0 0.0
        %1378 = vmatprep.subr.mxu0 0.0
        %1379 = vmatpush1.msra.mxu0 0.0
        %1380 = vmatprep.subr.mxu0 0.0
        %1381 = vmatpush1.msra.mxu0 0.0
        %1382 = vmatprep.subr.mxu0 0.0
        %1383 = vmatpush1.msra.mxu0 0.0
        %1384 = vmatprep.subr.mxu0 0.0
        %1385 = vmatpush1.msra.mxu0 0.0
        %1386 = vmatprep.subr.mxu0 0.0
        %1387 = vmatpush1.msra.mxu0 0.0
        %1388 = vmatprep.subr.mxu0 0.0
        %1389 = vmatpush1.msra.mxu0 0.0
        %1390 = vmatprep.subr.mxu0 0.0
        %1391 = vmatpush1.msra.mxu0 0.0
        %1392 = vmatprep.subr.mxu0 0.0
        %1393 = vmatpush1.msra.mxu0 0.0
        %1394 = vmatprep.subr.mxu0 0.0
        %1395 = vmatpush1.msra.mxu0 0.0
        %1396 = vmatprep.subr.mxu0 0.0
        %1397 = vmatpush1.msra.mxu0 0.0
        %1398 = vmatprep.subr.mxu0 0.0
        %1399 = vmatpush1.msra.mxu0 0.0
        %1400 = vmatprep.subr.mxu0 0.0
        %1401 = vmatpush1.msra.mxu0 0.0
        %1402 = vmatprep.subr.mxu0 0.0
        %1403 = vmatpush1.msra.mxu0 0.0
        %1404 = vmatprep.subr.mxu0 0.0
        %1405 = vmatpush1.msra.mxu0 0.0
        %1406 = vmatprep.mubr.f32.mxu0 0.0
        %1407 = vmatmul.mubr.f32.gmra.mrb[0].mxu0 %v1317
        %v1408 = vpop.f32.mrb[0].mxu0
        %v1409 = vadd.f32 0.0, %v1408
        %v1410 = vpop.f32.mrb[0].mxu0
        %1411 = vmatprep.mubr.f32.mxu0 0.0
        %1412 = vmatmul.mubr.f32.gmra.mrb[0].mxu0 %v1318
        %v1413 = vpop.f32.mrb[0].mxu0
        %v1414 = vadd.f32 0.0, %v1413
        %v1415 = vpop.f32.mrb[0].mxu0
        %1416 = vmatprep.mubr.f32.mxu0 0.0
        %1417 = vmatmul.mubr.f32.gmra.mrb[0].mxu0 %v1319
        %v1418 = vpop.f32.mrb[0].mxu0
        %v1419 = vadd.f32 0.0, %v1418
        %v1420 = vpop.f32.mrb[0].mxu0
        %1421 = vmatprep.mubr.f32.mxu0 0.0
        %1422 = vmatmul.mubr.f32.gmra.mrb[0].mxu0 %v1320
        %v1423 = vpop.f32.mrb[0].mxu0
        %v1424 = vadd.f32 0.0, %v1423
        %v1425 = vpop.f32.mrb[0].mxu0
        %1426 = vmatprep.mubr.f32.mxu0 0.0
        %1427 = vmatmul.mubr.f32.gmra.mrb[0].mxu0 %v1321
        %v1428 = vpop.f32.mrb[0].mxu0
        %v1429 = vadd.f32 0.0, %v1428
        %v1430 = vpop.f32.mrb[0].mxu0
        %1431 = vmatprep.mubr.f32.mxu0 0.0
        %1432 = vmatmul.mubr.f32.gmra.mrb[0].mxu0 %v1322
        %v1433 = vpop.f32.mrb[0].mxu0
        %v1434 = vadd.f32 0.0, %v1433
        %v1435 = vpop.f32.mrb[0].mxu0
        %1436 = vmatprep.mubr.f32.mxu0 0.0
        %1437 = vmatmul.mubr.f32.gmra.mrb[0].mxu0 %v1323
        %v1438 = vpop.f32.mrb[0].mxu0
        %v1439 = vadd.f32 0.0, %v1438
        %v1440 = vpop.f32.mrb[0].mxu0
        %1441 = vmatprep.mubr.f32.mxu0 0.0
        %1442 = vmatmul.mubr.f32.gmra.mrb[0].mxu0 %v1324
        %v1443 = vpop.f32.mrb[0].mxu0
        %v1444 = vadd.f32 0.0, %v1443
        %v1445 = vpop.f32.mrb[0].mxu0
        %1446 = vdwg.mxu0
        %v1447 = vadd.f32 %v1309, %v1409
        %v1448 = vadd.f32 %v1310, %v1414
        %v1449 = vadd.f32 %v1311, %v1419
        %v1450 = vadd.f32 %v1312, %v1424
        %v1451 = vadd.f32 %v1313, %v1429
        %v1452 = vadd.f32 %v1314, %v1434
        %v1453 = vadd.f32 %v1315, %v1439
        %v1454 = vadd.f32 %v1316, %v1444
        %v1455 = vld [vmem:[%s1178 + $0x2] sm:$0xff]
        %v1456 = vld [vmem:[%s1178 + $0x12] sm:$0xff]
        %v1457 = vld [vmem:[%s1178 + $0x22] sm:$0xff]
        %v1458 = vld [vmem:[%s1178 + $0x32] sm:$0xff]
        %v1459 = vld [vmem:[%s1178 + $0x42] sm:$0xff]
        %v1460 = vld [vmem:[%s1178 + $0x52] sm:$0xff]
        %v1461 = vld [vmem:[%s1178 + $0x62] sm:$0xff]
        %v1462 = vld [vmem:[%s1178 + $0x72] sm:$0xff]
        %s1463 = scalar_lea.vmem [#allocation3], 1024
        %v1464 = vld [vmem:[%s1463] sm:$0xff]
        %v1465 = vld [vmem:[%s1463 + $0x8] sm:$0xff]
        %v1466 = vld [vmem:[%s1463 + $0x10] sm:$0xff]
        %v1467 = vld [vmem:[%s1463 + $0x18] sm:$0xff]
        %v1468 = vld [vmem:[%s1463 + $0x20] sm:$0xff]
        %v1469 = vld [vmem:[%s1463 + $0x28] sm:$0xff]
        %v1470 = vld [vmem:[%s1463 + $0x30] sm:$0xff]
        %v1471 = vld [vmem:[%s1463 + $0x38] sm:$0xff]
        %v1472 = vld [vmem:[%s1463 + $0x40] sm:$0xff]
        %v1473 = vld [vmem:[%s1463 + $0x48] sm:$0xff]
        %v1474 = vld [vmem:[%s1463 + $0x50] sm:$0xff]
        %v1475 = vld [vmem:[%s1463 + $0x58] sm:$0xff]
        %v1476 = vld [vmem:[%s1463 + $0x60] sm:$0xff]
        %v1477 = vld [vmem:[%s1463 + $0x68] sm:$0xff]
        %v1478 = vld [vmem:[%s1463 + $0x70] sm:$0xff]
        %v1479 = vld [vmem:[%s1463 + $0x78] sm:$0xff]
        %1480 = vmatprep.subr.mxu0 0.0
        %1481 = vmatpush1.msra.mxu0 %v1464
        %1482 = vmatprep.subr.mxu0 0.0
        %1483 = vmatpush1.msra.mxu0 %v1465
        %1484 = vmatprep.subr.mxu0 0.0
        %1485 = vmatpush1.msra.mxu0 %v1466
        %1486 = vmatprep.subr.mxu0 0.0
        %1487 = vmatpush1.msra.mxu0 %v1467
        %1488 = vmatprep.subr.mxu0 0.0
        %1489 = vmatpush1.msra.mxu0 %v1468
        %1490 = vmatprep.subr.mxu0 0.0
        %1491 = vmatpush1.msra.mxu0 %v1469
        %1492 = vmatprep.subr.mxu0 0.0
        %1493 = vmatpush1.msra.mxu0 %v1470
        %1494 = vmatprep.subr.mxu0 0.0
        %1495 = vmatpush1.msra.mxu0 %v1471
        %1496 = vmatprep.subr.mxu0 0.0
        %1497 = vmatpush1.msra.mxu0 %v1472
        %1498 = vmatprep.subr.mxu0 0.0
        %1499 = vmatpush1.msra.mxu0 %v1473
        %1500 = vmatprep.subr.mxu0 0.0
        %1501 = vmatpush1.msra.mxu0 %v1474
        %1502 = vmatprep.subr.mxu0 0.0
        %1503 = vmatpush1.msra.mxu0 %v1475
        %1504 = vmatprep.subr.mxu0 0.0
        %1505 = vmatpush1.msra.mxu0 %v1476
        %1506 = vmatprep.subr.mxu0 0.0
        %1507 = vmatpush1.msra.mxu0 %v1477
        %1508 = vmatprep.subr.mxu0 0.0
        %1509 = vmatpush1.msra.mxu0 %v1478
        %1510 = vmatprep.subr.mxu0 0.0
        %1511 = vmatpush1.msra.mxu0 %v1479
        %1512 = vmatprep.subr.mxu0 0.0
        %1513 = vmatpush1.msra.mxu0 0.0
        %1514 = vmatprep.subr.mxu0 0.0
        %1515 = vmatpush1.msra.mxu0 0.0
        %1516 = vmatprep.subr.mxu0 0.0
        %1517 = vmatpush1.msra.mxu0 0.0
        %1518 = vmatprep.subr.mxu0 0.0
        %1519 = vmatpush1.msra.mxu0 0.0
        %1520 = vmatprep.subr.mxu0 0.0
        %1521 = vmatpush1.msra.mxu0 0.0
        %1522 = vmatprep.subr.mxu0 0.0
        %1523 = vmatpush1.msra.mxu0 0.0
        %1524 = vmatprep.subr.mxu0 0.0
        %1525 = vmatpush1.msra.mxu0 0.0
        %1526 = vmatprep.subr.mxu0 0.0
        %1527 = vmatpush1.msra.mxu0 0.0
        %1528 = vmatprep.subr.mxu0 0.0
        %1529 = vmatpush1.msra.mxu0 0.0
        %1530 = vmatprep.subr.mxu0 0.0
        %1531 = vmatpush1.msra.mxu0 0.0
        %1532 = vmatprep.subr.mxu0 0.0
        %1533 = vmatpush1.msra.mxu0 0.0
        %1534 = vmatprep.subr.mxu0 0.0
        %1535 = vmatpush1.msra.mxu0 0.0
        %1536 = vmatprep.subr.mxu0 0.0
        %1537 = vmatpush1.msra.mxu0 0.0
        %1538 = vmatprep.subr.mxu0 0.0
        %1539 = vmatpush1.msra.mxu0 0.0
        %1540 = vmatprep.subr.mxu0 0.0
        %1541 = vmatpush1.msra.mxu0 0.0
        %1542 = vmatprep.subr.mxu0 0.0
        %1543 = vmatpush1.msra.mxu0 0.0
        %1544 = vmatprep.mubr.f32.mxu0 0.0
        %1545 = vmatmul.mubr.f32.gmra.mrb[0].mxu0 %v1455
        %v1546 = vpop.f32.mrb[0].mxu0
        %v1547 = vadd.f32 0.0, %v1546
        %v1548 = vpop.f32.mrb[0].mxu0
        %1549 = vmatprep.mubr.f32.mxu0 0.0
        %1550 = vmatmul.mubr.f32.gmra.mrb[0].mxu0 %v1456
        %v1551 = vpop.f32.mrb[0].mxu0
        %v1552 = vadd.f32 0.0, %v1551
        %v1553 = vpop.f32.mrb[0].mxu0
        %1554 = vmatprep.mubr.f32.mxu0 0.0
        %1555 = vmatmul.mubr.f32.gmra.mrb[0].mxu0 %v1457
        %v1556 = vpop.f32.mrb[0].mxu0
        %v1557 = vadd.f32 0.0, %v1556
        %v1558 = vpop.f32.mrb[0].mxu0
        %1559 = vmatprep.mubr.f32.mxu0 0.0
        %1560 = vmatmul.mubr.f32.gmra.mrb[0].mxu0 %v1458
        %v1561 = vpop.f32.mrb[0].mxu0
        %v1562 = vadd.f32 0.0, %v1561
        %v1563 = vpop.f32.mrb[0].mxu0
        %1564 = vmatprep.mubr.f32.mxu0 0.0
        %1565 = vmatmul.mubr.f32.gmra.mrb[0].mxu0 %v1459
        %v1566 = vpop.f32.mrb[0].mxu0
        %v1567 = vadd.f32 0.0, %v1566
        %v1568 = vpop.f32.mrb[0].mxu0
        %1569 = vmatprep.mubr.f32.mxu0 0.0
        %1570 = vmatmul.mubr.f32.gmra.mrb[0].mxu0 %v1460
        %v1571 = vpop.f32.mrb[0].mxu0
        %v1572 = vadd.f32 0.0, %v1571
        %v1573 = vpop.f32.mrb[0].mxu0
        %1574 = vmatprep.mubr.f32.mxu0 0.0
        %1575 = vmatmul.mubr.f32.gmra.mrb[0].mxu0 %v1461
        %v1576 = vpop.f32.mrb[0].mxu0
        %v1577 = vadd.f32 0.0, %v1576
        %v1578 = vpop.f32.mrb[0].mxu0
        %1579 = vmatprep.mubr.f32.mxu0 0.0
        %1580 = vmatmul.mubr.f32.gmra.mrb[0].mxu0 %v1462
        %v1581 = vpop.f32.mrb[0].mxu0
        %v1582 = vadd.f32 0.0, %v1581
        %v1583 = vpop.f32.mrb[0].mxu0
        %1584 = vdwg.mxu0
        %v1585 = vadd.f32 %v1447, %v1547
        %v1586 = vadd.f32 %v1448, %v1552
        %v1587 = vadd.f32 %v1449, %v1557
        %v1588 = vadd.f32 %v1450, %v1562
        %v1589 = vadd.f32 %v1451, %v1567
        %v1590 = vadd.f32 %v1452, %v1572
        %v1591 = vadd.f32 %v1453, %v1577
        %v1592 = vadd.f32 %v1454, %v1582
        %v1593 = vmax.f32 %v1585, 0.0
        %v1594 = vmax.f32 %v1586, 0.0
        %v1595 = vmax.f32 %v1587, 0.0
        %v1596 = vmax.f32 %v1588, 0.0
        %v1597 = vmax.f32 %v1589, 0.0
        %v1598 = vmax.f32 %v1590, 0.0
        %v1599 = vmax.f32 %v1591, 0.0
        %v1600 = vmax.f32 %v1592, 0.0
        %1601 = vst [vmem:[%s335 + $0x1] sm:$0xff] %v1593
        %1602 = vst [vmem:[%s335 + $0x11] sm:$0xff] %v1594
        %1603 = vst [vmem:[%s335 + $0x21] sm:$0xff] %v1595
        %1604 = vst [vmem:[%s335 + $0x31] sm:$0xff] %v1596
        %1605 = vst [vmem:[%s335 + $0x41] sm:$0xff] %v1597
        %1606 = vst [vmem:[%s335 + $0x51] sm:$0xff] %v1598
        %1607 = vst [vmem:[%s335 + $0x61] sm:$0xff] %v1599
        %1608 = vst [vmem:[%s335 + $0x71] sm:$0xff] %v1600
        %v1609 = vld [vmem:[%s4] sm:$0x1]
        %v1611 = vlaneseq
        %v1612 = vshrl.u32 %v1611, 7
        %v1613 = vsub.s32 0, %v1612
        %v1614 = vrot.slane %v1609, %v1613
        %v1616 = vld [vmem:[#allocation2] sm:$0xff]
        %v1617 = vld [vmem:[#allocation2 + $0x10] sm:$0xff]
        %v1618 = vld [vmem:[#allocation2 + $0x20] sm:$0xff]
        %v1619 = vld [vmem:[#allocation2 + $0x30] sm:$0xff]
        %v1620 = vld [vmem:[#allocation2 + $0x40] sm:$0xff]
        %v1621 = vld [vmem:[#allocation2 + $0x50] sm:$0xff]
        %v1622 = vld [vmem:[#allocation2 + $0x60] sm:$0xff]
        %v1623 = vld [vmem:[#allocation2 + $0x70] sm:$0xff]
        %v1624 = vld [vmem:[#allocation6] sm:$0xff]
        %v1625 = vld [vmem:[#allocation6 + $0x8] sm:$0xff]
        %v1626 = vld [vmem:[#allocation6 + $0x10] sm:$0xff]
        %v1627 = vld [vmem:[#allocation6 + $0x18] sm:$0xff]
        %v1628 = vld [vmem:[#allocation6 + $0x20] sm:$0xff]
        %v1629 = vld [vmem:[#allocation6 + $0x28] sm:$0xff]
        %v1630 = vld [vmem:[#allocation6 + $0x30] sm:$0xff]
        %v1631 = vld [vmem:[#allocation6 + $0x38] sm:$0xff]
        %v1632 = vld [vmem:[#allocation6 + $0x40] sm:$0xff]
        %v1633 = vld [vmem:[#allocation6 + $0x48] sm:$0xff]
        %v1634 = vld [vmem:[#allocation6 + $0x50] sm:$0xff]
        %v1635 = vld [vmem:[#allocation6 + $0x58] sm:$0xff]
        %v1636 = vld [vmem:[#allocation6 + $0x60] sm:$0xff]
        %v1637 = vld [vmem:[#allocation6 + $0x68] sm:$0xff]
        %v1638 = vld [vmem:[#allocation6 + $0x70] sm:$0xff]
        %v1639 = vld [vmem:[#allocation6 + $0x78] sm:$0xff]
        %1640 = vmatprep.subr.mxu0 0.0
        %1641 = vmatpush1.msra.mxu0 %v1624
        %1642 = vmatprep.subr.mxu0 0.0
        %1643 = vmatpush1.msra.mxu0 %v1625
        %1644 = vmatprep.subr.mxu0 0.0
        %1645 = vmatpush1.msra.mxu0 %v1626
        %1646 = vmatprep.subr.mxu0 0.0
        %1647 = vmatpush1.msra.mxu0 %v1627
        %1648 = vmatprep.subr.mxu0 0.0
        %1649 = vmatpush1.msra.mxu0 %v1628
        %1650 = vmatprep.subr.mxu0 0.0
        %1651 = vmatpush1.msra.mxu0 %v1629
        %1652 = vmatprep.subr.mxu0 0.0
        %1653 = vmatpush1.msra.mxu0 %v1630
        %1654 = vmatprep.subr.mxu0 0.0
        %1655 = vmatpush1.msra.mxu0 %v1631
        %1656 = vmatprep.subr.mxu0 0.0
        %1657 = vmatpush1.msra.mxu0 %v1632
        %1658 = vmatprep.subr.mxu0 0.0
        %1659 = vmatpush1.msra.mxu0 %v1633
        %1660 = vmatprep.subr.mxu0 0.0
        %1661 = vmatpush1.msra.mxu0 %v1634
        %1662 = vmatprep.subr.mxu0 0.0
        %1663 = vmatpush1.msra.mxu0 %v1635
        %1664 = vmatprep.subr.mxu0 0.0
        %1665 = vmatpush1.msra.mxu0 %v1636
        %1666 = vmatprep.subr.mxu0 0.0
        %1667 = vmatpush1.msra.mxu0 %v1637
        %1668 = vmatprep.subr.mxu0 0.0
        %1669 = vmatpush1.msra.mxu0 %v1638
        %1670 = vmatprep.subr.mxu0 0.0
        %1671 = vmatpush1.msra.mxu0 %v1639
        %1672 = vmatprep.subr.mxu0 0.0
        %1673 = vmatpush1.msra.mxu0 0.0
        %1674 = vmatprep.subr.mxu0 0.0
        %1675 = vmatpush1.msra.mxu0 0.0
        %1676 = vmatprep.subr.mxu0 0.0
        %1677 = vmatpush1.msra.mxu0 0.0
        %1678 = vmatprep.subr.mxu0 0.0
        %1679 = vmatpush1.msra.mxu0 0.0
        %1680 = vmatprep.subr.mxu0 0.0
        %1681 = vmatpush1.msra.mxu0 0.0
        %1682 = vmatprep.subr.mxu0 0.0
        %1683 = vmatpush1.msra.mxu0 0.0
        %1684 = vmatprep.subr.mxu0 0.0
        %1685 = vmatpush1.msra.mxu0 0.0
        %1686 = vmatprep.subr.mxu0 0.0
        %1687 = vmatpush1.msra.mxu0 0.0
        %1688 = vmatprep.subr.mxu0 0.0
        %1689 = vmatpush1.msra.mxu0 0.0
        %1690 = vmatprep.subr.mxu0 0.0
        %1691 = vmatpush1.msra.mxu0 0.0
        %1692 = vmatprep.subr.mxu0 0.0
        %1693 = vmatpush1.msra.mxu0 0.0
        %1694 = vmatprep.subr.mxu0 0.0
        %1695 = vmatpush1.msra.mxu0 0.0
        %1696 = vmatprep.subr.mxu0 0.0
        %1697 = vmatpush1.msra.mxu0 0.0
        %1698 = vmatprep.subr.mxu0 0.0
        %1699 = vmatpush1.msra.mxu0 0.0
        %1700 = vmatprep.subr.mxu0 0.0
        %1701 = vmatpush1.msra.mxu0 0.0
        %1702 = vmatprep.subr.mxu0 0.0
        %1703 = vmatpush1.msra.mxu0 0.0
        %1704 = vmatprep.mubr.f32.mxu0 0.0
        %1705 = vmatmul.mubr.f32.gmra.mrb[0].mxu0 %v1616
        %v1706 = vpop.f32.mrb[0].mxu0
        %v1707 = vadd.f32 0.0, %v1706
        %v1708 = vpop.f32.mrb[0].mxu0
        %1709 = vmatprep.mubr.f32.mxu0 0.0
        %1710 = vmatmul.mubr.f32.gmra.mrb[0].mxu0 %v1617
        %v1711 = vpop.f32.mrb[0].mxu0
        %v1712 = vadd.f32 0.0, %v1711
        %v1713 = vpop.f32.mrb[0].mxu0
        %1714 = vmatprep.mubr.f32.mxu0 0.0
        %1715 = vmatmul.mubr.f32.gmra.mrb[0].mxu0 %v1618
        %v1716 = vpop.f32.mrb[0].mxu0
        %v1717 = vadd.f32 0.0, %v1716
        %v1718 = vpop.f32.mrb[0].mxu0
        %1719 = vmatprep.mubr.f32.mxu0 0.0
        %1720 = vmatmul.mubr.f32.gmra.mrb[0].mxu0 %v1619
        %v1721 = vpop.f32.mrb[0].mxu0
        %v1722 = vadd.f32 0.0, %v1721
        %v1723 = vpop.f32.mrb[0].mxu0
        %1724 = vmatprep.mubr.f32.mxu0 0.0
        %1725 = vmatmul.mubr.f32.gmra.mrb[0].mxu0 %v1620
        %v1726 = vpop.f32.mrb[0].mxu0
        %v1727 = vadd.f32 0.0, %v1726
        %v1728 = vpop.f32.mrb[0].mxu0
        %1729 = vmatprep.mubr.f32.mxu0 0.0
        %1730 = vmatmul.mubr.f32.gmra.mrb[0].mxu0 %v1621
        %v1731 = vpop.f32.mrb[0].mxu0
        %v1732 = vadd.f32 0.0, %v1731
        %v1733 = vpop.f32.mrb[0].mxu0
        %1734 = vmatprep.mubr.f32.mxu0 0.0
        %1735 = vmatmul.mubr.f32.gmra.mrb[0].mxu0 %v1622
        %v1736 = vpop.f32.mrb[0].mxu0
        %v1737 = vadd.f32 0.0, %v1736
        %v1738 = vpop.f32.mrb[0].mxu0
        %1739 = vmatprep.mubr.f32.mxu0 0.0
        %1740 = vmatmul.mubr.f32.gmra.mrb[0].mxu0 %v1623
        %v1741 = vpop.f32.mrb[0].mxu0
        %v1742 = vadd.f32 0.0, %v1741
        %v1743 = vpop.f32.mrb[0].mxu0
        %1744 = vdwg.mxu0
        %v1745 = vadd.f32 %v1614, %v1707
        %v1746 = vadd.f32 %v1614, %v1712
        %v1747 = vadd.f32 %v1614, %v1717
        %v1748 = vadd.f32 %v1614, %v1722
        %v1749 = vadd.f32 %v1614, %v1727
        %v1750 = vadd.f32 %v1614, %v1732
        %v1751 = vadd.f32 %v1614, %v1737
        %v1752 = vadd.f32 %v1614, %v1742
        %v1753 = vld [vmem:[#allocation2 + $0x1] sm:$0xff]
        %v1754 = vld [vmem:[#allocation2 + $0x11] sm:$0xff]
        %v1755 = vld [vmem:[#allocation2 + $0x21] sm:$0xff]
        %v1756 = vld [vmem:[#allocation2 + $0x31] sm:$0xff]
        %v1757 = vld [vmem:[#allocation2 + $0x41] sm:$0xff]
        %v1758 = vld [vmem:[#allocation2 + $0x51] sm:$0xff]
        %v1759 = vld [vmem:[#allocation2 + $0x61] sm:$0xff]
        %v1760 = vld [vmem:[#allocation2 + $0x71] sm:$0xff]
        %s1761 = scalar_lea.vmem [#allocation6], 128
        %v1762 = vld [vmem:[%s1761] sm:$0xff]
        %v1763 = vld [vmem:[%s1761 + $0x8] sm:$0xff]
        %v1764 = vld [vmem:[%s1761 + $0x10] sm:$0xff]
        %v1765 = vld [vmem:[%s1761 + $0x18] sm:$0xff]
        %v1766 = vld [vmem:[%s1761 + $0x20] sm:$0xff]
        %v1767 = vld [vmem:[%s1761 + $0x28] sm:$0xff]
        %v1768 = vld [vmem:[%s1761 + $0x30] sm:$0xff]
        %v1769 = vld [vmem:[%s1761 + $0x38] sm:$0xff]
        %v1770 = vld [vmem:[%s1761 + $0x40] sm:$0xff]
        %v1771 = vld [vmem:[%s1761 + $0x48] sm:$0xff]
        %v1772 = vld [vmem:[%s1761 + $0x50] sm:$0xff]
        %v1773 = vld [vmem:[%s1761 + $0x58] sm:$0xff]
        %v1774 = vld [vmem:[%s1761 + $0x60] sm:$0xff]
        %v1775 = vld [vmem:[%s1761 + $0x68] sm:$0xff]
        %v1776 = vld [vmem:[%s1761 + $0x70] sm:$0xff]
        %v1777 = vld [vmem:[%s1761 + $0x78] sm:$0xff]
        %1778 = vmatprep.subr.mxu0 0.0
        %1779 = vmatpush1.msra.mxu0 %v1762
        %1780 = vmatprep.subr.mxu0 0.0
        %1781 = vmatpush1.msra.mxu0 %v1763
        %1782 = vmatprep.subr.mxu0 0.0
        %1783 = vmatpush1.msra.mxu0 %v1764
        %1784 = vmatprep.subr.mxu0 0.0
        %1785 = vmatpush1.msra.mxu0 %v1765
        %1786 = vmatprep.subr.mxu0 0.0
        %1787 = vmatpush1.msra.mxu0 %v1766
        %1788 = vmatprep.subr.mxu0 0.0
        %1789 = vmatpush1.msra.mxu0 %v1767
        %1790 = vmatprep.subr.mxu0 0.0
        %1791 = vmatpush1.msra.mxu0 %v1768
        %1792 = vmatprep.subr.mxu0 0.0
        %1793 = vmatpush1.msra.mxu0 %v1769
        %1794 = vmatprep.subr.mxu0 0.0
        %1795 = vmatpush1.msra.mxu0 %v1770
        %1796 = vmatprep.subr.mxu0 0.0
        %1797 = vmatpush1.msra.mxu0 %v1771
        %1798 = vmatprep.subr.mxu0 0.0
        %1799 = vmatpush1.msra.mxu0 %v1772
        %1800 = vmatprep.subr.mxu0 0.0
        %1801 = vmatpush1.msra.mxu0 %v1773
        %1802 = vmatprep.subr.mxu0 0.0
        %1803 = vmatpush1.msra.mxu0 %v1774
        %1804 = vmatprep.subr.mxu0 0.0
        %1805 = vmatpush1.msra.mxu0 %v1775
        %1806 = vmatprep.subr.mxu0 0.0
        %1807 = vmatpush1.msra.mxu0 %v1776
        %1808 = vmatprep.subr.mxu0 0.0
        %1809 = vmatpush1.msra.mxu0 %v1777
        %1810 = vmatprep.subr.mxu0 0.0
        %1811 = vmatpush1.msra.mxu0 0.0
        %1812 = vmatprep.subr.mxu0 0.0
        %1813 = vmatpush1.msra.mxu0 0.0
        %1814 = vmatprep.subr.mxu0 0.0
        %1815 = vmatpush1.msra.mxu0 0.0
        %1816 = vmatprep.subr.mxu0 0.0
        %1817 = vmatpush1.msra.mxu0 0.0
        %1818 = vmatprep.subr.mxu0 0.0
        %1819 = vmatpush1.msra.mxu0 0.0
        %1820 = vmatprep.subr.mxu0 0.0
        %1821 = vmatpush1.msra.mxu0 0.0
        %1822 = vmatprep.subr.mxu0 0.0
        %1823 = vmatpush1.msra.mxu0 0.0
        %1824 = vmatprep.subr.mxu0 0.0
        %1825 = vmatpush1.msra.mxu0 0.0
        %1826 = vmatprep.subr.mxu0 0.0
        %1827 = vmatpush1.msra.mxu0 0.0
        %1828 = vmatprep.subr.mxu0 0.0
        %1829 = vmatpush1.msra.mxu0 0.0
        %1830 = vmatprep.subr.mxu0 0.0
        %1831 = vmatpush1.msra.mxu0 0.0
        %1832 = vmatprep.subr.mxu0 0.0
        %1833 = vmatpush1.msra.mxu0 0.0
        %1834 = vmatprep.subr.mxu0 0.0
        %1835 = vmatpush1.msra.mxu0 0.0
        %1836 = vmatprep.subr.mxu0 0.0
        %1837 = vmatpush1.msra.mxu0 0.0
        %1838 = vmatprep.subr.mxu0 0.0
        %1839 = vmatpush1.msra.mxu0 0.0
        %1840 = vmatprep.subr.mxu0 0.0
        %1841 = vmatpush1.msra.mxu0 0.0
        %1842 = vmatprep.mubr.f32.mxu0 0.0
        %1843 = vmatmul.mubr.f32.gmra.mrb[0].mxu0 %v1753
        %v1844 = vpop.f32.mrb[0].mxu0
        %v1845 = vadd.f32 0.0, %v1844
        %v1846 = vpop.f32.mrb[0].mxu0
        %1847 = vmatprep.mubr.f32.mxu0 0.0
        %1848 = vmatmul.mubr.f32.gmra.mrb[0].mxu0 %v1754
        %v1849 = vpop.f32.mrb[0].mxu0
        %v1850 = vadd.f32 0.0, %v1849
        %v1851 = vpop.f32.mrb[0].mxu0
        %1852 = vmatprep.mubr.f32.mxu0 0.0
        %1853 = vmatmul.mubr.f32.gmra.mrb[0].mxu0 %v1755
        %v1854 = vpop.f32.mrb[0].mxu0
        %v1855 = vadd.f32 0.0, %v1854
        %v1856 = vpop.f32.mrb[0].mxu0
        %1857 = vmatprep.mubr.f32.mxu0 0.0
        %1858 = vmatmul.mubr.f32.gmra.mrb[0].mxu0 %v1756
        %v1859 = vpop.f32.mrb[0].mxu0
        %v1860 = vadd.f32 0.0, %v1859
        %v1861 = vpop.f32.mrb[0].mxu0
        %1862 = vmatprep.mubr.f32.mxu0 0.0
        %1863 = vmatmul.mubr.f32.gmra.mrb[0].mxu0 %v1757
        %v1864 = vpop.f32.mrb[0].mxu0
        %v1865 = vadd.f32 0.0, %v1864
        %v1866 = vpop.f32.mrb[0].mxu0
        %1867 = vmatprep.mubr.f32.mxu0 0.0
        %1868 = vmatmul.mubr.f32.gmra.mrb[0].mxu0 %v1758
        %v1869 = vpop.f32.mrb[0].mxu0
        %v1870 = vadd.f32 0.0, %v1869
        %v1871 = vpop.f32.mrb[0].mxu0
        %1872 = vmatprep.mubr.f32.mxu0 0.0
        %1873 = vmatmul.mubr.f32.gmra.mrb[0].mxu0 %v1759
        %v1874 = vpop.f32.mrb[0].mxu0
        %v1875 = vadd.f32 0.0, %v1874
        %v1876 = vpop.f32.mrb[0].mxu0
        %1877 = vmatprep.mubr.f32.mxu0 0.0
        %1878 = vmatmul.mubr.f32.gmra.mrb[0].mxu0 %v1760
        %v1879 = vpop.f32.mrb[0].mxu0
        %v1880 = vadd.f32 0.0, %v1879
        %v1881 = vpop.f32.mrb[0].mxu0
        %1882 = vdwg.mxu0
        %v1883 = vadd.f32 %v1745, %v1845
        %v1884 = vadd.f32 %v1746, %v1850
        %v1885 = vadd.f32 %v1747, %v1855
        %v1886 = vadd.f32 %v1748, %v1860
        %v1887 = vadd.f32 %v1749, %v1865
        %v1888 = vadd.f32 %v1750, %v1870
        %v1889 = vadd.f32 %v1751, %v1875
        %v1890 = vadd.f32 %v1752, %v1880
        %v1891 = vld [vmem:[#allocation2 + $0x2] sm:$0xff]
        %v1892 = vld [vmem:[#allocation2 + $0x12] sm:$0xff]
        %v1893 = vld [vmem:[#allocation2 + $0x22] sm:$0xff]
        %v1894 = vld [vmem:[#allocation2 + $0x32] sm:$0xff]
        %v1895 = vld [vmem:[#allocation2 + $0x42] sm:$0xff]
        %v1896 = vld [vmem:[#allocation2 + $0x52] sm:$0xff]
        %v1897 = vld [vmem:[#allocation2 + $0x62] sm:$0xff]
        %v1898 = vld [vmem:[#allocation2 + $0x72] sm:$0xff]
        %s1899 = scalar_lea.vmem [#allocation6], 256
        %v1900 = vld [vmem:[%s1899] sm:$0xff]
        %v1901 = vld [vmem:[%s1899 + $0x8] sm:$0xff]
        %v1902 = vld [vmem:[%s1899 + $0x10] sm:$0xff]
        %v1903 = vld [vmem:[%s1899 + $0x18] sm:$0xff]
        %v1904 = vld [vmem:[%s1899 + $0x20] sm:$0xff]
        %v1905 = vld [vmem:[%s1899 + $0x28] sm:$0xff]
        %v1906 = vld [vmem:[%s1899 + $0x30] sm:$0xff]
        %v1907 = vld [vmem:[%s1899 + $0x38] sm:$0xff]
        %v1908 = vld [vmem:[%s1899 + $0x40] sm:$0xff]
        %v1909 = vld [vmem:[%s1899 + $0x48] sm:$0xff]
        %v1910 = vld [vmem:[%s1899 + $0x50] sm:$0xff]
        %v1911 = vld [vmem:[%s1899 + $0x58] sm:$0xff]
        %v1912 = vld [vmem:[%s1899 + $0x60] sm:$0xff]
        %v1913 = vld [vmem:[%s1899 + $0x68] sm:$0xff]
        %v1914 = vld [vmem:[%s1899 + $0x70] sm:$0xff]
        %v1915 = vld [vmem:[%s1899 + $0x78] sm:$0xff]
        %1916 = vmatprep.subr.mxu0 0.0
        %1917 = vmatpush1.msra.mxu0 %v1900
        %1918 = vmatprep.subr.mxu0 0.0
        %1919 = vmatpush1.msra.mxu0 %v1901
        %1920 = vmatprep.subr.mxu0 0.0
        %1921 = vmatpush1.msra.mxu0 %v1902
        %1922 = vmatprep.subr.mxu0 0.0
        %1923 = vmatpush1.msra.mxu0 %v1903
        %1924 = vmatprep.subr.mxu0 0.0
        %1925 = vmatpush1.msra.mxu0 %v1904
        %1926 = vmatprep.subr.mxu0 0.0
        %1927 = vmatpush1.msra.mxu0 %v1905
        %1928 = vmatprep.subr.mxu0 0.0
        %1929 = vmatpush1.msra.mxu0 %v1906
        %1930 = vmatprep.subr.mxu0 0.0
        %1931 = vmatpush1.msra.mxu0 %v1907
        %1932 = vmatprep.subr.mxu0 0.0
        %1933 = vmatpush1.msra.mxu0 %v1908
        %1934 = vmatprep.subr.mxu0 0.0
        %1935 = vmatpush1.msra.mxu0 %v1909
        %1936 = vmatprep.subr.mxu0 0.0
        %1937 = vmatpush1.msra.mxu0 %v1910
        %1938 = vmatprep.subr.mxu0 0.0
        %1939 = vmatpush1.msra.mxu0 %v1911
        %1940 = vmatprep.subr.mxu0 0.0
        %1941 = vmatpush1.msra.mxu0 %v1912
        %1942 = vmatprep.subr.mxu0 0.0
        %1943 = vmatpush1.msra.mxu0 %v1913
        %1944 = vmatprep.subr.mxu0 0.0
        %1945 = vmatpush1.msra.mxu0 %v1914
        %1946 = vmatprep.subr.mxu0 0.0
        %1947 = vmatpush1.msra.mxu0 %v1915
        %1948 = vmatprep.subr.mxu0 0.0
        %1949 = vmatpush1.msra.mxu0 0.0
        %1950 = vmatprep.subr.mxu0 0.0
        %1951 = vmatpush1.msra.mxu0 0.0
        %1952 = vmatprep.subr.mxu0 0.0
        %1953 = vmatpush1.msra.mxu0 0.0
        %1954 = vmatprep.subr.mxu0 0.0
        %1955 = vmatpush1.msra.mxu0 0.0
        %1956 = vmatprep.subr.mxu0 0.0
        %1957 = vmatpush1.msra.mxu0 0.0
        %1958 = vmatprep.subr.mxu0 0.0
        %1959 = vmatpush1.msra.mxu0 0.0
        %1960 = vmatprep.subr.mxu0 0.0
        %1961 = vmatpush1.msra.mxu0 0.0
        %1962 = vmatprep.subr.mxu0 0.0
        %1963 = vmatpush1.msra.mxu0 0.0
        %1964 = vmatprep.subr.mxu0 0.0
        %1965 = vmatpush1.msra.mxu0 0.0
        %1966 = vmatprep.subr.mxu0 0.0
        %1967 = vmatpush1.msra.mxu0 0.0
        %1968 = vmatprep.subr.mxu0 0.0
        %1969 = vmatpush1.msra.mxu0 0.0
        %1970 = vmatprep.subr.mxu0 0.0
        %1971 = vmatpush1.msra.mxu0 0.0
        %1972 = vmatprep.subr.mxu0 0.0
        %1973 = vmatpush1.msra.mxu0 0.0
        %1974 = vmatprep.subr.mxu0 0.0
        %1975 = vmatpush1.msra.mxu0 0.0
        %1976 = vmatprep.subr.mxu0 0.0
        %1977 = vmatpush1.msra.mxu0 0.0
        %1978 = vmatprep.subr.mxu0 0.0
        %1979 = vmatpush1.msra.mxu0 0.0
        %1980 = vmatprep.mubr.f32.mxu0 0.0
        %1981 = vmatmul.mubr.f32.gmra.mrb[0].mxu0 %v1891
        %v1982 = vpop.f32.mrb[0].mxu0
        %v1983 = vadd.f32 0.0, %v1982
        %v1984 = vpop.f32.mrb[0].mxu0
        %1985 = vmatprep.mubr.f32.mxu0 0.0
        %1986 = vmatmul.mubr.f32.gmra.mrb[0].mxu0 %v1892
        %v1987 = vpop.f32.mrb[0].mxu0
        %v1988 = vadd.f32 0.0, %v1987
        %v1989 = vpop.f32.mrb[0].mxu0
        %1990 = vmatprep.mubr.f32.mxu0 0.0
        %1991 = vmatmul.mubr.f32.gmra.mrb[0].mxu0 %v1893
        %v1992 = vpop.f32.mrb[0].mxu0
        %v1993 = vadd.f32 0.0, %v1992
        %v1994 = vpop.f32.mrb[0].mxu0
        %1995 = vmatprep.mubr.f32.mxu0 0.0
        %1996 = vmatmul.mubr.f32.gmra.mrb[0].mxu0 %v1894
        %v1997 = vpop.f32.mrb[0].mxu0
        %v1998 = vadd.f32 0.0, %v1997
        %v1999 = vpop.f32.mrb[0].mxu0
        %2000 = vmatprep.mubr.f32.mxu0 0.0
        %2001 = vmatmul.mubr.f32.gmra.mrb[0].mxu0 %v1895
        %v2002 = vpop.f32.mrb[0].mxu0
        %v2003 = vadd.f32 0.0, %v2002
        %v2004 = vpop.f32.mrb[0].mxu0
        %2005 = vmatprep.mubr.f32.mxu0 0.0
        %2006 = vmatmul.mubr.f32.gmra.mrb[0].mxu0 %v1896
        %v2007 = vpop.f32.mrb[0].mxu0
        %v2008 = vadd.f32 0.0, %v2007
        %v2009 = vpop.f32.mrb[0].mxu0
        %2010 = vmatprep.mubr.f32.mxu0 0.0
        %2011 = vmatmul.mubr.f32.gmra.mrb[0].mxu0 %v1897
        %v2012 = vpop.f32.mrb[0].mxu0
        %v2013 = vadd.f32 0.0, %v2012
        %v2014 = vpop.f32.mrb[0].mxu0
        %2015 = vmatprep.mubr.f32.mxu0 0.0
        %2016 = vmatmul.mubr.f32.gmra.mrb[0].mxu0 %v1898
        %v2017 = vpop.f32.mrb[0].mxu0
        %v2018 = vadd.f32 0.0, %v2017
        %v2019 = vpop.f32.mrb[0].mxu0
        %2020 = vdwg.mxu0
        %v2021 = vadd.f32 %v1883, %v1983
        %v2022 = vadd.f32 %v1884, %v1988
        %v2023 = vadd.f32 %v1885, %v1993
        %v2024 = vadd.f32 %v1886, %v1998
        %v2025 = vadd.f32 %v1887, %v2003
        %v2026 = vadd.f32 %v1888, %v2008
        %v2027 = vadd.f32 %v1889, %v2013
        %v2028 = vadd.f32 %v1890, %v2018
        %v2029 = vld [vmem:[%s335] sm:$0xff]
        %v2030 = vld [vmem:[%s335 + $0x10] sm:$0xff]
        %v2031 = vld [vmem:[%s335 + $0x20] sm:$0xff]
        %v2032 = vld [vmem:[%s335 + $0x30] sm:$0xff]
        %v2033 = vld [vmem:[%s335 + $0x40] sm:$0xff]
        %v2034 = vld [vmem:[%s335 + $0x50] sm:$0xff]
        %v2035 = vld [vmem:[%s335 + $0x60] sm:$0xff]
        %v2036 = vld [vmem:[%s335 + $0x70] sm:$0xff]
        %s2037 = scalar_lea.vmem [#allocation6], 384
        %v2038 = vld [vmem:[%s2037] sm:$0xff]
        %v2039 = vld [vmem:[%s2037 + $0x8] sm:$0xff]
        %v2040 = vld [vmem:[%s2037 + $0x10] sm:$0xff]
        %v2041 = vld [vmem:[%s2037 + $0x18] sm:$0xff]
        %v2042 = vld [vmem:[%s2037 + $0x20] sm:$0xff]
        %v2043 = vld [vmem:[%s2037 + $0x28] sm:$0xff]
        %v2044 = vld [vmem:[%s2037 + $0x30] sm:$0xff]
        %v2045 = vld [vmem:[%s2037 + $0x38] sm:$0xff]
        %v2046 = vld [vmem:[%s2037 + $0x40] sm:$0xff]
        %v2047 = vld [vmem:[%s2037 + $0x48] sm:$0xff]
        %v2048 = vld [vmem:[%s2037 + $0x50] sm:$0xff]
        %v2049 = vld [vmem:[%s2037 + $0x58] sm:$0xff]
        %v2050 = vld [vmem:[%s2037 + $0x60] sm:$0xff]
        %v2051 = vld [vmem:[%s2037 + $0x68] sm:$0xff]
        %v2052 = vld [vmem:[%s2037 + $0x70] sm:$0xff]
        %v2053 = vld [vmem:[%s2037 + $0x78] sm:$0xff]
        %2054 = vmatprep.subr.mxu0 0.0
        %2055 = vmatpush1.msra.mxu0 %v2038
        %2056 = vmatprep.subr.mxu0 0.0
        %2057 = vmatpush1.msra.mxu0 %v2039
        %2058 = vmatprep.subr.mxu0 0.0
        %2059 = vmatpush1.msra.mxu0 %v2040
        %2060 = vmatprep.subr.mxu0 0.0
        %2061 = vmatpush1.msra.mxu0 %v2041
        %2062 = vmatprep.subr.mxu0 0.0
        %2063 = vmatpush1.msra.mxu0 %v2042
        %2064 = vmatprep.subr.mxu0 0.0
        %2065 = vmatpush1.msra.mxu0 %v2043
        %2066 = vmatprep.subr.mxu0 0.0
        %2067 = vmatpush1.msra.mxu0 %v2044
        %2068 = vmatprep.subr.mxu0 0.0
        %2069 = vmatpush1.msra.mxu0 %v2045
        %2070 = vmatprep.subr.mxu0 0.0
        %2071 = vmatpush1.msra.mxu0 %v2046
        %2072 = vmatprep.subr.mxu0 0.0
        %2073 = vmatpush1.msra.mxu0 %v2047
        %2074 = vmatprep.subr.mxu0 0.0
        %2075 = vmatpush1.msra.mxu0 %v2048
        %2076 = vmatprep.subr.mxu0 0.0
        %2077 = vmatpush1.msra.mxu0 %v2049
        %2078 = vmatprep.subr.mxu0 0.0
        %2079 = vmatpush1.msra.mxu0 %v2050
        %2080 = vmatprep.subr.mxu0 0.0
        %2081 = vmatpush1.msra.mxu0 %v2051
        %2082 = vmatprep.subr.mxu0 0.0
        %2083 = vmatpush1.msra.mxu0 %v2052
        %2084 = vmatprep.subr.mxu0 0.0
        %2085 = vmatpush1.msra.mxu0 %v2053
        %2086 = vmatprep.subr.mxu0 0.0
        %2087 = vmatpush1.msra.mxu0 0.0
        %2088 = vmatprep.subr.mxu0 0.0
        %2089 = vmatpush1.msra.mxu0 0.0
        %2090 = vmatprep.subr.mxu0 0.0
        %2091 = vmatpush1.msra.mxu0 0.0
        %2092 = vmatprep.subr.mxu0 0.0
        %2093 = vmatpush1.msra.mxu0 0.0
        %2094 = vmatprep.subr.mxu0 0.0
        %2095 = vmatpush1.msra.mxu0 0.0
        %2096 = vmatprep.subr.mxu0 0.0
        %2097 = vmatpush1.msra.mxu0 0.0
        %2098 = vmatprep.subr.mxu0 0.0
        %2099 = vmatpush1.msra.mxu0 0.0
        %2100 = vmatprep.subr.mxu0 0.0
        %2101 = vmatpush1.msra.mxu0 0.0
        %2102 = vmatprep.subr.mxu0 0.0
        %2103 = vmatpush1.msra.mxu0 0.0
        %2104 = vmatprep.subr.mxu0 0.0
        %2105 = vmatpush1.msra.mxu0 0.0
        %2106 = vmatprep.subr.mxu0 0.0
        %2107 = vmatpush1.msra.mxu0 0.0
        %2108 = vmatprep.subr.mxu0 0.0
        %2109 = vmatpush1.msra.mxu0 0.0
        %2110 = vmatprep.subr.mxu0 0.0
        %2111 = vmatpush1.msra.mxu0 0.0
        %2112 = vmatprep.subr.mxu0 0.0
        %2113 = vmatpush1.msra.mxu0 0.0
        %2114 = vmatprep.subr.mxu0 0.0
        %2115 = vmatpush1.msra.mxu0 0.0
        %2116 = vmatprep.subr.mxu0 0.0
        %2117 = vmatpush1.msra.mxu0 0.0
        %2118 = vmatprep.mubr.f32.mxu0 0.0
        %2119 = vmatmul.mubr.f32.gmra.mrb[0].mxu0 %v2029
        %v2120 = vpop.f32.mrb[0].mxu0
        %v2121 = vadd.f32 0.0, %v2120
        %v2122 = vpop.f32.mrb[0].mxu0
        %2123 = vmatprep.mubr.f32.mxu0 0.0
        %2124 = vmatmul.mubr.f32.gmra.mrb[0].mxu0 %v2030
        %v2125 = vpop.f32.mrb[0].mxu0
        %v2126 = vadd.f32 0.0, %v2125
        %v2127 = vpop.f32.mrb[0].mxu0
        %2128 = vmatprep.mubr.f32.mxu0 0.0
        %2129 = vmatmul.mubr.f32.gmra.mrb[0].mxu0 %v2031
        %v2130 = vpop.f32.mrb[0].mxu0
        %v2131 = vadd.f32 0.0, %v2130
        %v2132 = vpop.f32.mrb[0].mxu0
        %2133 = vmatprep.mubr.f32.mxu0 0.0
        %2134 = vmatmul.mubr.f32.gmra.mrb[0].mxu0 %v2032
        %v2135 = vpop.f32.mrb[0].mxu0
        %v2136 = vadd.f32 0.0, %v2135
        %v2137 = vpop.f32.mrb[0].mxu0
        %2138 = vmatprep.mubr.f32.mxu0 0.0
        %2139 = vmatmul.mubr.f32.gmra.mrb[0].mxu0 %v2033
        %v2140 = vpop.f32.mrb[0].mxu0
        %v2141 = vadd.f32 0.0, %v2140
        %v2142 = vpop.f32.mrb[0].mxu0
        %2143 = vmatprep.mubr.f32.mxu0 0.0
        %2144 = vmatmul.mubr.f32.gmra.mrb[0].mxu0 %v2034
        %v2145 = vpop.f32.mrb[0].mxu0
        %v2146 = vadd.f32 0.0, %v2145
        %v2147 = vpop.f32.mrb[0].mxu0
        %2148 = vmatprep.mubr.f32.mxu0 0.0
        %2149 = vmatmul.mubr.f32.gmra.mrb[0].mxu0 %v2035
        %v2150 = vpop.f32.mrb[0].mxu0
        %v2151 = vadd.f32 0.0, %v2150
        %v2152 = vpop.f32.mrb[0].mxu0
        %2153 = vmatprep.mubr.f32.mxu0 0.0
        %2154 = vmatmul.mubr.f32.gmra.mrb[0].mxu0 %v2036
        %v2155 = vpop.f32.mrb[0].mxu0
        %v2156 = vadd.f32 0.0, %v2155
        %v2157 = vpop.f32.mrb[0].mxu0
        %2158 = vdwg.mxu0
        %v2159 = vadd.f32 %v2021, %v2121
        %v2160 = vadd.f32 %v2022, %v2126
        %v2161 = vadd.f32 %v2023, %v2131
        %v2162 = vadd.f32 %v2024, %v2136
        %v2163 = vadd.f32 %v2025, %v2141
        %v2164 = vadd.f32 %v2026, %v2146
        %v2165 = vadd.f32 %v2027, %v2151
        %v2166 = vadd.f32 %v2028, %v2156
        %v2167 = vld [vmem:[%s335 + $0x1] sm:$0xff]
        %v2168 = vld [vmem:[%s335 + $0x11] sm:$0xff]
        %v2169 = vld [vmem:[%s335 + $0x21] sm:$0xff]
        %v2170 = vld [vmem:[%s335 + $0x31] sm:$0xff]
        %v2171 = vld [vmem:[%s335 + $0x41] sm:$0xff]
        %v2172 = vld [vmem:[%s335 + $0x51] sm:$0xff]
        %v2173 = vld [vmem:[%s335 + $0x61] sm:$0xff]
        %v2174 = vld [vmem:[%s335 + $0x71] sm:$0xff]
        %s2175 = scalar_lea.vmem [#allocation6], 512
        %v2176 = vld [vmem:[%s2175] sm:$0xff]
        %v2177 = vld [vmem:[%s2175 + $0x8] sm:$0xff]
        %v2178 = vld [vmem:[%s2175 + $0x10] sm:$0xff]
        %v2179 = vld [vmem:[%s2175 + $0x18] sm:$0xff]
        %v2180 = vld [vmem:[%s2175 + $0x20] sm:$0xff]
        %v2181 = vld [vmem:[%s2175 + $0x28] sm:$0xff]
        %v2182 = vld [vmem:[%s2175 + $0x30] sm:$0xff]
        %v2183 = vld [vmem:[%s2175 + $0x38] sm:$0xff]
        %v2184 = vld [vmem:[%s2175 + $0x40] sm:$0xff]
        %v2185 = vld [vmem:[%s2175 + $0x48] sm:$0xff]
        %v2186 = vld [vmem:[%s2175 + $0x50] sm:$0xff]
        %v2187 = vld [vmem:[%s2175 + $0x58] sm:$0xff]
        %v2188 = vld [vmem:[%s2175 + $0x60] sm:$0xff]
        %v2189 = vld [vmem:[%s2175 + $0x68] sm:$0xff]
        %v2190 = vld [vmem:[%s2175 + $0x70] sm:$0xff]
        %v2191 = vld [vmem:[%s2175 + $0x78] sm:$0xff]
        %2192 = vmatprep.subr.mxu0 0.0
        %2193 = vmatpush1.msra.mxu0 %v2176
        %2194 = vmatprep.subr.mxu0 0.0
        %2195 = vmatpush1.msra.mxu0 %v2177
        %2196 = vmatprep.subr.mxu0 0.0
        %2197 = vmatpush1.msra.mxu0 %v2178
        %2198 = vmatprep.subr.mxu0 0.0
        %2199 = vmatpush1.msra.mxu0 %v2179
        %2200 = vmatprep.subr.mxu0 0.0
        %2201 = vmatpush1.msra.mxu0 %v2180
        %2202 = vmatprep.subr.mxu0 0.0
        %2203 = vmatpush1.msra.mxu0 %v2181
        %2204 = vmatprep.subr.mxu0 0.0
        %2205 = vmatpush1.msra.mxu0 %v2182
        %2206 = vmatprep.subr.mxu0 0.0
        %2207 = vmatpush1.msra.mxu0 %v2183
        %2208 = vmatprep.subr.mxu0 0.0
        %2209 = vmatpush1.msra.mxu0 %v2184
        %2210 = vmatprep.subr.mxu0 0.0
        %2211 = vmatpush1.msra.mxu0 %v2185
        %2212 = vmatprep.subr.mxu0 0.0
        %2213 = vmatpush1.msra.mxu0 %v2186
        %2214 = vmatprep.subr.mxu0 0.0
        %2215 = vmatpush1.msra.mxu0 %v2187
        %2216 = vmatprep.subr.mxu0 0.0
        %2217 = vmatpush1.msra.mxu0 %v2188
        %2218 = vmatprep.subr.mxu0 0.0
        %2219 = vmatpush1.msra.mxu0 %v2189
        %2220 = vmatprep.subr.mxu0 0.0
        %2221 = vmatpush1.msra.mxu0 %v2190
        %2222 = vmatprep.subr.mxu0 0.0
        %2223 = vmatpush1.msra.mxu0 %v2191
        %2224 = vmatprep.subr.mxu0 0.0
        %2225 = vmatpush1.msra.mxu0 0.0
        %2226 = vmatprep.subr.mxu0 0.0
        %2227 = vmatpush1.msra.mxu0 0.0
        %2228 = vmatprep.subr.mxu0 0.0
        %2229 = vmatpush1.msra.mxu0 0.0
        %2230 = vmatprep.subr.mxu0 0.0
        %2231 = vmatpush1.msra.mxu0 0.0
        %2232 = vmatprep.subr.mxu0 0.0
        %2233 = vmatpush1.msra.mxu0 0.0
        %2234 = vmatprep.subr.mxu0 0.0
        %2235 = vmatpush1.msra.mxu0 0.0
        %2236 = vmatprep.subr.mxu0 0.0
        %2237 = vmatpush1.msra.mxu0 0.0
        %2238 = vmatprep.subr.mxu0 0.0
        %2239 = vmatpush1.msra.mxu0 0.0
        %2240 = vmatprep.subr.mxu0 0.0
        %2241 = vmatpush1.msra.mxu0 0.0
        %2242 = vmatprep.subr.mxu0 0.0
        %2243 = vmatpush1.msra.mxu0 0.0
        %2244 = vmatprep.subr.mxu0 0.0
        %2245 = vmatpush1.msra.mxu0 0.0
        %2246 = vmatprep.subr.mxu0 0.0
        %2247 = vmatpush1.msra.mxu0 0.0
        %2248 = vmatprep.subr.mxu0 0.0
        %2249 = vmatpush1.msra.mxu0 0.0
        %2250 = vmatprep.subr.mxu0 0.0
        %2251 = vmatpush1.msra.mxu0 0.0
        %2252 = vmatprep.subr.mxu0 0.0
        %2253 = vmatpush1.msra.mxu0 0.0
        %2254 = vmatprep.subr.mxu0 0.0
        %2255 = vmatpush1.msra.mxu0 0.0
        %2256 = vmatprep.mubr.f32.mxu0 0.0
        %2257 = vmatmul.mubr.f32.gmra.mrb[0].mxu0 %v2167
        %v2258 = vpop.f32.mrb[0].mxu0
        %v2259 = vadd.f32 0.0, %v2258
        %v2260 = vpop.f32.mrb[0].mxu0
        %2261 = vmatprep.mubr.f32.mxu0 0.0
        %2262 = vmatmul.mubr.f32.gmra.mrb[0].mxu0 %v2168
        %v2263 = vpop.f32.mrb[0].mxu0
        %v2264 = vadd.f32 0.0, %v2263
        %v2265 = vpop.f32.mrb[0].mxu0
        %2266 = vmatprep.mubr.f32.mxu0 0.0
        %2267 = vmatmul.mubr.f32.gmra.mrb[0].mxu0 %v2169
        %v2268 = vpop.f32.mrb[0].mxu0
        %v2269 = vadd.f32 0.0, %v2268
        %v2270 = vpop.f32.mrb[0].mxu0
        %2271 = vmatprep.mubr.f32.mxu0 0.0
        %2272 = vmatmul.mubr.f32.gmra.mrb[0].mxu0 %v2170
        %v2273 = vpop.f32.mrb[0].mxu0
        %v2274 = vadd.f32 0.0, %v2273
        %v2275 = vpop.f32.mrb[0].mxu0
        %2276 = vmatprep.mubr.f32.mxu0 0.0
        %2277 = vmatmul.mubr.f32.gmra.mrb[0].mxu0 %v2171
        %v2278 = vpop.f32.mrb[0].mxu0
        %v2279 = vadd.f32 0.0, %v2278
        %v2280 = vpop.f32.mrb[0].mxu0
        %2281 = vmatprep.mubr.f32.mxu0 0.0
        %2282 = vmatmul.mubr.f32.gmra.mrb[0].mxu0 %v2172
        %v2283 = vpop.f32.mrb[0].mxu0
        %v2284 = vadd.f32 0.0, %v2283
        %v2285 = vpop.f32.mrb[0].mxu0
        %2286 = vmatprep.mubr.f32.mxu0 0.0
        %2287 = vmatmul.mubr.f32.gmra.mrb[0].mxu0 %v2173
        %v2288 = vpop.f32.mrb[0].mxu0
        %v2289 = vadd.f32 0.0, %v2288
        %v2290 = vpop.f32.mrb[0].mxu0
        %2291 = vmatprep.mubr.f32.mxu0 0.0
        %2292 = vmatmul.mubr.f32.gmra.mrb[0].mxu0 %v2174
        %v2293 = vpop.f32.mrb[0].mxu0
        %v2294 = vadd.f32 0.0, %v2293
        %v2295 = vpop.f32.mrb[0].mxu0
        %2296 = vdwg.mxu0
        %v2297 = vadd.f32 %v2159, %v2259
        %v2298 = vadd.f32 %v2160, %v2264
        %v2299 = vadd.f32 %v2161, %v2269
        %v2300 = vadd.f32 %v2162, %v2274
        %v2301 = vadd.f32 %v2163, %v2279
        %v2302 = vadd.f32 %v2164, %v2284
        %v2303 = vadd.f32 %v2165, %v2289
        %v2304 = vadd.f32 %v2166, %v2294
        %v2305 = vld [vmem:[%s335 + $0x2] sm:$0xff]
        %v2306 = vld [vmem:[%s335 + $0x12] sm:$0xff]
        %v2307 = vld [vmem:[%s335 + $0x22] sm:$0xff]
        %v2308 = vld [vmem:[%s335 + $0x32] sm:$0xff]
        %v2309 = vld [vmem:[%s335 + $0x42] sm:$0xff]
        %v2310 = vld [vmem:[%s335 + $0x52] sm:$0xff]
        %v2311 = vld [vmem:[%s335 + $0x62] sm:$0xff]
        %v2312 = vld [vmem:[%s335 + $0x72] sm:$0xff]
        %s2313 = scalar_lea.vmem [#allocation6], 640
        %v2314 = vld [vmem:[%s2313] sm:$0xff]
        %v2315 = vld [vmem:[%s2313 + $0x8] sm:$0xff]
        %v2316 = vld [vmem:[%s2313 + $0x10] sm:$0xff]
        %v2317 = vld [vmem:[%s2313 + $0x18] sm:$0xff]
        %v2318 = vld [vmem:[%s2313 + $0x20] sm:$0xff]
        %v2319 = vld [vmem:[%s2313 + $0x28] sm:$0xff]
        %v2320 = vld [vmem:[%s2313 + $0x30] sm:$0xff]
        %v2321 = vld [vmem:[%s2313 + $0x38] sm:$0xff]
        %v2322 = vld [vmem:[%s2313 + $0x40] sm:$0xff]
        %v2323 = vld [vmem:[%s2313 + $0x48] sm:$0xff]
        %v2324 = vld [vmem:[%s2313 + $0x50] sm:$0xff]
        %v2325 = vld [vmem:[%s2313 + $0x58] sm:$0xff]
        %v2326 = vld [vmem:[%s2313 + $0x60] sm:$0xff]
        %v2327 = vld [vmem:[%s2313 + $0x68] sm:$0xff]
        %v2328 = vld [vmem:[%s2313 + $0x70] sm:$0xff]
        %v2329 = vld [vmem:[%s2313 + $0x78] sm:$0xff]
        %2330 = vmatprep.subr.mxu0 0.0
        %2331 = vmatpush1.msra.mxu0 %v2314
        %2332 = vmatprep.subr.mxu0 0.0
        %2333 = vmatpush1.msra.mxu0 %v2315
        %2334 = vmatprep.subr.mxu0 0.0
        %2335 = vmatpush1.msra.mxu0 %v2316
        %2336 = vmatprep.subr.mxu0 0.0
        %2337 = vmatpush1.msra.mxu0 %v2317
        %2338 = vmatprep.subr.mxu0 0.0
        %2339 = vmatpush1.msra.mxu0 %v2318
        %2340 = vmatprep.subr.mxu0 0.0
        %2341 = vmatpush1.msra.mxu0 %v2319
        %2342 = vmatprep.subr.mxu0 0.0
        %2343 = vmatpush1.msra.mxu0 %v2320
        %2344 = vmatprep.subr.mxu0 0.0
        %2345 = vmatpush1.msra.mxu0 %v2321
        %2346 = vmatprep.subr.mxu0 0.0
        %2347 = vmatpush1.msra.mxu0 %v2322
        %2348 = vmatprep.subr.mxu0 0.0
        %2349 = vmatpush1.msra.mxu0 %v2323
        %2350 = vmatprep.subr.mxu0 0.0
        %2351 = vmatpush1.msra.mxu0 %v2324
        %2352 = vmatprep.subr.mxu0 0.0
        %2353 = vmatpush1.msra.mxu0 %v2325
        %2354 = vmatprep.subr.mxu0 0.0
        %2355 = vmatpush1.msra.mxu0 %v2326
        %2356 = vmatprep.subr.mxu0 0.0
        %2357 = vmatpush1.msra.mxu0 %v2327
        %2358 = vmatprep.subr.mxu0 0.0
        %2359 = vmatpush1.msra.mxu0 %v2328
        %2360 = vmatprep.subr.mxu0 0.0
        %2361 = vmatpush1.msra.mxu0 %v2329
        %2362 = vmatprep.subr.mxu0 0.0
        %2363 = vmatpush1.msra.mxu0 0.0
        %2364 = vmatprep.subr.mxu0 0.0
        %2365 = vmatpush1.msra.mxu0 0.0
        %2366 = vmatprep.subr.mxu0 0.0
        %2367 = vmatpush1.msra.mxu0 0.0
        %2368 = vmatprep.subr.mxu0 0.0
        %2369 = vmatpush1.msra.mxu0 0.0
        %2370 = vmatprep.subr.mxu0 0.0
        %2371 = vmatpush1.msra.mxu0 0.0
        %2372 = vmatprep.subr.mxu0 0.0
        %2373 = vmatpush1.msra.mxu0 0.0
        %2374 = vmatprep.subr.mxu0 0.0
        %2375 = vmatpush1.msra.mxu0 0.0
        %2376 = vmatprep.subr.mxu0 0.0
        %2377 = vmatpush1.msra.mxu0 0.0
        %2378 = vmatprep.subr.mxu0 0.0
        %2379 = vmatpush1.msra.mxu0 0.0
        %2380 = vmatprep.subr.mxu0 0.0
        %2381 = vmatpush1.msra.mxu0 0.0
        %2382 = vmatprep.subr.mxu0 0.0
        %2383 = vmatpush1.msra.mxu0 0.0
        %2384 = vmatprep.subr.mxu0 0.0
        %2385 = vmatpush1.msra.mxu0 0.0
        %2386 = vmatprep.subr.mxu0 0.0
        %2387 = vmatpush1.msra.mxu0 0.0
        %2388 = vmatprep.subr.mxu0 0.0
        %2389 = vmatpush1.msra.mxu0 0.0
        %2390 = vmatprep.subr.mxu0 0.0
        %2391 = vmatpush1.msra.mxu0 0.0
        %2392 = vmatprep.subr.mxu0 0.0
        %2393 = vmatpush1.msra.mxu0 0.0
        %2394 = vmatprep.mubr.f32.mxu0 0.0
        %2395 = vmatmul.mubr.f32.gmra.mrb[0].mxu0 %v2305
        %v2396 = vpop.f32.mrb[0].mxu0
        %v2397 = vadd.f32 0.0, %v2396
        %v2398 = vpop.f32.mrb[0].mxu0
        %2399 = vmatprep.mubr.f32.mxu0 0.0
        %2400 = vmatmul.mubr.f32.gmra.mrb[0].mxu0 %v2306
        %v2401 = vpop.f32.mrb[0].mxu0
        %v2402 = vadd.f32 0.0, %v2401
        %v2403 = vpop.f32.mrb[0].mxu0
        %2404 = vmatprep.mubr.f32.mxu0 0.0
        %2405 = vmatmul.mubr.f32.gmra.mrb[0].mxu0 %v2307
        %v2406 = vpop.f32.mrb[0].mxu0
        %v2407 = vadd.f32 0.0, %v2406
        %v2408 = vpop.f32.mrb[0].mxu0
        %2409 = vmatprep.mubr.f32.mxu0 0.0
        %2410 = vmatmul.mubr.f32.gmra.mrb[0].mxu0 %v2308
        %v2411 = vpop.f32.mrb[0].mxu0
        %v2412 = vadd.f32 0.0, %v2411
        %v2413 = vpop.f32.mrb[0].mxu0
        %2414 = vmatprep.mubr.f32.mxu0 0.0
        %2415 = vmatmul.mubr.f32.gmra.mrb[0].mxu0 %v2309
        %v2416 = vpop.f32.mrb[0].mxu0
        %v2417 = vadd.f32 0.0, %v2416
        %v2418 = vpop.f32.mrb[0].mxu0
        %2419 = vmatprep.mubr.f32.mxu0 0.0
        %2420 = vmatmul.mubr.f32.gmra.mrb[0].mxu0 %v2310
        %v2421 = vpop.f32.mrb[0].mxu0
        %v2422 = vadd.f32 0.0, %v2421
        %v2423 = vpop.f32.mrb[0].mxu0
        %2424 = vmatprep.mubr.f32.mxu0 0.0
        %2425 = vmatmul.mubr.f32.gmra.mrb[0].mxu0 %v2311
        %v2426 = vpop.f32.mrb[0].mxu0
        %v2427 = vadd.f32 0.0, %v2426
        %v2428 = vpop.f32.mrb[0].mxu0
        %2429 = vmatprep.mubr.f32.mxu0 0.0
        %2430 = vmatmul.mubr.f32.gmra.mrb[0].mxu0 %v2312
        %v2431 = vpop.f32.mrb[0].mxu0
        %v2432 = vadd.f32 0.0, %v2431
        %v2433 = vpop.f32.mrb[0].mxu0
        %2434 = vdwg.mxu0
        %v2435 = vadd.f32 %v2297, %v2397
        %v2436 = vadd.f32 %v2298, %v2402
        %v2437 = vadd.f32 %v2299, %v2407
        %v2438 = vadd.f32 %v2300, %v2412
        %v2439 = vadd.f32 %v2301, %v2417
        %v2440 = vadd.f32 %v2302, %v2422
        %v2441 = vadd.f32 %v2303, %v2427
        %v2442 = vadd.f32 %v2304, %v2432
        %v2443 = vld [vmem:[%s1178] sm:$0xff]
        %v2444 = vld [vmem:[%s1178 + $0x10] sm:$0xff]
        %v2445 = vld [vmem:[%s1178 + $0x20] sm:$0xff]
        %v2446 = vld [vmem:[%s1178 + $0x30] sm:$0xff]
        %v2447 = vld [vmem:[%s1178 + $0x40] sm:$0xff]
        %v2448 = vld [vmem:[%s1178 + $0x50] sm:$0xff]
        %v2449 = vld [vmem:[%s1178 + $0x60] sm:$0xff]
        %v2450 = vld [vmem:[%s1178 + $0x70] sm:$0xff]
        %s2451 = scalar_lea.vmem [#allocation6], 768
        %v2452 = vld [vmem:[%s2451] sm:$0xff]
        %v2453 = vld [vmem:[%s2451 + $0x8] sm:$0xff]
        %v2454 = vld [vmem:[%s2451 + $0x10] sm:$0xff]
        %v2455 = vld [vmem:[%s2451 + $0x18] sm:$0xff]
        %v2456 = vld [vmem:[%s2451 + $0x20] sm:$0xff]
        %v2457 = vld [vmem:[%s2451 + $0x28] sm:$0xff]
        %v2458 = vld [vmem:[%s2451 + $0x30] sm:$0xff]
        %v2459 = vld [vmem:[%s2451 + $0x38] sm:$0xff]
        %v2460 = vld [vmem:[%s2451 + $0x40] sm:$0xff]
        %v2461 = vld [vmem:[%s2451 + $0x48] sm:$0xff]
        %v2462 = vld [vmem:[%s2451 + $0x50] sm:$0xff]
        %v2463 = vld [vmem:[%s2451 + $0x58] sm:$0xff]
        %v2464 = vld [vmem:[%s2451 + $0x60] sm:$0xff]
        %v2465 = vld [vmem:[%s2451 + $0x68] sm:$0xff]
        %v2466 = vld [vmem:[%s2451 + $0x70] sm:$0xff]
        %v2467 = vld [vmem:[%s2451 + $0x78] sm:$0xff]
        %2468 = vmatprep.subr.mxu0 0.0
        %2469 = vmatpush1.msra.mxu0 %v2452
        %2470 = vmatprep.subr.mxu0 0.0
        %2471 = vmatpush1.msra.mxu0 %v2453
        %2472 = vmatprep.subr.mxu0 0.0
        %2473 = vmatpush1.msra.mxu0 %v2454
        %2474 = vmatprep.subr.mxu0 0.0
        %2475 = vmatpush1.msra.mxu0 %v2455
        %2476 = vmatprep.subr.mxu0 0.0
        %2477 = vmatpush1.msra.mxu0 %v2456
        %2478 = vmatprep.subr.mxu0 0.0
        %2479 = vmatpush1.msra.mxu0 %v2457
        %2480 = vmatprep.subr.mxu0 0.0
        %2481 = vmatpush1.msra.mxu0 %v2458
        %2482 = vmatprep.subr.mxu0 0.0
        %2483 = vmatpush1.msra.mxu0 %v2459
        %2484 = vmatprep.subr.mxu0 0.0
        %2485 = vmatpush1.msra.mxu0 %v2460
        %2486 = vmatprep.subr.mxu0 0.0
        %2487 = vmatpush1.msra.mxu0 %v2461
        %2488 = vmatprep.subr.mxu0 0.0
        %2489 = vmatpush1.msra.mxu0 %v2462
        %2490 = vmatprep.subr.mxu0 0.0
        %2491 = vmatpush1.msra.mxu0 %v2463
        %2492 = vmatprep.subr.mxu0 0.0
        %2493 = vmatpush1.msra.mxu0 %v2464
        %2494 = vmatprep.subr.mxu0 0.0
        %2495 = vmatpush1.msra.mxu0 %v2465
        %2496 = vmatprep.subr.mxu0 0.0
        %2497 = vmatpush1.msra.mxu0 %v2466
        %2498 = vmatprep.subr.mxu0 0.0
        %2499 = vmatpush1.msra.mxu0 %v2467
        %2500 = vmatprep.subr.mxu0 0.0
        %2501 = vmatpush1.msra.mxu0 0.0
        %2502 = vmatprep.subr.mxu0 0.0
        %2503 = vmatpush1.msra.mxu0 0.0
        %2504 = vmatprep.subr.mxu0 0.0
        %2505 = vmatpush1.msra.mxu0 0.0
        %2506 = vmatprep.subr.mxu0 0.0
        %2507 = vmatpush1.msra.mxu0 0.0
        %2508 = vmatprep.subr.mxu0 0.0
        %2509 = vmatpush1.msra.mxu0 0.0
        %2510 = vmatprep.subr.mxu0 0.0
        %2511 = vmatpush1.msra.mxu0 0.0
        %2512 = vmatprep.subr.mxu0 0.0
        %2513 = vmatpush1.msra.mxu0 0.0
        %2514 = vmatprep.subr.mxu0 0.0
        %2515 = vmatpush1.msra.mxu0 0.0
        %2516 = vmatprep.subr.mxu0 0.0
        %2517 = vmatpush1.msra.mxu0 0.0
        %2518 = vmatprep.subr.mxu0 0.0
        %2519 = vmatpush1.msra.mxu0 0.0
        %2520 = vmatprep.subr.mxu0 0.0
        %2521 = vmatpush1.msra.mxu0 0.0
        %2522 = vmatprep.subr.mxu0 0.0
        %2523 = vmatpush1.msra.mxu0 0.0
        %2524 = vmatprep.subr.mxu0 0.0
        %2525 = vmatpush1.msra.mxu0 0.0
        %2526 = vmatprep.subr.mxu0 0.0
        %2527 = vmatpush1.msra.mxu0 0.0
        %2528 = vmatprep.subr.mxu0 0.0
        %2529 = vmatpush1.msra.mxu0 0.0
        %2530 = vmatprep.subr.mxu0 0.0
        %2531 = vmatpush1.msra.mxu0 0.0
        %2532 = vmatprep.mubr.f32.mxu0 0.0
        %2533 = vmatmul.mubr.f32.gmra.mrb[0].mxu0 %v2443
        %v2534 = vpop.f32.mrb[0].mxu0
        %v2535 = vadd.f32 0.0, %v2534
        %v2536 = vpop.f32.mrb[0].mxu0
        %2537 = vmatprep.mubr.f32.mxu0 0.0
        %2538 = vmatmul.mubr.f32.gmra.mrb[0].mxu0 %v2444
        %v2539 = vpop.f32.mrb[0].mxu0
        %v2540 = vadd.f32 0.0, %v2539
        %v2541 = vpop.f32.mrb[0].mxu0
        %2542 = vmatprep.mubr.f32.mxu0 0.0
        %2543 = vmatmul.mubr.f32.gmra.mrb[0].mxu0 %v2445
        %v2544 = vpop.f32.mrb[0].mxu0
        %v2545 = vadd.f32 0.0, %v2544
        %v2546 = vpop.f32.mrb[0].mxu0
        %2547 = vmatprep.mubr.f32.mxu0 0.0
        %2548 = vmatmul.mubr.f32.gmra.mrb[0].mxu0 %v2446
        %v2549 = vpop.f32.mrb[0].mxu0
        %v2550 = vadd.f32 0.0, %v2549
        %v2551 = vpop.f32.mrb[0].mxu0
        %2552 = vmatprep.mubr.f32.mxu0 0.0
        %2553 = vmatmul.mubr.f32.gmra.mrb[0].mxu0 %v2447
        %v2554 = vpop.f32.mrb[0].mxu0
        %v2555 = vadd.f32 0.0, %v2554
        %v2556 = vpop.f32.mrb[0].mxu0
        %2557 = vmatprep.mubr.f32.mxu0 0.0
        %2558 = vmatmul.mubr.f32.gmra.mrb[0].mxu0 %v2448
        %v2559 = vpop.f32.mrb[0].mxu0
        %v2560 = vadd.f32 0.0, %v2559
        %v2561 = vpop.f32.mrb[0].mxu0
        %2562 = vmatprep.mubr.f32.mxu0 0.0
        %2563 = vmatmul.mubr.f32.gmra.mrb[0].mxu0 %v2449
        %v2564 = vpop.f32.mrb[0].mxu0
        %v2565 = vadd.f32 0.0, %v2564
        %v2566 = vpop.f32.mrb[0].mxu0
        %2567 = vmatprep.mubr.f32.mxu0 0.0
        %2568 = vmatmul.mubr.f32.gmra.mrb[0].mxu0 %v2450
        %v2569 = vpop.f32.mrb[0].mxu0
        %v2570 = vadd.f32 0.0, %v2569
        %v2571 = vpop.f32.mrb[0].mxu0
        %2572 = vdwg.mxu0
        %v2573 = vadd.f32 %v2435, %v2535
        %v2574 = vadd.f32 %v2436, %v2540
        %v2575 = vadd.f32 %v2437, %v2545
        %v2576 = vadd.f32 %v2438, %v2550
        %v2577 = vadd.f32 %v2439, %v2555
        %v2578 = vadd.f32 %v2440, %v2560
        %v2579 = vadd.f32 %v2441, %v2565
        %v2580 = vadd.f32 %v2442, %v2570
        %v2581 = vld [vmem:[%s1178 + $0x1] sm:$0xff]
        %v2582 = vld [vmem:[%s1178 + $0x11] sm:$0xff]
        %v2583 = vld [vmem:[%s1178 + $0x21] sm:$0xff]
        %v2584 = vld [vmem:[%s1178 + $0x31] sm:$0xff]
        %v2585 = vld [vmem:[%s1178 + $0x41] sm:$0xff]
        %v2586 = vld [vmem:[%s1178 + $0x51] sm:$0xff]
        %v2587 = vld [vmem:[%s1178 + $0x61] sm:$0xff]
        %v2588 = vld [vmem:[%s1178 + $0x71] sm:$0xff]
        %s2589 = scalar_lea.vmem [#allocation6], 896
        %v2590 = vld [vmem:[%s2589] sm:$0xff]
        %v2591 = vld [vmem:[%s2589 + $0x8] sm:$0xff]
        %v2592 = vld [vmem:[%s2589 + $0x10] sm:$0xff]
        %v2593 = vld [vmem:[%s2589 + $0x18] sm:$0xff]
        %v2594 = vld [vmem:[%s2589 + $0x20] sm:$0xff]
        %v2595 = vld [vmem:[%s2589 + $0x28] sm:$0xff]
        %v2596 = vld [vmem:[%s2589 + $0x30] sm:$0xff]
        %v2597 = vld [vmem:[%s2589 + $0x38] sm:$0xff]
        %v2598 = vld [vmem:[%s2589 + $0x40] sm:$0xff]
        %v2599 = vld [vmem:[%s2589 + $0x48] sm:$0xff]
        %v2600 = vld [vmem:[%s2589 + $0x50] sm:$0xff]
        %v2601 = vld [vmem:[%s2589 + $0x58] sm:$0xff]
        %v2602 = vld [vmem:[%s2589 + $0x60] sm:$0xff]
        %v2603 = vld [vmem:[%s2589 + $0x68] sm:$0xff]
        %v2604 = vld [vmem:[%s2589 + $0x70] sm:$0xff]
        %v2605 = vld [vmem:[%s2589 + $0x78] sm:$0xff]
        %2606 = vmatprep.subr.mxu0 0.0
        %2607 = vmatpush1.msra.mxu0 %v2590
        %2608 = vmatprep.subr.mxu0 0.0
        %2609 = vmatpush1.msra.mxu0 %v2591
        %2610 = vmatprep.subr.mxu0 0.0
        %2611 = vmatpush1.msra.mxu0 %v2592
        %2612 = vmatprep.subr.mxu0 0.0
        %2613 = vmatpush1.msra.mxu0 %v2593
        %2614 = vmatprep.subr.mxu0 0.0
        %2615 = vmatpush1.msra.mxu0 %v2594
        %2616 = vmatprep.subr.mxu0 0.0
        %2617 = vmatpush1.msra.mxu0 %v2595
        %2618 = vmatprep.subr.mxu0 0.0
        %2619 = vmatpush1.msra.mxu0 %v2596
        %2620 = vmatprep.subr.mxu0 0.0
        %2621 = vmatpush1.msra.mxu0 %v2597
        %2622 = vmatprep.subr.mxu0 0.0
        %2623 = vmatpush1.msra.mxu0 %v2598
        %2624 = vmatprep.subr.mxu0 0.0
        %2625 = vmatpush1.msra.mxu0 %v2599
        %2626 = vmatprep.subr.mxu0 0.0
        %2627 = vmatpush1.msra.mxu0 %v2600
        %2628 = vmatprep.subr.mxu0 0.0
        %2629 = vmatpush1.msra.mxu0 %v2601
        %2630 = vmatprep.subr.mxu0 0.0
        %2631 = vmatpush1.msra.mxu0 %v2602
        %2632 = vmatprep.subr.mxu0 0.0
        %2633 = vmatpush1.msra.mxu0 %v2603
        %2634 = vmatprep.subr.mxu0 0.0
        %2635 = vmatpush1.msra.mxu0 %v2604
        %2636 = vmatprep.subr.mxu0 0.0
        %2637 = vmatpush1.msra.mxu0 %v2605
        %2638 = vmatprep.subr.mxu0 0.0
        %2639 = vmatpush1.msra.mxu0 0.0
        %2640 = vmatprep.subr.mxu0 0.0
        %2641 = vmatpush1.msra.mxu0 0.0
        %2642 = vmatprep.subr.mxu0 0.0
        %2643 = vmatpush1.msra.mxu0 0.0
        %2644 = vmatprep.subr.mxu0 0.0
        %2645 = vmatpush1.msra.mxu0 0.0
        %2646 = vmatprep.subr.mxu0 0.0
        %2647 = vmatpush1.msra.mxu0 0.0
        %2648 = vmatprep.subr.mxu0 0.0
        %2649 = vmatpush1.msra.mxu0 0.0
        %2650 = vmatprep.subr.mxu0 0.0
        %2651 = vmatpush1.msra.mxu0 0.0
        %2652 = vmatprep.subr.mxu0 0.0
        %2653 = vmatpush1.msra.mxu0 0.0
        %2654 = vmatprep.subr.mxu0 0.0
        %2655 = vmatpush1.msra.mxu0 0.0
        %2656 = vmatprep.subr.mxu0 0.0
        %2657 = vmatpush1.msra.mxu0 0.0
        %2658 = vmatprep.subr.mxu0 0.0
        %2659 = vmatpush1.msra.mxu0 0.0
        %2660 = vmatprep.subr.mxu0 0.0
        %2661 = vmatpush1.msra.mxu0 0.0
        %2662 = vmatprep.subr.mxu0 0.0
        %2663 = vmatpush1.msra.mxu0 0.0
        %2664 = vmatprep.subr.mxu0 0.0
        %2665 = vmatpush1.msra.mxu0 0.0
        %2666 = vmatprep.subr.mxu0 0.0
        %2667 = vmatpush1.msra.mxu0 0.0
        %2668 = vmatprep.subr.mxu0 0.0
        %2669 = vmatpush1.msra.mxu0 0.0
        %2670 = vmatprep.mubr.f32.mxu0 0.0
        %2671 = vmatmul.mubr.f32.gmra.mrb[0].mxu0 %v2581
        %v2672 = vpop.f32.mrb[0].mxu0
        %v2673 = vadd.f32 0.0, %v2672
        %v2674 = vpop.f32.mrb[0].mxu0
        %2675 = vmatprep.mubr.f32.mxu0 0.0
        %2676 = vmatmul.mubr.f32.gmra.mrb[0].mxu0 %v2582
        %v2677 = vpop.f32.mrb[0].mxu0
        %v2678 = vadd.f32 0.0, %v2677
        %v2679 = vpop.f32.mrb[0].mxu0
        %2680 = vmatprep.mubr.f32.mxu0 0.0
        %2681 = vmatmul.mubr.f32.gmra.mrb[0].mxu0 %v2583
        %v2682 = vpop.f32.mrb[0].mxu0
        %v2683 = vadd.f32 0.0, %v2682
        %v2684 = vpop.f32.mrb[0].mxu0
        %2685 = vmatprep.mubr.f32.mxu0 0.0
        %2686 = vmatmul.mubr.f32.gmra.mrb[0].mxu0 %v2584
        %v2687 = vpop.f32.mrb[0].mxu0
        %v2688 = vadd.f32 0.0, %v2687
        %v2689 = vpop.f32.mrb[0].mxu0
        %2690 = vmatprep.mubr.f32.mxu0 0.0
        %2691 = vmatmul.mubr.f32.gmra.mrb[0].mxu0 %v2585
        %v2692 = vpop.f32.mrb[0].mxu0
        %v2693 = vadd.f32 0.0, %v2692
        %v2694 = vpop.f32.mrb[0].mxu0
        %2695 = vmatprep.mubr.f32.mxu0 0.0
        %2696 = vmatmul.mubr.f32.gmra.mrb[0].mxu0 %v2586
        %v2697 = vpop.f32.mrb[0].mxu0
        %v2698 = vadd.f32 0.0, %v2697
        %v2699 = vpop.f32.mrb[0].mxu0
        %2700 = vmatprep.mubr.f32.mxu0 0.0
        %2701 = vmatmul.mubr.f32.gmra.mrb[0].mxu0 %v2587
        %v2702 = vpop.f32.mrb[0].mxu0
        %v2703 = vadd.f32 0.0, %v2702
        %v2704 = vpop.f32.mrb[0].mxu0
        %2705 = vmatprep.mubr.f32.mxu0 0.0
        %2706 = vmatmul.mubr.f32.gmra.mrb[0].mxu0 %v2588
        %v2707 = vpop.f32.mrb[0].mxu0
        %v2708 = vadd.f32 0.0, %v2707
        %v2709 = vpop.f32.mrb[0].mxu0
        %2710 = vdwg.mxu0
        %v2711 = vadd.f32 %v2573, %v2673
        %v2712 = vadd.f32 %v2574, %v2678
        %v2713 = vadd.f32 %v2575, %v2683
        %v2714 = vadd.f32 %v2576, %v2688
        %v2715 = vadd.f32 %v2577, %v2693
        %v2716 = vadd.f32 %v2578, %v2698
        %v2717 = vadd.f32 %v2579, %v2703
        %v2718 = vadd.f32 %v2580, %v2708
        %v2719 = vld [vmem:[%s1178 + $0x2] sm:$0xff]
        %v2720 = vld [vmem:[%s1178 + $0x12] sm:$0xff]
        %v2721 = vld [vmem:[%s1178 + $0x22] sm:$0xff]
        %v2722 = vld [vmem:[%s1178 + $0x32] sm:$0xff]
        %v2723 = vld [vmem:[%s1178 + $0x42] sm:$0xff]
        %v2724 = vld [vmem:[%s1178 + $0x52] sm:$0xff]
        %v2725 = vld [vmem:[%s1178 + $0x62] sm:$0xff]
        %v2726 = vld [vmem:[%s1178 + $0x72] sm:$0xff]
        %s2727 = scalar_lea.vmem [#allocation6], 1024
        %v2728 = vld [vmem:[%s2727] sm:$0xff]
        %v2729 = vld [vmem:[%s2727 + $0x8] sm:$0xff]
        %v2730 = vld [vmem:[%s2727 + $0x10] sm:$0xff]
        %v2731 = vld [vmem:[%s2727 + $0x18] sm:$0xff]
        %v2732 = vld [vmem:[%s2727 + $0x20] sm:$0xff]
        %v2733 = vld [vmem:[%s2727 + $0x28] sm:$0xff]
        %v2734 = vld [vmem:[%s2727 + $0x30] sm:$0xff]
        %v2735 = vld [vmem:[%s2727 + $0x38] sm:$0xff]
        %v2736 = vld [vmem:[%s2727 + $0x40] sm:$0xff]
        %v2737 = vld [vmem:[%s2727 + $0x48] sm:$0xff]
        %v2738 = vld [vmem:[%s2727 + $0x50] sm:$0xff]
        %v2739 = vld [vmem:[%s2727 + $0x58] sm:$0xff]
        %v2740 = vld [vmem:[%s2727 + $0x60] sm:$0xff]
        %v2741 = vld [vmem:[%s2727 + $0x68] sm:$0xff]
        %v2742 = vld [vmem:[%s2727 + $0x70] sm:$0xff]
        %v2743 = vld [vmem:[%s2727 + $0x78] sm:$0xff]
        %2744 = vmatprep.subr.mxu0 0.0
        %2745 = vmatpush1.msra.mxu0 %v2728
        %2746 = vmatprep.subr.mxu0 0.0
        %2747 = vmatpush1.msra.mxu0 %v2729
        %2748 = vmatprep.subr.mxu0 0.0
        %2749 = vmatpush1.msra.mxu0 %v2730
        %2750 = vmatprep.subr.mxu0 0.0
        %2751 = vmatpush1.msra.mxu0 %v2731
        %2752 = vmatprep.subr.mxu0 0.0
        %2753 = vmatpush1.msra.mxu0 %v2732
        %2754 = vmatprep.subr.mxu0 0.0
        %2755 = vmatpush1.msra.mxu0 %v2733
        %2756 = vmatprep.subr.mxu0 0.0
        %2757 = vmatpush1.msra.mxu0 %v2734
        %2758 = vmatprep.subr.mxu0 0.0
        %2759 = vmatpush1.msra.mxu0 %v2735
        %2760 = vmatprep.subr.mxu0 0.0
        %2761 = vmatpush1.msra.mxu0 %v2736
        %2762 = vmatprep.subr.mxu0 0.0
        %2763 = vmatpush1.msra.mxu0 %v2737
        %2764 = vmatprep.subr.mxu0 0.0
        %2765 = vmatpush1.msra.mxu0 %v2738
        %2766 = vmatprep.subr.mxu0 0.0
        %2767 = vmatpush1.msra.mxu0 %v2739
        %2768 = vmatprep.subr.mxu0 0.0
        %2769 = vmatpush1.msra.mxu0 %v2740
        %2770 = vmatprep.subr.mxu0 0.0
        %2771 = vmatpush1.msra.mxu0 %v2741
        %2772 = vmatprep.subr.mxu0 0.0
        %2773 = vmatpush1.msra.mxu0 %v2742
        %2774 = vmatprep.subr.mxu0 0.0
        %2775 = vmatpush1.msra.mxu0 %v2743
        %2776 = vmatprep.subr.mxu0 0.0
        %2777 = vmatpush1.msra.mxu0 0.0
        %2778 = vmatprep.subr.mxu0 0.0
        %2779 = vmatpush1.msra.mxu0 0.0
        %2780 = vmatprep.subr.mxu0 0.0
        %2781 = vmatpush1.msra.mxu0 0.0
        %2782 = vmatprep.subr.mxu0 0.0
        %2783 = vmatpush1.msra.mxu0 0.0
        %2784 = vmatprep.subr.mxu0 0.0
        %2785 = vmatpush1.msra.mxu0 0.0
        %2786 = vmatprep.subr.mxu0 0.0
        %2787 = vmatpush1.msra.mxu0 0.0
        %2788 = vmatprep.subr.mxu0 0.0
        %2789 = vmatpush1.msra.mxu0 0.0
        %2790 = vmatprep.subr.mxu0 0.0
        %2791 = vmatpush1.msra.mxu0 0.0
        %2792 = vmatprep.subr.mxu0 0.0
        %2793 = vmatpush1.msra.mxu0 0.0
        %2794 = vmatprep.subr.mxu0 0.0
        %2795 = vmatpush1.msra.mxu0 0.0
        %2796 = vmatprep.subr.mxu0 0.0
        %2797 = vmatpush1.msra.mxu0 0.0
        %2798 = vmatprep.subr.mxu0 0.0
        %2799 = vmatpush1.msra.mxu0 0.0
        %2800 = vmatprep.subr.mxu0 0.0
        %2801 = vmatpush1.msra.mxu0 0.0
        %2802 = vmatprep.subr.mxu0 0.0
        %2803 = vmatpush1.msra.mxu0 0.0
        %2804 = vmatprep.subr.mxu0 0.0
        %2805 = vmatpush1.msra.mxu0 0.0
        %2806 = vmatprep.subr.mxu0 0.0
        %2807 = vmatpush1.msra.mxu0 0.0
        %2808 = vmatprep.mubr.f32.mxu0 0.0
        %2809 = vmatmul.mubr.f32.gmra.mrb[0].mxu0 %v2719
        %v2810 = vpop.f32.mrb[0].mxu0
        %v2811 = vadd.f32 0.0, %v2810
        %v2812 = vpop.f32.mrb[0].mxu0
        %2813 = vmatprep.mubr.f32.mxu0 0.0
        %2814 = vmatmul.mubr.f32.gmra.mrb[0].mxu0 %v2720
        %v2815 = vpop.f32.mrb[0].mxu0
        %v2816 = vadd.f32 0.0, %v2815
        %v2817 = vpop.f32.mrb[0].mxu0
        %2818 = vmatprep.mubr.f32.mxu0 0.0
        %2819 = vmatmul.mubr.f32.gmra.mrb[0].mxu0 %v2721
        %v2820 = vpop.f32.mrb[0].mxu0
        %v2821 = vadd.f32 0.0, %v2820
        %v2822 = vpop.f32.mrb[0].mxu0
        %2823 = vmatprep.mubr.f32.mxu0 0.0
        %2824 = vmatmul.mubr.f32.gmra.mrb[0].mxu0 %v2722
        %v2825 = vpop.f32.mrb[0].mxu0
        %v2826 = vadd.f32 0.0, %v2825
        %v2827 = vpop.f32.mrb[0].mxu0
        %2828 = vmatprep.mubr.f32.mxu0 0.0
        %2829 = vmatmul.mubr.f32.gmra.mrb[0].mxu0 %v2723
        %v2830 = vpop.f32.mrb[0].mxu0
        %v2831 = vadd.f32 0.0, %v2830
        %v2832 = vpop.f32.mrb[0].mxu0
        %2833 = vmatprep.mubr.f32.mxu0 0.0
        %2834 = vmatmul.mubr.f32.gmra.mrb[0].mxu0 %v2724
        %v2835 = vpop.f32.mrb[0].mxu0
        %v2836 = vadd.f32 0.0, %v2835
        %v2837 = vpop.f32.mrb[0].mxu0
        %2838 = vmatprep.mubr.f32.mxu0 0.0
        %2839 = vmatmul.mubr.f32.gmra.mrb[0].mxu0 %v2725
        %v2840 = vpop.f32.mrb[0].mxu0
        %v2841 = vadd.f32 0.0, %v2840
        %v2842 = vpop.f32.mrb[0].mxu0
        %2843 = vmatprep.mubr.f32.mxu0 0.0
        %2844 = vmatmul.mubr.f32.gmra.mrb[0].mxu0 %v2726
        %v2845 = vpop.f32.mrb[0].mxu0
        %v2846 = vadd.f32 0.0, %v2845
        %v2847 = vpop.f32.mrb[0].mxu0
        %2848 = vdwg.mxu0
        %v2849 = vadd.f32 %v2711, %v2811
        %v2850 = vadd.f32 %v2712, %v2816
        %v2851 = vadd.f32 %v2713, %v2821
        %v2852 = vadd.f32 %v2714, %v2826
        %v2853 = vadd.f32 %v2715, %v2831
        %v2854 = vadd.f32 %v2716, %v2836
        %v2855 = vadd.f32 %v2717, %v2841
        %v2856 = vadd.f32 %v2718, %v2846
        %v2857 = vadd.f32 %v2849, %v2850
        %v2858 = vadd.f32 %v2857, %v2851
        %v2859 = vadd.f32 %v2858, %v2852
        %v2860 = vadd.f32 %v2859, %v2853
        %v2861 = vadd.f32 %v2860, %v2854
        %v2862 = vadd.f32 %v2861, %v2855
        %v2863 = vadd.f32 %v2862, %v2856
        %v2864 = vrot.slane %v2863, 4
        %v2865 = vadd.f32 %v2863, %v2864
        %v2866 = vrot.slane %v2865, 2
        %v2867 = vadd.f32 %v2865, %v2866
        %v2868 = vrot.slane %v2867, 1
        %v2869 = vadd.f32 %v2867, %v2868
        %v2870 = vmul.f32 %v2869, 0.015625
        %v2871 = vld [vmem:[%s5] sm:$0xff]
        %v2872 = vld [vmem:[%s5 + $0x8] sm:$0xff]
        %v2873 = vld [vmem:[%s5 + $0x10] sm:$0xff]
        %v2874 = vld [vmem:[%s5 + $0x18] sm:$0xff]
        %v2875 = vld [vmem:[%s5 + $0x20] sm:$0xff]
        %v2876 = vld [vmem:[%s5 + $0x28] sm:$0xff]
        %v2877 = vld [vmem:[%s5 + $0x30] sm:$0xff]
        %v2878 = vld [vmem:[%s5 + $0x38] sm:$0xff]
        %v2879 = vld [vmem:[%s5 + $0x40] sm:$0xff]
        %v2880 = vld [vmem:[%s5 + $0x48] sm:$0xff]
        %v2881 = vld [vmem:[%s5 + $0x50] sm:$0xff]
        %v2882 = vld [vmem:[%s5 + $0x58] sm:$0xff]
        %v2883 = vld [vmem:[%s5 + $0x60] sm:$0xff]
        %v2884 = vld [vmem:[%s5 + $0x68] sm:$0xff]
        %v2885 = vld [vmem:[%s5 + $0x70] sm:$0xff]
        %v2886 = vld [vmem:[%s5 + $0x78] sm:$0xff]
        %2887 = vmatprep.subr.mxu0 0.0
        %2888 = vmatpush1.msra.mxu0 %v2871
        %2889 = vmatprep.subr.mxu0 0.0
        %2890 = vmatpush1.msra.mxu0 %v2872
        %2891 = vmatprep.subr.mxu0 0.0
        %2892 = vmatpush1.msra.mxu0 %v2873
        %2893 = vmatprep.subr.mxu0 0.0
        %2894 = vmatpush1.msra.mxu0 %v2874
        %2895 = vmatprep.subr.mxu0 0.0
        %2896 = vmatpush1.msra.mxu0 %v2875
        %2897 = vmatprep.subr.mxu0 0.0
        %2898 = vmatpush1.msra.mxu0 %v2876
        %2899 = vmatprep.subr.mxu0 0.0
        %2900 = vmatpush1.msra.mxu0 %v2877
        %2901 = vmatprep.subr.mxu0 0.0
        %2902 = vmatpush1.msra.mxu0 %v2878
        %2903 = vmatprep.subr.mxu0 0.0
        %2904 = vmatpush1.msra.mxu0 %v2879
        %2905 = vmatprep.subr.mxu0 0.0
        %2906 = vmatpush1.msra.mxu0 %v2880
        %2907 = vmatprep.subr.mxu0 0.0
        %2908 = vmatpush1.msra.mxu0 %v2881
        %2909 = vmatprep.subr.mxu0 0.0
        %2910 = vmatpush1.msra.mxu0 %v2882
        %2911 = vmatprep.subr.mxu0 0.0
        %2912 = vmatpush1.msra.mxu0 %v2883
        %2913 = vmatprep.subr.mxu0 0.0
        %2914 = vmatpush1.msra.mxu0 %v2884
        %2915 = vmatprep.subr.mxu0 0.0
        %2916 = vmatpush1.msra.mxu0 %v2885
        %2917 = vmatprep.subr.mxu0 0.0
        %2918 = vmatpush1.msra.mxu0 %v2886
        %2919 = vmatprep.subr.mxu0 0.0
        %2920 = vmatpush1.msra.mxu0 0.0
        %2921 = vmatprep.subr.mxu0 0.0
        %2922 = vmatpush1.msra.mxu0 0.0
        %2923 = vmatprep.subr.mxu0 0.0
        %2924 = vmatpush1.msra.mxu0 0.0
        %2925 = vmatprep.subr.mxu0 0.0
        %2926 = vmatpush1.msra.mxu0 0.0
        %2927 = vmatprep.subr.mxu0 0.0
        %2928 = vmatpush1.msra.mxu0 0.0
        %2929 = vmatprep.subr.mxu0 0.0
        %2930 = vmatpush1.msra.mxu0 0.0
        %2931 = vmatprep.subr.mxu0 0.0
        %2932 = vmatpush1.msra.mxu0 0.0
        %2933 = vmatprep.subr.mxu0 0.0
        %2934 = vmatpush1.msra.mxu0 0.0
        %2935 = vmatprep.subr.mxu0 0.0
        %2936 = vmatpush1.msra.mxu0 0.0
        %2937 = vmatprep.subr.mxu0 0.0
        %2938 = vmatpush1.msra.mxu0 0.0
        %2939 = vmatprep.subr.mxu0 0.0
        %2940 = vmatpush1.msra.mxu0 0.0
        %2941 = vmatprep.subr.mxu0 0.0
        %2942 = vmatpush1.msra.mxu0 0.0
        %2943 = vmatprep.subr.mxu0 0.0
        %2944 = vmatpush1.msra.mxu0 0.0
        %2945 = vmatprep.subr.mxu0 0.0
        %2946 = vmatpush1.msra.mxu0 0.0
        %2947 = vmatprep.subr.mxu0 0.0
        %2948 = vmatpush1.msra.mxu0 0.0
        %2949 = vmatprep.subr.mxu0 0.0
        %2950 = vmatpush1.msra.mxu0 0.0
        %2951 = vmatprep.mubr.f32.mxu0 0.0
        %2952 = vmatmul.mubr.f32.gmra.mrb[0].mxu0 %v2870
        %v2953 = vpop.f32.mrb[0].mxu0
        %v2954 = vadd.f32 0.0, %v2953
        %v2955 = vpop.f32.mrb[0].mxu0
        %2956 = vdwg.mxu0
        %v2957 = vmax.f32 %v2954, 0.0
        %v2958 = vld [vmem:[%s6] sm:$0xff]
        %vm2959 = vcmask 64512
        %v2961 = vsel %vm2959, %v2957, 0
        %2963 = vmatprep.subr.mxu0 0.0
        %2964 = vmatpush1.msra.mxu0 %v2958
        %2965 = vmatprep.subr.mxu0 0.0
        %2966 = vmatpush1.msra.mxu0 0.0
        %2967 = vmatprep.subr.mxu0 0.0
        %2968 = vmatpush1.msra.mxu0 0.0
        %2969 = vmatprep.subr.mxu0 0.0
        %2970 = vmatpush1.msra.mxu0 0.0
        %2971 = vmatprep.subr.mxu0 0.0
        %2972 = vmatpush1.msra.mxu0 0.0
        %2973 = vmatprep.subr.mxu0 0.0
        %2974 = vmatpush1.msra.mxu0 0.0
        %2975 = vmatprep.subr.mxu0 0.0
        %2976 = vmatpush1.msra.mxu0 0.0
        %2977 = vmatprep.subr.mxu0 0.0
        %2978 = vmatpush1.msra.mxu0 0.0
        %2979 = vmatprep.subr.mxu0 0.0
        %2980 = vmatpush1.msra.mxu0 0.0
        %2981 = vmatprep.subr.mxu0 0.0
        %2982 = vmatpush1.msra.mxu0 0.0
        %2983 = vmatprep.subr.mxu0 0.0
        %2984 = vmatpush1.msra.mxu0 0.0
        %2985 = vmatprep.subr.mxu0 0.0
        %2986 = vmatpush1.msra.mxu0 0.0
        %2987 = vmatprep.subr.mxu0 0.0
        %2988 = vmatpush1.msra.mxu0 0.0
        %2989 = vmatprep.subr.mxu0 0.0
        %2990 = vmatpush1.msra.mxu0 0.0
        %2991 = vmatprep.subr.mxu0 0.0
        %2992 = vmatpush1.msra.mxu0 0.0
        %2993 = vmatprep.subr.mxu0 0.0
        %2994 = vmatpush1.msra.mxu0 0.0
        %2995 = vmatprep.subr.mxu0 0.0
        %2996 = vmatpush1.msra.mxu0 0.0
        %2997 = vmatprep.subr.mxu0 0.0
        %2998 = vmatpush1.msra.mxu0 0.0
        %2999 = vmatprep.subr.mxu0 0.0
        %3000 = vmatpush1.msra.mxu0 0.0
        %3001 = vmatprep.subr.mxu0 0.0
        %3002 = vmatpush1.msra.mxu0 0.0
        %3003 = vmatprep.subr.mxu0 0.0
        %3004 = vmatpush1.msra.mxu0 0.0
        %3005 = vmatprep.subr.mxu0 0.0
        %3006 = vmatpush1.msra.mxu0 0.0
        %3007 = vmatprep.subr.mxu0 0.0
        %3008 = vmatpush1.msra.mxu0 0.0
        %3009 = vmatprep.subr.mxu0 0.0
        %3010 = vmatpush1.msra.mxu0 0.0
        %3011 = vmatprep.subr.mxu0 0.0
        %3012 = vmatpush1.msra.mxu0 0.0
        %3013 = vmatprep.subr.mxu0 0.0
        %3014 = vmatpush1.msra.mxu0 0.0
        %3015 = vmatprep.subr.mxu0 0.0
        %3016 = vmatpush1.msra.mxu0 0.0
        %3017 = vmatprep.subr.mxu0 0.0
        %3018 = vmatpush1.msra.mxu0 0.0
        %3019 = vmatprep.subr.mxu0 0.0
        %3020 = vmatpush1.msra.mxu0 0.0
        %3021 = vmatprep.subr.mxu0 0.0
        %3022 = vmatpush1.msra.mxu0 0.0
        %3023 = vmatprep.subr.mxu0 0.0
        %3024 = vmatpush1.msra.mxu0 0.0
        %3025 = vmatprep.subr.mxu0 0.0
        %3026 = vmatpush1.msra.mxu0 0.0
        %3027 = vmatprep.mubr.f32.mxu0 0.0
        %3028 = vmatmul.mubr.f32.gmra.mrb[0].mxu0 %v2961
        %v3029 = vpop.f32.mrb[0].mxu0
        %v3030 = vadd.f32 0.0, %v3029
        %v3031 = vpop.f32.mrb[0].mxu0
        %3032 = vdwg.mxu0
        %v3033 = vxor.u32 %v3030, 2147483648
        %v3034 = vmul.f32 %v3033, 1.442695
        %v3035 = vpow.pop %v3034
        %v3036 = vadd.f32 %v3035, 1.0
        %v3037 = vrcp.pop %v3036
        %v3038 = vmul.f32 1.0, %v3037
        %v3039 = vlaneseq
        %v3040 = vshrl.u32 %v3039, 7
        %v3041 = vsub.s32 0, %v3040
        %v3042 = vrot.slane %v3038, %v3041
        %v3043 = vmul.f32 %v2849, %v3042
        %v3044 = vmul.f32 %v2850, %v3042
        %v3045 = vmul.f32 %v2851, %v3042
        %v3046 = vmul.f32 %v2852, %v3042
        %v3047 = vmul.f32 %v2853, %v3042
        %v3048 = vmul.f32 %v2854, %v3042
        %v3049 = vmul.f32 %v2855, %v3042
        %v3050 = vmul.f32 %v2856, %v3042
        %v3051 = vld [vmem:[%s306] sm:$0xff]
        %v3052 = vld [vmem:[%s306 + $0x8] sm:$0xff]
        %v3053 = vld [vmem:[%s306 + $0x10] sm:$0xff]
        %v3054 = vld [vmem:[%s306 + $0x18] sm:$0xff]
        %v3055 = vld [vmem:[%s306 + $0x20] sm:$0xff]
        %v3056 = vld [vmem:[%s306 + $0x28] sm:$0xff]
        %v3057 = vld [vmem:[%s306 + $0x30] sm:$0xff]
        %v3058 = vld [vmem:[%s306 + $0x38] sm:$0xff]
        %v3059 = vadd.f32 %v3043, %v3051
        %v3060 = vadd.f32 %v3044, %v3052
        %v3061 = vadd.f32 %v3045, %v3053
        %v3062 = vadd.f32 %v3046, %v3054
        %v3063 = vadd.f32 %v3047, %v3055
        %v3064 = vadd.f32 %v3048, %v3056
        %v3065 = vadd.f32 %v3049, %v3057
        %v3066 = vadd.f32 %v3050, %v3058
        %v3067 = vmax.f32 %v3059, 0.0
        %v3068 = vmax.f32 %v3060, 0.0
        %v3069 = vmax.f32 %v3061, 0.0
        %v3070 = vmax.f32 %v3062, 0.0
        %v3071 = vmax.f32 %v3063, 0.0
        %v3072 = vmax.f32 %v3064, 0.0
        %v3073 = vmax.f32 %v3065, 0.0
        %v3074 = vmax.f32 %v3066, 0.0
        %3075 = vst [vmem:[%s301] sm:$0xff] %v3067
        %3076 = vst [vmem:[%s301 + $0x8] sm:$0xff] %v3068
        %3077 = vst [vmem:[%s301 + $0x10] sm:$0xff] %v3069
        %3078 = vst [vmem:[%s301 + $0x18] sm:$0xff] %v3070
        %3079 = vst [vmem:[%s301 + $0x20] sm:$0xff] %v3071
        %3080 = vst [vmem:[%s301 + $0x28] sm:$0xff] %v3072
        %3081 = vst [vmem:[%s301 + $0x30] sm:$0xff] %v3073
        %3082 = vst [vmem:[%s301 + $0x38] sm:$0xff] %v3074
        %s3083 = sand.u32 %s183, 1
        %s3084 = scalar_lea.sflag [#allocation5], %s3083
        %s3085 = sand.u32 %s183, 1
        %s3086 = smul.addr %s3085, 64
        %s3087 = scalar_lea.vmem [#allocation8], %s3086
        // Predicated region
        $region57: #{tpu_custom_call.1} parent=47 // pred_check
          %p3088 = pneg %p193
        $region58: #{tpu_custom_call.1} parent=47 // pred_check_branch
          %3090 = sbr.rel (%p3088) target = $region60
        $region59: #{tpu_custom_call.1} parent=47 // pred_region
          %s3092 = ssub.s32 1024, 1024
          %3093 = vsyncadd %s3084, %s3092
          %s3094 = smul.addr %s23, 8
          %s3095 = smul.addr %s3094, 128
          %s3096 = scalar_lea.hbm %s7, %s3095
          %s3097 = sshll.u32 %s3087, 4
          %s3098 = int_to_ptr.vmem [resolvable:$true] %s3097
          %3103 = dma.vmem_to_hbm [thread:$0]  %s3098, 1024, %s3096, %s3084, 128, 128, 8
        $region60: #{tpu_custom_call.1} parent=47 // pred_fallthru
          _
      $region48: #{tpu_custom_call.1} parent=5 // pred_fallthru
        _
      %p3104 = scmp.le.s32.totalorder 2, %s18
      // Predicated region
      $region61: #{tpu_custom_call.1} parent=5 // pred_check
        %p3105 = pneg %p3104
      $region62: #{tpu_custom_call.1} parent=5 // pred_check_branch
        %3107 = sbr.rel (%p3105) target = $region64
      $region63: #{tpu_custom_call.1} parent=5 // pred_region
        %s3108 = ssub.s32 %s18, 2
        // Predicated region
        $region65: #{tpu_custom_call.1} parent=63 // pred_check
          %p3109 = pneg %p199
        $region66: #{tpu_custom_call.1} parent=63 // pred_check_branch
          %3111 = sbr.rel (%p3109) target = $region68
        $region67: #{tpu_custom_call.1} parent=63 // pred_region
          %s3112 = sand.u32 %s184, 1
          %s3113 = scalar_lea.sflag [#allocation5], %s3112
          %s3114 = sand.u32 %s184, 1
          %s3115 = smul.addr %s3114, 64
          %s3116 = scalar_lea.vmem [#allocation8], %s3115
          %3117 = dma.done %s3113, 1024
        $region68: #{tpu_custom_call.1} parent=63 // pred_fallthru
          _
      $region64: #{tpu_custom_call.1} parent=5 // pred_fallthru
        _
    $region6: #{tpu_custom_call.1} parent=1 // loop_footer
      %s22 = sadd.s32 1, %s18
    $region7: #{tpu_custom_call.1} parent=1 // loop_footer_branch
      %17 = sbr.rel target = $region3
    $region8: #{tpu_custom_call.1} parent=1 // loop_exit
      _
    %3118 = vsyncpa [#allocation4], 1
    %s3119 = scalar_lea.sflag [#allocation4], 1
    %3120 = vsyncpa %s3119, 1
    %3121 = vsyncpa [#allocation7], 1
    %3122 = vsyncpa [#allocation5], 1
    %s3123 = scalar_lea.sflag [#allocation5], 1
    %3124 = vsyncpa %s3123, 1

</llo_original>
